<compile_context>
chip_gen: v7x
topology: tpu7x:2x2x1
jax: 0.10.0
libtpu: 0.0.40
codegen_flags: <defaults>
</compile_context>

<pallas_src>
import math
import functools

import jax
import jax.numpy as jnp
import numpy as np
from jax.experimental import pallas as pl
from jax.experimental.pallas import tpu as pltpu


# ----------------------------- kernel helpers ------------------------------

def _layer_norm(x, gamma, beta, eps=1e-5):
    mu = jnp.mean(x, axis=-1, keepdims=True)
    var = jnp.mean((x - mu) ** 2, axis=-1, keepdims=True)
    return (x - mu) * jax.lax.rsqrt(var + eps) * gamma + beta


def _gelu_exact(x):
    # nn.GELU() default = exact erf-based GELU
    return 0.5 * x * (1.0 + jax.lax.erf(x * (1.0 / math.sqrt(2.0))))


# --------------------------------- kernel ----------------------------------

def _transformer_block_kernel(x_ref, wq_ref, wk_ref, wv_ref, wo_ref, bo_ref,
                              g1_ref, be1_ref, w1_ref, bf1_ref,
                              w2_ref, bf2_ref, g2_ref, be2_ref,
                              o_ref, *, heads, head_dim):
    S, E = x_ref.shape
    x = x_ref[...]                                                # (S, E) f32

    # ----- self-attention (head-major, shared per-head (D, D) weights) -----
    # (S, E) -> (H, S, D); single transpose, then one flat matmul per proj.
    xh = jnp.transpose(x.reshape(S, heads, head_dim), (1, 0, 2))  # (H, S, D)
    xf = xh.reshape(heads * S, head_dim).astype(jnp.bfloat16)     # (H*S, D)

    def proj(w_ref):
        y = jnp.dot(xf, w_ref[...], preferred_element_type=jnp.float32)
        return y.astype(jnp.bfloat16).reshape(heads, S, head_dim)

    q = proj(wq_ref)   # 1/sqrt(D) scale already folded into wq
    k = proj(wk_ref)
    v = proj(wv_ref)

    # scores + softmax in f32
    e = jnp.einsum('hqd,hkd->hqk', q, k,
                   preferred_element_type=jnp.float32)            # (H, S, S)
    e = e - jnp.max(e, axis=-1, keepdims=True)
    p = jnp.exp(e)
    p = p * pl.reciprocal(jnp.sum(p, axis=-1, keepdims=True), approx=True)

    attn = jnp.einsum('hqk,hkd->hqd', p.astype(jnp.bfloat16), v,
                      preferred_element_type=jnp.float32)         # (H, S, D)
    attn = jnp.transpose(attn, (1, 0, 2)).reshape(S, E)           # (S, E)

    attn = jnp.dot(attn.astype(jnp.bfloat16), wo_ref[...],
                   preferred_element_type=jnp.float32) + bo_ref[...]

    # residual + norm1  (dropout = identity)
    x1 = _layer_norm(attn + x, g1_ref[...], be1_ref[...])

    # ----- feed-forward: Linear -> GELU -> Linear -----
    h1 = jnp.dot(x1.astype(jnp.bfloat16), w1_ref[...],
                 preferred_element_type=jnp.float32) + bf1_ref[...]
    h1 = _gelu_exact(h1)
    h2 = jnp.dot(h1.astype(jnp.bfloat16), w2_ref[...],
                 preferred_element_type=jnp.float32) + bf2_ref[...]

    # residual + norm2  (dropout = identity)
    o_ref[...] = _layer_norm(h2 + x1, g2_ref[...], be2_ref[...]).astype(o_ref.dtype)


# -------------------------------- wrapper -----------------------------------

def transformer_block_pallas(x, params, heads):
    B, S, E = x.shape
    D = E // heads
    F = params["w1_T"].shape[1]

    kernel = functools.partial(_transformer_block_kernel, heads=heads, head_dim=D)

    def const_spec(shape):
        # Constant index_map across the grid -> Pallas skips re-DMA after the
        # first grid step.
        return pl.BlockSpec(shape, lambda b: (0, 0))

    in_specs = [
        pl.BlockSpec((None, S, E), lambda b: (b, 0, 0)),   # x  (one batch slab)
        const_spec((D, D)),     # wq.T / sqrt(D)   (bf16)
        const_spec((D, D)),     # wk.T             (bf16)
        const_spec((D, D)),     # wv.T             (bf16)
        const_spec((E, E)),     # fc_out weight.T  (bf16)
        const_spec((1, E)),     # fc_out bias
        const_spec((1, E)),     # norm1 gamma
        const_spec((1, E)),     # norm1 beta
        const_spec((E, F)),     # ff linear1 weight.T (bf16)
        const_spec((1, F)),     # ff linear1 bias
        const_spec((F, E)),     # ff linear2 weight.T (bf16)
        const_spec((1, E)),     # ff linear2 bias
        const_spec((1, E)),     # norm2 gamma
        const_spec((1, E)),     # norm2 beta
    ]
    out_specs = pl.BlockSpec((None, S, E), lambda b: (b, 0, 0))

    return pl.pallas_call(
        kernel,
        out_shape=jax.ShapeDtypeStruct((B, S, E), x.dtype),
        grid=(B,),
        in_specs=in_specs,
        out_specs=out_specs,
        compiler_params=pltpu.CompilerParams(
            dimension_semantics=("parallel",)),
    )(x,
      params["wq_T"], params["wk_T"], params["wv_T"],
      params["wo_T"], params["bo"],
      params["g1"], params["be1"],
      params["w1_T"], params["bf1"],
      params["w2_T"], params["bf2"],
      params["g2"], params["be2"])


# ------------------------ deterministic parameter init ----------------------

def init_params(key, embed_size, heads, forward_expansion):
    E = embed_size
    D = E // heads
    F = forward_expansion * E
    ks = jax.random.split(key, 9)

    def lin_w(k, out_f, in_f):
        bound = 1.0 / math.sqrt(in_f)
        return jax.random.uniform(k, (out_f, in_f), jnp.float32, -bound, bound)

    def lin_b(k, out_f, in_f):
        bound = 1.0 / math.sqrt(in_f)
        return jax.random.uniform(k, (out_f,), jnp.float32, -bound, bound)

    raw = dict(
        wq=lin_w(ks[0], D, D),
        wk=lin_w(ks[1], D, D),
        wv=lin_w(ks[2], D, D),
        wo=lin_w(ks[3], E, E), bo=lin_b(ks[4], E, E),
        w1=lin_w(ks[5], F, E), bf1=lin_b(ks[6], F, E),
        w2=lin_w(ks[7], E, F), bf2=lin_b(ks[8], E, F),
        g1=jnp.ones((E,), jnp.float32), be1=jnp.zeros((E,), jnp.float32),
        g2=jnp.ones((E,), jnp.float32), be2=jnp.zeros((E,), jnp.float32),
    )

    bf16 = jnp.bfloat16
    kernel_params = dict(
        # fold the 1/sqrt(D) attention scale into the query projection
        wq_T=(raw["wq"].T / math.sqrt(D)).astype(bf16),
        wk_T=raw["wk"].T.astype(bf16),
        wv_T=raw["wv"].T.astype(bf16),
        wo_T=raw["wo"].T.astype(bf16), bo=raw["bo"].reshape(1, E),
        g1=raw["g1"].reshape(1, E), be1=raw["be1"].reshape(1, E),
        w1_T=raw["w1"].T.astype(bf16), bf1=raw["bf1"].reshape(1, F),
        w2_T=raw["w2"].T.astype(bf16), bf2=raw["bf2"].reshape(1, E),
        g2=raw["g2"].reshape(1, E), be2=raw["be2"].reshape(1, E),
    )
    return raw, kernel_params


# ------------------------------ pure-JAX reference ---------------------------

def ref_forward(x, p, heads):
    # mirrors the PyTorch forward (mask=None, dropout=identity), full f32
    B, S, E = x.shape
    D = E // heads
    xh = x.reshape(B, S, heads, D)
    q = xh @ p["wq"].T
    k = xh @ p["wk"].T
    v = xh @ p["wv"].T
    energy = jnp.einsum("bqhd,bkhd->bhqk", q, k)
    attn = jax.nn.softmax(energy / math.sqrt(D), axis=3)
    out = jnp.einsum("bhql,blhd->bqhd", attn, v).reshape(B, S, E)
    out = out @ p["wo"].T + p["bo"]

    def ln(y, g, b):
        mu = jnp.mean(y, axis=-1, keepdims=True)
        var = jnp.mean((y - mu) ** 2, axis=-1, keepdims=True)
        return (y - mu) / jnp.sqrt(var + 1e-5) * g + b

    x1 = ln(out + x, p["g1"], p["be1"])
    ff = jax.nn.gelu(x1 @ p["w1"].T + p["bf1"], approximate=False)
    ff = ff @ p["w2"].T + p["bf2"]
    return ln(ff + x1, p["g2"], p["be2"])


# ---------------------------------- main -------------------------------------

if __name__ == "__main__":
    # lane-dense small shapes: E = 128 (one full vreg lane width), S mult. of 8
    B, S, E = 2, 64, 128
    heads, forward_expansion = 4, 4

    key = jax.random.PRNGKey(0)
    kx, kp = jax.random.split(key)
    x = jax.random.normal(kx, (B, S, E), dtype=jnp.float32)

    raw_params, kernel_params = init_params(kp, E, heads, forward_expansion)

    out = transformer_block_pallas(x, kernel_params, heads)
    out = jax.block_until_ready(out)

    ref = jax.block_until_ready(ref_forward(x, raw_params, heads))
    # bf16 MXU operands (f32 accumulation) -> allow ~1e-2-level deviation
    np.testing.assert_allclose(np.asarray(out), np.asarray(ref),
                               rtol=3e-2, atol=3e-2)

    print("KERNEL_OK")
</pallas_src>

<mosaic_0001>
module attributes {stable_mosaic.version = 11 : i64} {
  func.func @_transformer_block_kernel(%arg0: i32, %arg1: memref<1x64x128xf32, #tpu.memory_space<vmem>>, %arg2: memref<32x32xbf16, #tpu.memory_space<vmem>>, %arg3: memref<32x32xbf16, #tpu.memory_space<vmem>>, %arg4: memref<32x32xbf16, #tpu.memory_space<vmem>>, %arg5: memref<128x128xbf16, #tpu.memory_space<vmem>>, %arg6: memref<1x128xf32, #tpu.memory_space<vmem>>, %arg7: memref<1x128xf32, #tpu.memory_space<vmem>>, %arg8: memref<1x128xf32, #tpu.memory_space<vmem>>, %arg9: memref<128x512xbf16, #tpu.memory_space<vmem>>, %arg10: memref<1x512xf32, #tpu.memory_space<vmem>>, %arg11: memref<512x128xbf16, #tpu.memory_space<vmem>>, %arg12: memref<1x128xf32, #tpu.memory_space<vmem>>, %arg13: memref<1x128xf32, #tpu.memory_space<vmem>>, %arg14: memref<1x128xf32, #tpu.memory_space<vmem>>, %arg15: memref<1x64x128xf32, #tpu.memory_space<vmem>>) attributes {dimension_semantics = [#tpu.dimension_semantics<parallel>], iteration_bounds = array<i64: 2>, scalar_prefetch = 0 : i64, scratch_operands = 0 : i64, tpu.core_type = #tpu.core_type<tc>, window_params = [{transform_indices = @transform_0, window_bounds = array<i64: 1, 64, 128>}, {pipeline_mode = #tpu.pipeline_mode<synchronous>, transform_indices = @transform_1, window_bounds = array<i64: 32, 32>}, {pipeline_mode = #tpu.pipeline_mode<synchronous>, transform_indices = @transform_2, window_bounds = array<i64: 32, 32>}, {pipeline_mode = #tpu.pipeline_mode<synchronous>, transform_indices = @transform_3, window_bounds = array<i64: 32, 32>}, {pipeline_mode = #tpu.pipeline_mode<synchronous>, transform_indices = @transform_4, window_bounds = array<i64: 128, 128>}, {pipeline_mode = #tpu.pipeline_mode<synchronous>, transform_indices = @transform_5, window_bounds = array<i64: 1, 128>}, {pipeline_mode = #tpu.pipeline_mode<synchronous>, transform_indices = @transform_6, window_bounds = array<i64: 1, 128>}, {pipeline_mode = #tpu.pipeline_mode<synchronous>, transform_indices = @transform_7, window_bounds = array<i64: 1, 128>}, {pipeline_mode = #tpu.pipeline_mode<synchronous>, transform_indices = @transform_8, window_bounds = array<i64: 128, 512>}, {pipeline_mode = #tpu.pipeline_mode<synchronous>, transform_indices = @transform_9, window_bounds = array<i64: 1, 512>}, {pipeline_mode = #tpu.pipeline_mode<synchronous>, transform_indices = @transform_10, window_bounds = array<i64: 512, 128>}, {pipeline_mode = #tpu.pipeline_mode<synchronous>, transform_indices = @transform_11, window_bounds = array<i64: 1, 128>}, {pipeline_mode = #tpu.pipeline_mode<synchronous>, transform_indices = @transform_12, window_bounds = array<i64: 1, 128>}, {pipeline_mode = #tpu.pipeline_mode<synchronous>, transform_indices = @transform_13, window_bounds = array<i64: 1, 128>}, {transform_indices = @transform_14, window_bounds = array<i64: 1, 64, 128>}]} {
    %c0 = arith.constant 0 : index
    %c0_0 = arith.constant 0 : index
    %c0_1 = arith.constant 0 : index
    %0 = vector.load %arg1[%c0, %c0_0, %c0_1] : memref<1x64x128xf32, #tpu.memory_space<vmem>>, vector<1x64x128xf32>
    %1 = vector.shape_cast %0 : vector<1x64x128xf32> to vector<64x128xf32>
    %2 = vector.shape_cast %1 : vector<64x128xf32> to vector<64x4x32xf32>
    %3 = tpu.transpose %2, [1, 0, 2] : vector<64x4x32xf32> -> vector<4x64x32xf32>
    %4 = vector.shape_cast %3 : vector<4x64x32xf32> to vector<256x32xf32>
    %5 = arith.truncf %4 : vector<256x32xf32> to vector<256x32xbf16>
    %c0_2 = arith.constant 0 : index
    %c0_3 = arith.constant 0 : index
    %6 = vector.load %arg2[%c0_2, %c0_3] : memref<32x32xbf16, #tpu.memory_space<vmem>>, vector<32x32xbf16>
    %cst = arith.constant dense<0.000000e+00> : vector<256x32xf32>
    %7 = tpu.matmul %5, %6, %cst {dimension_numbers = #tpu.dot_dimension_numbers<[1], [0], [0], [1], [0, 0, 1, 1], [], []>} : vector<256x32xbf16>, vector<32x32xbf16>, vector<256x32xf32> -> vector<256x32xf32>
    %8 = arith.truncf %7 : vector<256x32xf32> to vector<256x32xbf16>
    %9 = vector.shape_cast %8 : vector<256x32xbf16> to vector<4x64x32xbf16>
    %c0_4 = arith.constant 0 : index
    %c0_5 = arith.constant 0 : index
    %10 = vector.load %arg3[%c0_4, %c0_5] : memref<32x32xbf16, #tpu.memory_space<vmem>>, vector<32x32xbf16>
    %cst_6 = arith.constant dense<0.000000e+00> : vector<256x32xf32>
    %11 = tpu.matmul %5, %10, %cst_6 {dimension_numbers = #tpu.dot_dimension_numbers<[1], [0], [0], [1], [0, 0, 1, 1], [], []>} : vector<256x32xbf16>, vector<32x32xbf16>, vector<256x32xf32> -> vector<256x32xf32>
    %12 = arith.truncf %11 : vector<256x32xf32> to vector<256x32xbf16>
    %13 = vector.shape_cast %12 : vector<256x32xbf16> to vector<4x64x32xbf16>
    %c0_7 = arith.constant 0 : index
    %c0_8 = arith.constant 0 : index
    %14 = vector.load %arg4[%c0_7, %c0_8] : memref<32x32xbf16, #tpu.memory_space<vmem>>, vector<32x32xbf16>
    %cst_9 = arith.constant dense<0.000000e+00> : vector<256x32xf32>
    %15 = tpu.matmul %5, %14, %cst_9 {dimension_numbers = #tpu.dot_dimension_numbers<[1], [0], [0], [1], [0, 0, 1, 1], [], []>} : vector<256x32xbf16>, vector<32x32xbf16>, vector<256x32xf32> -> vector<256x32xf32>
    %16 = arith.truncf %15 : vector<256x32xf32> to vector<256x32xbf16>
    %17 = vector.shape_cast %16 : vector<256x32xbf16> to vector<4x64x32xbf16>
    "tpu.trace_start"() <{level = 10 : i32, message = "hqd,hkd->hqk"}> : () -> ()
    %cst_10 = arith.constant dense<0.000000e+00> : vector<4x64x64xf32>
    %18 = tpu.matmul %9, %13, %cst_10 {dimension_numbers = #tpu.dot_dimension_numbers<[2], [2], [1], [1], [0, 0, 0, 1, 1, 1], [0], [0]>} : vector<4x64x32xbf16>, vector<4x64x32xbf16>, vector<4x64x64xf32> -> vector<4x64x64xf32>
    "tpu.trace_stop"() : () -> ()
    %cst_11 = arith.constant dense<0xFF800000> : vector<4x64xf32>
    %19 = vector.multi_reduction <maximumf>, %18, %cst_11 [2] : vector<4x64x64xf32> to vector<4x64xf32>
    %20 = vector.shape_cast %19 : vector<4x64xf32> to vector<4x64x1xf32>
    %21 = vector.broadcast %20 : vector<4x64x1xf32> to vector<4x64x64xf32>
    %22 = arith.subf %18, %21 : vector<4x64x64xf32>
    %23 = math.exp %22 : vector<4x64x64xf32>
    %cst_12 = arith.constant dense<0.000000e+00> : vector<4x64xf32>
    %24 = vector.multi_reduction <add>, %23, %cst_12 [2] : vector<4x64x64xf32> to vector<4x64xf32>
    %25 = vector.shape_cast %24 : vector<4x64xf32> to vector<4x64x1xf32>
    %26 = tpu.reciprocal %25 {approx = true} : vector<4x64x1xf32> -> vector<4x64x1xf32>
    %27 = vector.broadcast %26 : vector<4x64x1xf32> to vector<4x64x64xf32>
    %28 = arith.mulf %23, %27 : vector<4x64x64xf32>
    %29 = arith.truncf %28 : vector<4x64x64xf32> to vector<4x64x64xbf16>
    "tpu.trace_start"() <{level = 10 : i32, message = "hqk,hkd->hqd"}> : () -> ()
    %cst_13 = arith.constant dense<0.000000e+00> : vector<4x64x32xf32>
    %30 = tpu.matmul %29, %17, %cst_13 {dimension_numbers = #tpu.dot_dimension_numbers<[2], [1], [1], [2], [0, 0, 0, 1, 1, 2], [0], [0]>} : vector<4x64x64xbf16>, vector<4x64x32xbf16>, vector<4x64x32xf32> -> vector<4x64x32xf32>
    "tpu.trace_stop"() : () -> ()
    %31 = tpu.transpose %30, [1, 0, 2] : vector<4x64x32xf32> -> vector<64x4x32xf32>
    %32 = vector.shape_cast %31 : vector<64x4x32xf32> to vector<64x128xf32>
    %33 = arith.truncf %32 : vector<64x128xf32> to vector<64x128xbf16>
    %c0_14 = arith.constant 0 : index
    %c0_15 = arith.constant 0 : index
    %34 = vector.load %arg5[%c0_14, %c0_15] : memref<128x128xbf16, #tpu.memory_space<vmem>>, vector<128x128xbf16>
    %cst_16 = arith.constant dense<0.000000e+00> : vector<64x128xf32>
    %35 = tpu.matmul %33, %34, %cst_16 {dimension_numbers = #tpu.dot_dimension_numbers<[1], [0], [0], [1], [0, 0, 1, 1], [], []>} : vector<64x128xbf16>, vector<128x128xbf16>, vector<64x128xf32> -> vector<64x128xf32>
    %c0_17 = arith.constant 0 : index
    %c0_18 = arith.constant 0 : index
    %36 = vector.load %arg6[%c0_17, %c0_18] : memref<1x128xf32, #tpu.memory_space<vmem>>, vector<1x128xf32>
    %37 = vector.broadcast %36 : vector<1x128xf32> to vector<64x128xf32>
    %38 = arith.addf %35, %37 : vector<64x128xf32>
    %39 = arith.addf %38, %1 : vector<64x128xf32>
    %c0_19 = arith.constant 0 : index
    %c0_20 = arith.constant 0 : index
    %40 = vector.load %arg7[%c0_19, %c0_20] : memref<1x128xf32, #tpu.memory_space<vmem>>, vector<1x128xf32>
    %c0_21 = arith.constant 0 : index
    %c0_22 = arith.constant 0 : index
    %41 = vector.load %arg8[%c0_21, %c0_22] : memref<1x128xf32, #tpu.memory_space<vmem>>, vector<1x128xf32>
    %cst_23 = arith.constant dense<0.000000e+00> : vector<64xf32>
    %42 = vector.multi_reduction <add>, %39, %cst_23 [1] : vector<64x128xf32> to vector<64xf32>
    %43 = vector.shape_cast %42 : vector<64xf32> to vector<64x1xf32>
    %cst_24 = arith.constant 1.280000e+02 : f32
    %44 = vector.broadcast %cst_24 : f32 to vector<64x1xf32>
    %45 = arith.divf %43, %44 : vector<64x1xf32>
    %46 = vector.broadcast %45 : vector<64x1xf32> to vector<64x128xf32>
    %47 = arith.subf %39, %46 : vector<64x128xf32>
    %48 = arith.mulf %47, %47 : vector<64x128xf32>
    %cst_25 = arith.constant dense<0.000000e+00> : vector<64xf32>
    %49 = vector.multi_reduction <add>, %48, %cst_25 [1] : vector<64x128xf32> to vector<64xf32>
    %50 = vector.shape_cast %49 : vector<64xf32> to vector<64x1xf32>
    %cst_26 = arith.constant 1.280000e+02 : f32
    %51 = vector.broadcast %cst_26 : f32 to vector<64x1xf32>
    %52 = arith.divf %50, %51 : vector<64x1xf32>
    %53 = vector.broadcast %45 : vector<64x1xf32> to vector<64x128xf32>
    %54 = arith.subf %39, %53 : vector<64x128xf32>
    %cst_27 = arith.constant 9.99999974E-6 : f32
    %55 = vector.broadcast %cst_27 : f32 to vector<64x1xf32>
    %56 = arith.addf %52, %55 : vector<64x1xf32>
    %57 = math.rsqrt %56 : vector<64x1xf32>
    %58 = vector.broadcast %57 : vector<64x1xf32> to vector<64x128xf32>
    %59 = arith.mulf %54, %58 : vector<64x128xf32>
    %60 = vector.broadcast %40 : vector<1x128xf32> to vector<64x128xf32>
    %61 = arith.mulf %59, %60 : vector<64x128xf32>
    %62 = vector.broadcast %41 : vector<1x128xf32> to vector<64x128xf32>
    %63 = arith.addf %61, %62 : vector<64x128xf32>
    %64 = arith.truncf %63 : vector<64x128xf32> to vector<64x128xbf16>
    %c0_28 = arith.constant 0 : index
    %c0_29 = arith.constant 0 : index
    %65 = vector.load %arg9[%c0_28, %c0_29] : memref<128x512xbf16, #tpu.memory_space<vmem>>, vector<128x512xbf16>
    %cst_30 = arith.constant dense<0.000000e+00> : vector<64x512xf32>
    %66 = tpu.matmul %64, %65, %cst_30 {dimension_numbers = #tpu.dot_dimension_numbers<[1], [0], [0], [1], [0, 0, 1, 1], [], []>} : vector<64x128xbf16>, vector<128x512xbf16>, vector<64x512xf32> -> vector<64x512xf32>
    %c0_31 = arith.constant 0 : index
    %c0_32 = arith.constant 0 : index
    %67 = vector.load %arg10[%c0_31, %c0_32] : memref<1x512xf32, #tpu.memory_space<vmem>>, vector<1x512xf32>
    %68 = vector.broadcast %67 : vector<1x512xf32> to vector<64x512xf32>
    %69 = arith.addf %66, %68 : vector<64x512xf32>
    %cst_33 = arith.constant 5.000000e-01 : f32
    %70 = vector.broadcast %cst_33 : f32 to vector<64x512xf32>
    %71 = arith.mulf %70, %69 : vector<64x512xf32>
    %cst_34 = arith.constant 0.707106769 : f32
    %72 = vector.broadcast %cst_34 : f32 to vector<64x512xf32>
    %73 = arith.mulf %69, %72 : vector<64x512xf32>
    %74 = math.erf %73 : vector<64x512xf32>
    %cst_35 = arith.constant 1.000000e+00 : f32
    %75 = vector.broadcast %cst_35 : f32 to vector<64x512xf32>
    %76 = arith.addf %75, %74 : vector<64x512xf32>
    %77 = arith.mulf %71, %76 : vector<64x512xf32>
    %78 = arith.truncf %77 : vector<64x512xf32> to vector<64x512xbf16>
    %c0_36 = arith.constant 0 : index
    %c0_37 = arith.constant 0 : index
    %79 = vector.load %arg11[%c0_36, %c0_37] : memref<512x128xbf16, #tpu.memory_space<vmem>>, vector<512x128xbf16>
    %cst_38 = arith.constant dense<0.000000e+00> : vector<64x128xf32>
    %80 = tpu.matmul %78, %79, %cst_38 {dimension_numbers = #tpu.dot_dimension_numbers<[1], [0], [0], [1], [0, 0, 1, 1], [], []>} : vector<64x512xbf16>, vector<512x128xbf16>, vector<64x128xf32> -> vector<64x128xf32>
    %c0_39 = arith.constant 0 : index
    %c0_40 = arith.constant 0 : index
    %81 = vector.load %arg12[%c0_39, %c0_40] : memref<1x128xf32, #tpu.memory_space<vmem>>, vector<1x128xf32>
    %82 = vector.broadcast %81 : vector<1x128xf32> to vector<64x128xf32>
    %83 = arith.addf %80, %82 : vector<64x128xf32>
    %84 = arith.addf %83, %63 : vector<64x128xf32>
    %c0_41 = arith.constant 0 : index
    %c0_42 = arith.constant 0 : index
    %85 = vector.load %arg13[%c0_41, %c0_42] : memref<1x128xf32, #tpu.memory_space<vmem>>, vector<1x128xf32>
    %c0_43 = arith.constant 0 : index
    %c0_44 = arith.constant 0 : index
    %86 = vector.load %arg14[%c0_43, %c0_44] : memref<1x128xf32, #tpu.memory_space<vmem>>, vector<1x128xf32>
    %cst_45 = arith.constant dense<0.000000e+00> : vector<64xf32>
    %87 = vector.multi_reduction <add>, %84, %cst_45 [1] : vector<64x128xf32> to vector<64xf32>
    %88 = vector.shape_cast %87 : vector<64xf32> to vector<64x1xf32>
    %cst_46 = arith.constant 1.280000e+02 : f32
    %89 = vector.broadcast %cst_46 : f32 to vector<64x1xf32>
    %90 = arith.divf %88, %89 : vector<64x1xf32>
    %91 = vector.broadcast %90 : vector<64x1xf32> to vector<64x128xf32>
    %92 = arith.subf %84, %91 : vector<64x128xf32>
    %93 = arith.mulf %92, %92 : vector<64x128xf32>
    %cst_47 = arith.constant dense<0.000000e+00> : vector<64xf32>
    %94 = vector.multi_reduction <add>, %93, %cst_47 [1] : vector<64x128xf32> to vector<64xf32>
    %95 = vector.shape_cast %94 : vector<64xf32> to vector<64x1xf32>
    %cst_48 = arith.constant 1.280000e+02 : f32
    %96 = vector.broadcast %cst_48 : f32 to vector<64x1xf32>
    %97 = arith.divf %95, %96 : vector<64x1xf32>
    %98 = vector.broadcast %90 : vector<64x1xf32> to vector<64x128xf32>
    %99 = arith.subf %84, %98 : vector<64x128xf32>
    %cst_49 = arith.constant 9.99999974E-6 : f32
    %100 = vector.broadcast %cst_49 : f32 to vector<64x1xf32>
    %101 = arith.addf %97, %100 : vector<64x1xf32>
    %102 = math.rsqrt %101 : vector<64x1xf32>
    %103 = vector.broadcast %102 : vector<64x1xf32> to vector<64x128xf32>
    %104 = arith.mulf %99, %103 : vector<64x128xf32>
    %105 = vector.broadcast %85 : vector<1x128xf32> to vector<64x128xf32>
    %106 = arith.mulf %104, %105 : vector<64x128xf32>
    %107 = vector.broadcast %86 : vector<1x128xf32> to vector<64x128xf32>
    %108 = arith.addf %106, %107 : vector<64x128xf32>
    %c0_50 = arith.constant 0 : index
    %c0_51 = arith.constant 0 : index
    %c0_52 = arith.constant 0 : index
    %109 = vector.load %arg15[%c0_50, %c0_51, %c0_52] : memref<1x64x128xf32, #tpu.memory_space<vmem>>, vector<1x64x128xf32>
    %110 = vector.shape_cast %109 : vector<1x64x128xf32> to vector<64x128xf32>
    %111 = vector.shape_cast %108 : vector<64x128xf32> to vector<1x64x128xf32>
    tpu.vector_store %arg15[%c0_50, %c0_51, %c0_52], %111 {strides = array<i32>} : memref<1x64x128xf32, #tpu.memory_space<vmem>>, vector<1x64x128xf32>,
    return
  }
  func.func @transform_0(%arg0: i32) -> (i32, i32, i32) {
    %c0_i32 = arith.constant 0 : i32
    %c0_i32_0 = arith.constant 0 : i32
    %c0_i32_1 = arith.constant 0 : i32
    return %arg0, %c0_i32, %c0_i32_0 : i32, i32, i32
  }
  func.func @transform_1(%arg0: i32) -> (i32, i32) {
    %c0_i32 = arith.constant 0 : i32
    %c0_i32_0 = arith.constant 0 : i32
    %c0_i32_1 = arith.constant 0 : i32
    return %c0_i32, %c0_i32_0 : i32, i32
  }
  func.func @transform_2(%arg0: i32) -> (i32, i32) {
    %c0_i32 = arith.constant 0 : i32
    %c0_i32_0 = arith.constant 0 : i32
    %c0_i32_1 = arith.constant 0 : i32
    return %c0_i32, %c0_i32_0 : i32, i32
  }
  func.func @transform_3(%arg0: i32) -> (i32, i32) {
    %c0_i32 = arith.constant 0 : i32
    %c0_i32_0 = arith.constant 0 : i32
    %c0_i32_1 = arith.constant 0 : i32
    return %c0_i32, %c0_i32_0 : i32, i32
  }
  func.func @transform_4(%arg0: i32) -> (i32, i32) {
    %c0_i32 = arith.constant 0 : i32
    %c0_i32_0 = arith.constant 0 : i32
    %c0_i32_1 = arith.constant 0 : i32
    return %c0_i32, %c0_i32_0 : i32, i32
  }
  func.func @transform_5(%arg0: i32) -> (i32, i32) {
    %c0_i32 = arith.constant 0 : i32
    %c0_i32_0 = arith.constant 0 : i32
    %c0_i32_1 = arith.constant 0 : i32
    return %c0_i32, %c0_i32_0 : i32, i32
  }
  func.func @transform_6(%arg0: i32) -> (i32, i32) {
    %c0_i32 = arith.constant 0 : i32
    %c0_i32_0 = arith.constant 0 : i32
    %c0_i32_1 = arith.constant 0 : i32
    return %c0_i32, %c0_i32_0 : i32, i32
  }
  func.func @transform_7(%arg0: i32) -> (i32, i32) {
    %c0_i32 = arith.constant 0 : i32
    %c0_i32_0 = arith.constant 0 : i32
    %c0_i32_1 = arith.constant 0 : i32
    return %c0_i32, %c0_i32_0 : i32, i32
  }
  func.func @transform_8(%arg0: i32) -> (i32, i32) {
    %c0_i32 = arith.constant 0 : i32
    %c0_i32_0 = arith.constant 0 : i32
    %c0_i32_1 = arith.constant 0 : i32
    return %c0_i32, %c0_i32_0 : i32, i32
  }
  func.func @transform_9(%arg0: i32) -> (i32, i32) {
    %c0_i32 = arith.constant 0 : i32
    %c0_i32_0 = arith.constant 0 : i32
    %c0_i32_1 = arith.constant 0 : i32
    return %c0_i32, %c0_i32_0 : i32, i32
  }
  func.func @transform_10(%arg0: i32) -> (i32, i32) {
    %c0_i32 = arith.constant 0 : i32
    %c0_i32_0 = arith.constant 0 : i32
    %c0_i32_1 = arith.constant 0 : i32
    return %c0_i32, %c0_i32_0 : i32, i32
  }
  func.func @transform_11(%arg0: i32) -> (i32, i32) {
    %c0_i32 = arith.constant 0 : i32
    %c0_i32_0 = arith.constant 0 : i32
    %c0_i32_1 = arith.constant 0 : i32
    return %c0_i32, %c0_i32_0 : i32, i32
  }
  func.func @transform_12(%arg0: i32) -> (i32, i32) {
    %c0_i32 = arith.constant 0 : i32
    %c0_i32_0 = arith.constant 0 : i32
    %c0_i32_1 = arith.constant 0 : i32
    return %c0_i32, %c0_i32_0 : i32, i32
  }
  func.func @transform_13(%arg0: i32) -> (i32, i32) {
    %c0_i32 = arith.constant 0 : i32
    %c0_i32_0 = arith.constant 0 : i32
    %c0_i32_1 = arith.constant 0 : i32
    return %c0_i32, %c0_i32_0 : i32, i32
  }
  func.func @transform_14(%arg0: i32) -> (i32, i32, i32) {
    %c0_i32 = arith.constant 0 : i32
    %c0_i32_0 = arith.constant 0 : i32
    %c0_i32_1 = arith.constant 0 : i32
    return %arg0, %c0_i32, %c0_i32_0 : i32, i32, i32
  }
}

</mosaic_0001>

<llo_original>
// kernel: tpu_custom_call.1
$region0: #{tpu_custom_call.1}
  #allocation0 [shape = 'u32[]', space=smem, size = 0x4, offset = 0x4, fixed_abs, tag = 'smem constant byte address 0x4 - core index']
  #allocation1 [shape = 'u32[144,128]{1,0:T(1,128)}', space=vmem, size = 0x12000, scoped, tag = 'internal scratch']
  %s0 = inlined_call_operand.hbm [shape: f32[2,64,128], index: 0, kind: input, shape index: {}]
  %s1 = inlined_call_operand.hbm [shape: bf16[32,32], index: 1, kind: input, shape index: {}]
  %s2 = inlined_call_operand.hbm [shape: bf16[32,32], index: 2, kind: input, shape index: {}]
  %s3 = inlined_call_operand.hbm [shape: bf16[32,32], index: 3, kind: input, shape index: {}]
  %s4 = inlined_call_operand.hbm [shape: bf16[128,128], index: 4, kind: input, shape index: {}]
  %s5 = inlined_call_operand.vmem [shape: f32[1,128], index: 5, kind: input, shape index: {}]
  %s6 = inlined_call_operand.vmem [shape: f32[1,128], index: 6, kind: input, shape index: {}]
  %s7 = inlined_call_operand.vmem [shape: f32[1,128], index: 7, kind: input, shape index: {}]
  %s8 = inlined_call_operand.hbm [shape: bf16[128,512], index: 8, kind: input, shape index: {}]
  %s9 = inlined_call_operand.vmem [shape: f32[1,512], index: 9, kind: input, shape index: {}]
  %s10 = inlined_call_operand.hbm [shape: bf16[512,128], index: 10, kind: input, shape index: {}]
  %s11 = inlined_call_operand.vmem [shape: f32[1,128], index: 11, kind: input, shape index: {}]
  %s12 = inlined_call_operand.vmem [shape: f32[1,128], index: 12, kind: input, shape index: {}]
  %s13 = inlined_call_operand.vmem [shape: f32[1,128], index: 13, kind: input, shape index: {}]
  %s14 = inlined_call_operand.hbm [shape: f32[2,64,128], index: 14, kind: output, shape index: {}]
  %s15 = sld [smem:[#allocation0]]
  $region117: #{tpu_custom_call.1} parent=0
    _
  %s17 = ssub.s32 1, %s15
  %s18 = scalar_select 0, %s17, %s15
  $region1: #{tpu_custom_call.1} parent=0
    #allocation2 [shape = 'u8[65536]{0}', space=vmem, size = 0x10000, scoped, tag = 'input window, operand 0']
    #allocation3 [shape = 's32[2]{0}', space=sflag, size = 0x8, scoped, tag = 'scoped memory for tpu_custom_call.1']
    #allocation4 [shape = 's32[2]{0}', space=sflag, size = 0x8, scoped, tag = 'scoped memory for tpu_custom_call.1']
    #allocation5 [shape = 'u8[8192]{0}', space=vmem, size = 0x2000, scoped, tag = 'input window, operand 1, single buffered']
    #allocation6 [shape = 's32[1]{0}', space=sflag, size = 0x4, scoped, tag = 'scoped memory for tpu_custom_call.1']
    #allocation7 [shape = 'u8[8192]{0}', space=vmem, size = 0x2000, scoped, tag = 'input window, operand 2, single buffered']
    #allocation8 [shape = 'u8[8192]{0}', space=vmem, size = 0x2000, scoped, tag = 'input window, operand 3, single buffered']
    #allocation9 [shape = 's32[1]{0}', space=sflag, size = 0x4, scoped, tag = 'scoped memory for tpu_custom_call.1']
    #allocation10 [shape = 'u8[32768]{0}', space=vmem, size = 0x8000, scoped, tag = 'input window, operand 4, single buffered']
    #allocation11 [shape = 'u8[131072]{0}', space=vmem, size = 0x20000, scoped, tag = 'input window, operand 8, single buffered']
    #allocation12 [shape = 's32[1]{0}', space=sflag, size = 0x4, scoped, tag = 'scoped memory for tpu_custom_call.1']
    #allocation13 [shape = 'u8[131072]{0}', space=vmem, size = 0x20000, scoped, tag = 'input window, operand 10, single buffered']
    #allocation14 [shape = 'u8[65536]{0}', space=vmem, size = 0x10000, scoped, tag = 'output window, operand 0']
    %19 = vsyncpa [#allocation3], 0
    %s20 = scalar_lea.sflag [#allocation3], 1
    %21 = vsyncpa %s20, 0
    %22 = vsyncpa [#allocation6], 0
    %23 = vsyncpa [#allocation9], 0
    %24 = vsyncpa [#allocation12], 0
    %25 = vsyncpa [#allocation4], 0
    %s26 = scalar_lea.sflag [#allocation4], 1
    %27 = vsyncpa %s26, 0
    loop: start=0, step=1, limit=4
    $region2: #{tpu_custom_call.1} parent=1 // loop_pre_header
      _
    $region3: #{tpu_custom_call.1} parent=1 // loop_header
      %s29 = sphi 0, %s33
      %p30 = scmp.ge.s32.totalorder %s29, 4
      %s39 = sphi 0, %s41
      %s42 = sphi 0, %s39
      %s43 = sphi 0, %s42
      %s59 = sphi 0, %s43
      %s63 = sphi 0, %s63
      %s65 = sphi 0, %s63
      %s66 = sphi 0, %s65
      %s80 = sphi 0, %s66
      %s84 = sphi 0, %s84
      %s86 = sphi 0, %s84
      %s87 = sphi 0, %s86
      %s101 = sphi 0, %s87
      %s105 = sphi 0, %s105
      %s107 = sphi 0, %s105
      %s108 = sphi 0, %s107
      %s122 = sphi 0, %s108
      %s126 = sphi 0, %s126
      %s128 = sphi 0, %s126
      %s129 = sphi 0, %s128
      %s143 = sphi 0, %s129
      %s147 = sphi 0, %s147
      %s149 = sphi 0, %s147
      %s150 = sphi 0, %s149
      %s164 = sphi 0, %s150
      %s168 = sphi 0, %s168
      %s170 = sphi 0, %s168
      %s171 = sphi 0, %s170
      %s185 = sphi 0, %s171
      %s189 = sphi 0, %s189
      %s191 = sphi 0, %s189
      %s192 = sphi 0, %s191
      %s206 = sphi 0, %s192
      %s210 = sphi 0, %s210
      %s212 = sphi 0, %s210
      %s213 = sphi 0, %s212
      %s227 = sphi 0, %s213
      %s231 = sphi 0, %s231
      %s233 = sphi 0, %s231
      %s234 = sphi 0, %s233
      %s248 = sphi 0, %s234
      %s252 = sphi 0, %s252
      %s254 = sphi 0, %s252
      %s255 = sphi 0, %s254
      %s269 = sphi 0, %s255
      %s273 = sphi 0, %s273
      %s275 = sphi 0, %s273
      %s276 = sphi 0, %s275
      %s290 = sphi 0, %s276
      %s294 = sphi 0, %s294
      %s296 = sphi 0, %s294
      %s297 = sphi 0, %s296
      %s311 = sphi 0, %s297
      %s315 = sphi 0, %s315
      %s317 = sphi 0, %s315
      %s318 = sphi 0, %s317
      %s332 = sphi 0, %s318
      %s338 = sphi 0, %s340
      %s341 = sphi 0, %s338
      %s342 = sphi 0, %s341
      %s358 = sphi 0, %s342
    $region4: #{tpu_custom_call.1} parent=1 // loop_header_branch
      %32 = sbr.rel (%p30) target = $region8
    $region5: #{tpu_custom_call.1} parent=1 // loop_body
      %s34 = ssub.s32 %s29, 1
      %s35 = ssub.s32 %s29, 2
      %s36 = sadd.s32 %s29, 1
      %s37 = ssub.s32 %s29, %s36
      %p38 = scmp.eq.s32.totalorder %s37, 0
      %s40 = sadd.s32 %s39, 1
      %s41 = scalar_select %p38, %s39, %s40
      %p44 = pneg %p38
      %p45 = scmp.eq.s32.totalorder %s29, 1
      %p46 = por %p44, %p45
      %p47 = scmp.ne.s32.totalorder %s39, %s42
      %p48 = scmp.eq.s32.totalorder %s29, 0
      %p49 = por %p47, %p48
      %p50 = scmp.ne.s32.totalorder %s39, %s42
      %p51 = scmp.eq.s32.totalorder %s34, 1
      %p52 = por %p50, %p51
      %p53 = scmp.ne.s32.totalorder %s42, %s43
      %p54 = scmp.eq.s32.totalorder %s34, 0
      %p55 = por %p53, %p54
      %p56 = scmp.ne.s32.totalorder %s42, %s43
      %p57 = scmp.eq.s32.totalorder %s35, 1
      %p58 = por %p56, %p57
      %p60 = scmp.ne.s32.totalorder %s43, %s59
      %p61 = scmp.eq.s32.totalorder %s35, 0
      %p62 = por %p60, %p61
      %s64 = sadd.s32 %s63, 1
      %p67 = scmp.eq.s32.totalorder %s29, 1
      %p68 = scmp.ne.s32.totalorder %s63, %s65
      %p69 = scmp.eq.s32.totalorder %s29, 0
      %p70 = por %p68, %p69
      %p71 = scmp.ne.s32.totalorder %s63, %s65
      %p72 = scmp.eq.s32.totalorder %s34, 1
      %p73 = por %p71, %p72
      %p74 = scmp.ne.s32.totalorder %s65, %s66
      %p75 = scmp.eq.s32.totalorder %s34, 0
      %p76 = por %p74, %p75
      %p77 = scmp.ne.s32.totalorder %s65, %s66
      %p78 = scmp.eq.s32.totalorder %s35, 1
      %p79 = por %p77, %p78
      %p81 = scmp.ne.s32.totalorder %s66, %s80
      %p82 = scmp.eq.s32.totalorder %s35, 0
      %p83 = por %p81, %p82
      %s85 = sadd.s32 %s84, 1
      %p88 = scmp.eq.s32.totalorder %s29, 1
      %p89 = scmp.ne.s32.totalorder %s84, %s86
      %p90 = scmp.eq.s32.totalorder %s29, 0
      %p91 = por %p89, %p90
      %p92 = scmp.ne.s32.totalorder %s84, %s86
      %p93 = scmp.eq.s32.totalorder %s34, 1
      %p94 = por %p92, %p93
      %p95 = scmp.ne.s32.totalorder %s86, %s87
      %p96 = scmp.eq.s32.totalorder %s34, 0
      %p97 = por %p95, %p96
      %p98 = scmp.ne.s32.totalorder %s86, %s87
      %p99 = scmp.eq.s32.totalorder %s35, 1
      %p100 = por %p98, %p99
      %p102 = scmp.ne.s32.totalorder %s87, %s101
      %p103 = scmp.eq.s32.totalorder %s35, 0
      %p104 = por %p102, %p103
      %s106 = sadd.s32 %s105, 1
      %p109 = scmp.eq.s32.totalorder %s29, 1
      %p110 = scmp.ne.s32.totalorder %s105, %s107
      %p111 = scmp.eq.s32.totalorder %s29, 0
      %p112 = por %p110, %p111
      %p113 = scmp.ne.s32.totalorder %s105, %s107
      %p114 = scmp.eq.s32.totalorder %s34, 1
      %p115 = por %p113, %p114
      %p116 = scmp.ne.s32.totalorder %s107, %s108
      %p117 = scmp.eq.s32.totalorder %s34, 0
      %p118 = por %p116, %p117
      %p119 = scmp.ne.s32.totalorder %s107, %s108
      %p120 = scmp.eq.s32.totalorder %s35, 1
      %p121 = por %p119, %p120
      %p123 = scmp.ne.s32.totalorder %s108, %s122
      %p124 = scmp.eq.s32.totalorder %s35, 0
      %p125 = por %p123, %p124
      %s127 = sadd.s32 %s126, 1
      %p130 = scmp.eq.s32.totalorder %s29, 1
      %p131 = scmp.ne.s32.totalorder %s126, %s128
      %p132 = scmp.eq.s32.totalorder %s29, 0
      %p133 = por %p131, %p132
      %p134 = scmp.ne.s32.totalorder %s126, %s128
      %p135 = scmp.eq.s32.totalorder %s34, 1
      %p136 = por %p134, %p135
      %p137 = scmp.ne.s32.totalorder %s128, %s129
      %p138 = scmp.eq.s32.totalorder %s34, 0
      %p139 = por %p137, %p138
      %p140 = scmp.ne.s32.totalorder %s128, %s129
      %p141 = scmp.eq.s32.totalorder %s35, 1
      %p142 = por %p140, %p141
      %p144 = scmp.ne.s32.totalorder %s129, %s143
      %p145 = scmp.eq.s32.totalorder %s35, 0
      %p146 = por %p144, %p145
      %s148 = sadd.s32 %s147, 1
      %p151 = scmp.eq.s32.totalorder %s29, 1
      %p152 = scmp.ne.s32.totalorder %s147, %s149
      %p153 = scmp.eq.s32.totalorder %s29, 0
      %p154 = por %p152, %p153
      %p155 = scmp.ne.s32.totalorder %s147, %s149
      %p156 = scmp.eq.s32.totalorder %s34, 1
      %p157 = por %p155, %p156
      %p158 = scmp.ne.s32.totalorder %s149, %s150
      %p159 = scmp.eq.s32.totalorder %s34, 0
      %p160 = por %p158, %p159
      %p161 = scmp.ne.s32.totalorder %s149, %s150
      %p162 = scmp.eq.s32.totalorder %s35, 1
      %p163 = por %p161, %p162
      %p165 = scmp.ne.s32.totalorder %s150, %s164
      %p166 = scmp.eq.s32.totalorder %s35, 0
      %p167 = por %p165, %p166
      %s169 = sadd.s32 %s168, 1
      %p172 = scmp.eq.s32.totalorder %s29, 1
      %p173 = scmp.ne.s32.totalorder %s168, %s170
      %p174 = scmp.eq.s32.totalorder %s29, 0
      %p175 = por %p173, %p174
      %p176 = scmp.ne.s32.totalorder %s168, %s170
      %p177 = scmp.eq.s32.totalorder %s34, 1
      %p178 = por %p176, %p177
      %p179 = scmp.ne.s32.totalorder %s170, %s171
      %p180 = scmp.eq.s32.totalorder %s34, 0
      %p181 = por %p179, %p180
      %p182 = scmp.ne.s32.totalorder %s170, %s171
      %p183 = scmp.eq.s32.totalorder %s35, 1
      %p184 = por %p182, %p183
      %p186 = scmp.ne.s32.totalorder %s171, %s185
      %p187 = scmp.eq.s32.totalorder %s35, 0
      %p188 = por %p186, %p187
      %s190 = sadd.s32 %s189, 1
      %p193 = scmp.eq.s32.totalorder %s29, 1
      %p194 = scmp.ne.s32.totalorder %s189, %s191
      %p195 = scmp.eq.s32.totalorder %s29, 0
      %p196 = por %p194, %p195
      %p197 = scmp.ne.s32.totalorder %s189, %s191
      %p198 = scmp.eq.s32.totalorder %s34, 1
      %p199 = por %p197, %p198
      %p200 = scmp.ne.s32.totalorder %s191, %s192
      %p201 = scmp.eq.s32.totalorder %s34, 0
      %p202 = por %p200, %p201
      %p203 = scmp.ne.s32.totalorder %s191, %s192
      %p204 = scmp.eq.s32.totalorder %s35, 1
      %p205 = por %p203, %p204
      %p207 = scmp.ne.s32.totalorder %s192, %s206
      %p208 = scmp.eq.s32.totalorder %s35, 0
      %p209 = por %p207, %p208
      %s211 = sadd.s32 %s210, 1
      %p214 = scmp.eq.s32.totalorder %s29, 1
      %p215 = scmp.ne.s32.totalorder %s210, %s212
      %p216 = scmp.eq.s32.totalorder %s29, 0
      %p217 = por %p215, %p216
      %p218 = scmp.ne.s32.totalorder %s210, %s212
      %p219 = scmp.eq.s32.totalorder %s34, 1
      %p220 = por %p218, %p219
      %p221 = scmp.ne.s32.totalorder %s212, %s213
      %p222 = scmp.eq.s32.totalorder %s34, 0
      %p223 = por %p221, %p222
      %p224 = scmp.ne.s32.totalorder %s212, %s213
      %p225 = scmp.eq.s32.totalorder %s35, 1
      %p226 = por %p224, %p225
      %p228 = scmp.ne.s32.totalorder %s213, %s227
      %p229 = scmp.eq.s32.totalorder %s35, 0
      %p230 = por %p228, %p229
      %s232 = sadd.s32 %s231, 1
      %p235 = scmp.eq.s32.totalorder %s29, 1
      %p236 = scmp.ne.s32.totalorder %s231, %s233
      %p237 = scmp.eq.s32.totalorder %s29, 0
      %p238 = por %p236, %p237
      %p239 = scmp.ne.s32.totalorder %s231, %s233
      %p240 = scmp.eq.s32.totalorder %s34, 1
      %p241 = por %p239, %p240
      %p242 = scmp.ne.s32.totalorder %s233, %s234
      %p243 = scmp.eq.s32.totalorder %s34, 0
      %p244 = por %p242, %p243
      %p245 = scmp.ne.s32.totalorder %s233, %s234
      %p246 = scmp.eq.s32.totalorder %s35, 1
      %p247 = por %p245, %p246
      %p249 = scmp.ne.s32.totalorder %s234, %s248
      %p250 = scmp.eq.s32.totalorder %s35, 0
      %p251 = por %p249, %p250
      %s253 = sadd.s32 %s252, 1
      %p256 = scmp.eq.s32.totalorder %s29, 1
      %p257 = scmp.ne.s32.totalorder %s252, %s254
      %p258 = scmp.eq.s32.totalorder %s29, 0
      %p259 = por %p257, %p258
      %p260 = scmp.ne.s32.totalorder %s252, %s254
      %p261 = scmp.eq.s32.totalorder %s34, 1
      %p262 = por %p260, %p261
      %p263 = scmp.ne.s32.totalorder %s254, %s255
      %p264 = scmp.eq.s32.totalorder %s34, 0
      %p265 = por %p263, %p264
      %p266 = scmp.ne.s32.totalorder %s254, %s255
      %p267 = scmp.eq.s32.totalorder %s35, 1
      %p268 = por %p266, %p267
      %p270 = scmp.ne.s32.totalorder %s255, %s269
      %p271 = scmp.eq.s32.totalorder %s35, 0
      %p272 = por %p270, %p271
      %s274 = sadd.s32 %s273, 1
      %p277 = scmp.eq.s32.totalorder %s29, 1
      %p278 = scmp.ne.s32.totalorder %s273, %s275
      %p279 = scmp.eq.s32.totalorder %s29, 0
      %p280 = por %p278, %p279
      %p281 = scmp.ne.s32.totalorder %s273, %s275
      %p282 = scmp.eq.s32.totalorder %s34, 1
      %p283 = por %p281, %p282
      %p284 = scmp.ne.s32.totalorder %s275, %s276
      %p285 = scmp.eq.s32.totalorder %s34, 0
      %p286 = por %p284, %p285
      %p287 = scmp.ne.s32.totalorder %s275, %s276
      %p288 = scmp.eq.s32.totalorder %s35, 1
      %p289 = por %p287, %p288
      %p291 = scmp.ne.s32.totalorder %s276, %s290
      %p292 = scmp.eq.s32.totalorder %s35, 0
      %p293 = por %p291, %p292
      %s295 = sadd.s32 %s294, 1
      %p298 = scmp.eq.s32.totalorder %s29, 1
      %p299 = scmp.ne.s32.totalorder %s294, %s296
      %p300 = scmp.eq.s32.totalorder %s29, 0
      %p301 = por %p299, %p300
      %p302 = scmp.ne.s32.totalorder %s294, %s296
      %p303 = scmp.eq.s32.totalorder %s34, 1
      %p304 = por %p302, %p303
      %p305 = scmp.ne.s32.totalorder %s296, %s297
      %p306 = scmp.eq.s32.totalorder %s34, 0
      %p307 = por %p305, %p306
      %p308 = scmp.ne.s32.totalorder %s296, %s297
      %p309 = scmp.eq.s32.totalorder %s35, 1
      %p310 = por %p308, %p309
      %p312 = scmp.ne.s32.totalorder %s297, %s311
      %p313 = scmp.eq.s32.totalorder %s35, 0
      %p314 = por %p312, %p313
      %s316 = sadd.s32 %s315, 1
      %p319 = scmp.eq.s32.totalorder %s29, 1
      %p320 = scmp.ne.s32.totalorder %s315, %s317
      %p321 = scmp.eq.s32.totalorder %s29, 0
      %p322 = por %p320, %p321
      %p323 = scmp.ne.s32.totalorder %s315, %s317
      %p324 = scmp.eq.s32.totalorder %s34, 1
      %p325 = por %p323, %p324
      %p326 = scmp.ne.s32.totalorder %s317, %s318
      %p327 = scmp.eq.s32.totalorder %s34, 0
      %p328 = por %p326, %p327
      %p329 = scmp.ne.s32.totalorder %s317, %s318
      %p330 = scmp.eq.s32.totalorder %s35, 1
      %p331 = por %p329, %p330
      %p333 = scmp.ne.s32.totalorder %s318, %s332
      %p334 = scmp.eq.s32.totalorder %s35, 0
      %p335 = por %p333, %p334
      %s336 = ssub.s32 %s29, %s36
      %p337 = scmp.eq.s32.totalorder %s336, 0
      %s339 = sadd.s32 %s338, 1
      %s340 = scalar_select %p337, %s338, %s339
      %p343 = pneg %p337
      %p344 = scmp.eq.s32.totalorder %s29, 1
      %p345 = por %p343, %p344
      %p346 = scmp.ne.s32.totalorder %s338, %s341
      %p347 = scmp.eq.s32.totalorder %s29, 0
      %p348 = por %p346, %p347
      %p349 = scmp.ne.s32.totalorder %s338, %s341
      %p350 = scmp.eq.s32.totalorder %s34, 1
      %p351 = por %p349, %p350
      %p352 = scmp.ne.s32.totalorder %s341, %s342
      %p353 = scmp.eq.s32.totalorder %s34, 0
      %p354 = por %p352, %p353
      %p355 = scmp.ne.s32.totalorder %s341, %s342
      %p356 = scmp.eq.s32.totalorder %s35, 1
      %p357 = por %p355, %p356
      %p359 = scmp.ne.s32.totalorder %s342, %s358
      %p360 = scmp.eq.s32.totalorder %s35, 0
      %p361 = por %p359, %p360
      %p362 = scmp.le.s32.totalorder 1, %s29
      %p363 = scmp.lt.s32.totalorder %s29, 3
      %p364 = pnand %p362, %p363
      %p365 = pneg %p364
      // Predicated region
      $region9: #{tpu_custom_call.1} parent=5 // pred_check
        _
      $region10: #{tpu_custom_call.1} parent=5 // pred_check_branch
        %367 = sbr.rel (%p364) target = $region12
      $region11: #{tpu_custom_call.1} parent=5 // pred_region
        %s368 = ssub.s32 %s29, 1
        // Predicated region
        $region13: #{tpu_custom_call.1} parent=11 // pred_check
          %p369 = pneg %p76
        $region14: #{tpu_custom_call.1} parent=11 // pred_check_branch
          %371 = sbr.rel (%p369) target = $region16
        $region15: #{tpu_custom_call.1} parent=11 // pred_region
          %s373 = ssub.s32 256, 256
          %374 = vsyncadd [#allocation6], %s373
          %s375 = sshll.u32 [#allocation5], 4
          %s376 = int_to_ptr.vmem [resolvable:$true] %s375
          %381 = dma.hbm_to_vmem [thread:$0]  %s1, 256, %s376, [#allocation6], 64, 64, 4
        $region16: #{tpu_custom_call.1} parent=11 // pred_fallthru
          _
        // Predicated region
        $region17: #{tpu_custom_call.1} parent=11 // pred_check
          %p382 = pneg %p97
        $region18: #{tpu_custom_call.1} parent=11 // pred_check_branch
          %384 = sbr.rel (%p382) target = $region20
        $region19: #{tpu_custom_call.1} parent=11 // pred_region
          %s386 = ssub.s32 256, 256
          %387 = vsyncadd [#allocation6], %s386
          %s388 = sshll.u32 [#allocation7], 4
          %s389 = int_to_ptr.vmem [resolvable:$true] %s388
          %394 = dma.hbm_to_vmem [thread:$0]  %s2, 256, %s389, [#allocation6], 64, 64, 4
        $region20: #{tpu_custom_call.1} parent=11 // pred_fallthru
          _
        // Predicated region
        $region21: #{tpu_custom_call.1} parent=11 // pred_check
          %p395 = pneg %p118
        $region22: #{tpu_custom_call.1} parent=11 // pred_check_branch
          %397 = sbr.rel (%p395) target = $region24
        $region23: #{tpu_custom_call.1} parent=11 // pred_region
          %s399 = ssub.s32 256, 256
          %400 = vsyncadd [#allocation9], %s399
          %s401 = sshll.u32 [#allocation8], 4
          %s402 = int_to_ptr.vmem [resolvable:$true] %s401
          %407 = dma.hbm_to_vmem [thread:$0]  %s3, 256, %s402, [#allocation9], 64, 64, 4
        $region24: #{tpu_custom_call.1} parent=11 // pred_fallthru
          _
        // Predicated region
        $region25: #{tpu_custom_call.1} parent=11 // pred_check
          %p408 = pneg %p139
        $region26: #{tpu_custom_call.1} parent=11 // pred_check_branch
          %410 = sbr.rel (%p408) target = $region28
        $region27: #{tpu_custom_call.1} parent=11 // pred_region
          %s412 = ssub.s32 1024, 1024
          %413 = vsyncadd [#allocation9], %s412
          %s414 = sshll.u32 [#allocation10], 4
          %s415 = int_to_ptr.vmem [resolvable:$true] %s414
          %420 = dma.hbm_to_vmem [thread:$0]  %s4, 1024, %s415, [#allocation9], 64, 64, 4
        $region28: #{tpu_custom_call.1} parent=11 // pred_fallthru
          _
        // Predicated region
        $region29: #{tpu_custom_call.1} parent=11 // pred_check
          %p421 = pneg %p160
        $region30: #{tpu_custom_call.1} parent=11 // pred_check_branch
          %423 = sbr.rel (%p421) target = $region32
        $region31: #{tpu_custom_call.1} parent=11 // pred_region
          _
        $region32: #{tpu_custom_call.1} parent=11 // pred_fallthru
          _
        // Predicated region
        $region33: #{tpu_custom_call.1} parent=11 // pred_check
          %p424 = pneg %p181
        $region34: #{tpu_custom_call.1} parent=11 // pred_check_branch
          %426 = sbr.rel (%p424) target = $region36
        $region35: #{tpu_custom_call.1} parent=11 // pred_region
          _
        $region36: #{tpu_custom_call.1} parent=11 // pred_fallthru
          _
        // Predicated region
        $region37: #{tpu_custom_call.1} parent=11 // pred_check
          %p427 = pneg %p202
        $region38: #{tpu_custom_call.1} parent=11 // pred_check_branch
          %429 = sbr.rel (%p427) target = $region40
        $region39: #{tpu_custom_call.1} parent=11 // pred_region
          _
        $region40: #{tpu_custom_call.1} parent=11 // pred_fallthru
          _
        // Predicated region
        $region41: #{tpu_custom_call.1} parent=11 // pred_check
          %p430 = pneg %p223
        $region42: #{tpu_custom_call.1} parent=11 // pred_check_branch
          %432 = sbr.rel (%p430) target = $region44
        $region43: #{tpu_custom_call.1} parent=11 // pred_region
          %s434 = ssub.s32 4096, 4096
          %435 = vsyncadd [#allocation12], %s434
          %s436 = sshll.u32 [#allocation11], 4
          %s437 = int_to_ptr.vmem [resolvable:$true] %s436
          %442 = dma.hbm_to_vmem [thread:$0]  %s8, 4096, %s437, [#allocation12], 256, 256, 16
        $region44: #{tpu_custom_call.1} parent=11 // pred_fallthru
          _
        // Predicated region
        $region45: #{tpu_custom_call.1} parent=11 // pred_check
          %p443 = pneg %p244
        $region46: #{tpu_custom_call.1} parent=11 // pred_check_branch
          %445 = sbr.rel (%p443) target = $region48
        $region47: #{tpu_custom_call.1} parent=11 // pred_region
          _
        $region48: #{tpu_custom_call.1} parent=11 // pred_fallthru
          _
        // Predicated region
        $region49: #{tpu_custom_call.1} parent=11 // pred_check
          %p446 = pneg %p265
        $region50: #{tpu_custom_call.1} parent=11 // pred_check_branch
          %448 = sbr.rel (%p446) target = $region52
        $region51: #{tpu_custom_call.1} parent=11 // pred_region
          %s450 = ssub.s32 4096, 4096
          %451 = vsyncadd [#allocation12], %s450
          %s452 = sshll.u32 [#allocation13], 4
          %s453 = int_to_ptr.vmem [resolvable:$true] %s452
          %458 = dma.hbm_to_vmem [thread:$0]  %s10, 4096, %s453, [#allocation12], 64, 64, 4
        $region52: #{tpu_custom_call.1} parent=11 // pred_fallthru
          _
        // Predicated region
        $region53: #{tpu_custom_call.1} parent=11 // pred_check
          %p459 = pneg %p286
        $region54: #{tpu_custom_call.1} parent=11 // pred_check_branch
          %461 = sbr.rel (%p459) target = $region56
        $region55: #{tpu_custom_call.1} parent=11 // pred_region
          _
        $region56: #{tpu_custom_call.1} parent=11 // pred_fallthru
          _
        // Predicated region
        $region57: #{tpu_custom_call.1} parent=11 // pred_check
          %p462 = pneg %p307
        $region58: #{tpu_custom_call.1} parent=11 // pred_check_branch
          %464 = sbr.rel (%p462) target = $region60
        $region59: #{tpu_custom_call.1} parent=11 // pred_region
          _
        $region60: #{tpu_custom_call.1} parent=11 // pred_fallthru
          _
        // Predicated region
        $region61: #{tpu_custom_call.1} parent=11 // pred_check
          %p465 = pneg %p328
        $region62: #{tpu_custom_call.1} parent=11 // pred_check_branch
          %467 = sbr.rel (%p465) target = $region64
        $region63: #{tpu_custom_call.1} parent=11 // pred_region
          _
        $region64: #{tpu_custom_call.1} parent=11 // pred_fallthru
          _
      $region12: #{tpu_custom_call.1} parent=5 // pred_fallthru
        _
      %p468 = scmp.lt.s32.totalorder %s29, 2
      // Predicated region
      $region65: #{tpu_custom_call.1} parent=5 // pred_check
        %p469 = pneg %p468
      $region66: #{tpu_custom_call.1} parent=5 // pred_check_branch
        %471 = sbr.rel (%p469) target = $region68
      $region67: #{tpu_custom_call.1} parent=5 // pred_region
        // Predicated region
        $region69: #{tpu_custom_call.1} parent=67 // pred_check
          %p472 = pneg %p49
        $region70: #{tpu_custom_call.1} parent=67 // pred_check_branch
          %474 = sbr.rel (%p472) target = $region72
        $region71: #{tpu_custom_call.1} parent=67 // pred_region
          %s475 = sand.u32 %s39, 1
          %s476 = scalar_lea.sflag [#allocation3], %s475
          %s477 = sand.u32 %s39, 1
          %s478 = smul.addr %s477, 64
          %s479 = scalar_lea.vmem [#allocation2], %s478
          %s481 = ssub.s32 1024, 1024
          %482 = vsyncadd %s476, %s481
          %s483 = smul.addr %s29, 8
          %s484 = smul.addr %s483, 128
          %s485 = scalar_lea.hbm %s0, %s484
          %s486 = sshll.u32 %s479, 4
          %s487 = int_to_ptr.vmem [resolvable:$true] %s486
          %492 = dma.hbm_to_vmem [thread:$0]  %s485, 1024, %s487, %s476, 128, 128, 8
        $region72: #{tpu_custom_call.1} parent=67 // pred_fallthru
          _
      $region68: #{tpu_custom_call.1} parent=5 // pred_fallthru
        _
      %p493 = scmp.le.s32.totalorder 1, %s29
      %p494 = scmp.lt.s32.totalorder %s29, 3
      %p495 = pnand %p493, %p494
      %p496 = pneg %p495
      // Predicated region
      $region73: #{tpu_custom_call.1} parent=5 // pred_check
        _
      $region74: #{tpu_custom_call.1} parent=5 // pred_check_branch
        %498 = sbr.rel (%p495) target = $region76
      $region75: #{tpu_custom_call.1} parent=5 // pred_region
        %s499 = ssub.s32 %s29, 1
        %s500 = sand.u32 %s42, 1
        %s501 = scalar_lea.sflag [#allocation3], %s500
        %s502 = sand.u32 %s42, 1
        %s503 = smul.addr %s502, 64
        %s504 = scalar_lea.vmem [#allocation2], %s503
        // Predicated region
        $region77: #{tpu_custom_call.1} parent=75 // pred_check
          %p505 = pneg %p55
        $region78: #{tpu_custom_call.1} parent=75 // pred_check_branch
          %507 = sbr.rel (%p505) target = $region80
        $region79: #{tpu_custom_call.1} parent=75 // pred_region
          %508 = dma.done %s501, 1024
        $region80: #{tpu_custom_call.1} parent=75 // pred_fallthru
          _
        // Predicated region
        $region81: #{tpu_custom_call.1} parent=75 // pred_check
          %p509 = pneg %p76
        $region82: #{tpu_custom_call.1} parent=75 // pred_check_branch
          %511 = sbr.rel (%p509) target = $region84
        $region83: #{tpu_custom_call.1} parent=75 // pred_region
          %512 = dma.done [#allocation6], 256
        $region84: #{tpu_custom_call.1} parent=75 // pred_fallthru
          _
        // Predicated region
        $region85: #{tpu_custom_call.1} parent=75 // pred_check
          %p513 = pneg %p97
        $region86: #{tpu_custom_call.1} parent=75 // pred_check_branch
          %515 = sbr.rel (%p513) target = $region88
        $region87: #{tpu_custom_call.1} parent=75 // pred_region
          %516 = dma.done [#allocation6], 256
        $region88: #{tpu_custom_call.1} parent=75 // pred_fallthru
          _
        // Predicated region
        $region89: #{tpu_custom_call.1} parent=75 // pred_check
          %p517 = pneg %p118
        $region90: #{tpu_custom_call.1} parent=75 // pred_check_branch
          %519 = sbr.rel (%p517) target = $region92
        $region91: #{tpu_custom_call.1} parent=75 // pred_region
          %520 = dma.done [#allocation9], 256
        $region92: #{tpu_custom_call.1} parent=75 // pred_fallthru
          _
        // Predicated region
        $region93: #{tpu_custom_call.1} parent=75 // pred_check
          %p521 = pneg %p139
        $region94: #{tpu_custom_call.1} parent=75 // pred_check_branch
          %523 = sbr.rel (%p521) target = $region96
        $region95: #{tpu_custom_call.1} parent=75 // pred_region
          %524 = dma.done [#allocation9], 1024
        $region96: #{tpu_custom_call.1} parent=75 // pred_fallthru
          _
        // Predicated region
        $region97: #{tpu_custom_call.1} parent=75 // pred_check
          %p525 = pneg %p223
        $region98: #{tpu_custom_call.1} parent=75 // pred_check_branch
          %527 = sbr.rel (%p525) target = $region100
        $region99: #{tpu_custom_call.1} parent=75 // pred_region
          %528 = dma.done [#allocation12], 4096
        $region100: #{tpu_custom_call.1} parent=75 // pred_fallthru
          _
        // Predicated region
        $region101: #{tpu_custom_call.1} parent=75 // pred_check
          %p529 = pneg %p265
        $region102: #{tpu_custom_call.1} parent=75 // pred_check_branch
          %531 = sbr.rel (%p529) target = $region104
        $region103: #{tpu_custom_call.1} parent=75 // pred_region
          %532 = dma.done [#allocation12], 4096
        $region104: #{tpu_custom_call.1} parent=75 // pred_fallthru
          _
        %s533 = sand.u32 %s42, 1
        %s534 = scalar_lea.sflag [#allocation3], %s533
        %s535 = sand.u32 %s42, 1
        %s536 = smul.addr %s535, 64
        %s537 = scalar_lea.vmem [#allocation2], %s536
        %p538 = pneg %p55
        %p539 = pneg %p52
        %p540 = pneg %p76
        %p541 = pneg %p73
        %p542 = pneg %p97
        %p543 = pneg %p94
        %p544 = pneg %p118
        %p545 = pneg %p115
        %p546 = pneg %p139
        %p547 = pneg %p136
        %p548 = pneg %p160
        %p549 = pneg %p157
        %p550 = pneg %p181
        %p551 = pneg %p178
        %p552 = pneg %p202
        %p553 = pneg %p199
        %p554 = pneg %p223
        %p555 = pneg %p220
        %p556 = pneg %p244
        %p557 = pneg %p241
        %p558 = pneg %p265
        %p559 = pneg %p262
        %p560 = pneg %p286
        %p561 = pneg %p283
        %p562 = pneg %p307
        %p563 = pneg %p304
        %p564 = pneg %p328
        %p565 = pneg %p325
        %p566 = pneg %p354
        %p567 = pneg %p351
        %s568 = sand.u32 %s341, 1
        %s569 = scalar_lea.sflag [#allocation4], %s568
        %s570 = sand.u32 %s341, 1
        %s571 = smul.addr %s570, 64
        %s572 = scalar_lea.vmem [#allocation14], %s571
        %v574 = vld [vmem:[%s504] sm:$0xff]
        %v575 = vld [vmem:[%s504 + $0x8] sm:$0xff]
        %v576 = vld [vmem:[%s504 + $0x10] sm:$0xff]
        %v577 = vld [vmem:[%s504 + $0x18] sm:$0xff]
        %v578 = vld [vmem:[%s504 + $0x20] sm:$0xff]
        %v579 = vld [vmem:[%s504 + $0x28] sm:$0xff]
        %v580 = vld [vmem:[%s504 + $0x30] sm:$0xff]
        %v581 = vld [vmem:[%s504 + $0x38] sm:$0xff]
        %590 = vrot.lane.b32.xlu0 %v574, 96
        %v591 = vpop.permute.xlu0 %590
        %592 = vrot.lane.b32.xlu0 %v575, 96
        %v593 = vpop.permute.xlu0 %592
        %594 = vrot.lane.b32.xlu0 %v576, 96
        %v595 = vpop.permute.xlu0 %594
        %596 = vrot.lane.b32.xlu0 %v577, 96
        %v597 = vpop.permute.xlu0 %596
        %598 = vrot.lane.b32.xlu0 %v578, 96
        %v599 = vpop.permute.xlu0 %598
        %600 = vrot.lane.b32.xlu0 %v579, 96
        %v601 = vpop.permute.xlu0 %600
        %602 = vrot.lane.b32.xlu0 %v580, 96
        %v603 = vpop.permute.xlu0 %602
        %604 = vrot.lane.b32.xlu0 %v581, 96
        %v605 = vpop.permute.xlu0 %604
        %614 = vrot.lane.b32.xlu0 %v574, 64
        %v615 = vpop.permute.xlu0 %614
        %616 = vrot.lane.b32.xlu0 %v575, 64
        %v617 = vpop.permute.xlu0 %616
        %618 = vrot.lane.b32.xlu0 %v576, 64
        %v619 = vpop.permute.xlu0 %618
        %620 = vrot.lane.b32.xlu0 %v577, 64
        %v621 = vpop.permute.xlu0 %620
        %622 = vrot.lane.b32.xlu0 %v578, 64
        %v623 = vpop.permute.xlu0 %622
        %624 = vrot.lane.b32.xlu0 %v579, 64
        %v625 = vpop.permute.xlu0 %624
        %626 = vrot.lane.b32.xlu0 %v580, 64
        %v627 = vpop.permute.xlu0 %626
        %628 = vrot.lane.b32.xlu0 %v581, 64
        %v629 = vpop.permute.xlu0 %628
        %638 = vrot.lane.b32.xlu0 %v574, 32
        %v639 = vpop.permute.xlu0 %638
        %640 = vrot.lane.b32.xlu0 %v575, 32
        %v641 = vpop.permute.xlu0 %640
        %642 = vrot.lane.b32.xlu0 %v576, 32
        %v643 = vpop.permute.xlu0 %642
        %644 = vrot.lane.b32.xlu0 %v577, 32
        %v645 = vpop.permute.xlu0 %644
        %646 = vrot.lane.b32.xlu0 %v578, 32
        %v647 = vpop.permute.xlu0 %646
        %648 = vrot.lane.b32.xlu0 %v579, 32
        %v649 = vpop.permute.xlu0 %648
        %650 = vrot.lane.b32.xlu0 %v580, 32
        %v651 = vpop.permute.xlu0 %650
        %652 = vrot.lane.b32.xlu0 %v581, 32
        %v653 = vpop.permute.xlu0 %652
        %v662 = vcombine.low %v574, %v615
        %v663 = vcombine.high %v574, %v615
        %v665 = vunpack.c.l.s4 1983009808
        %v666 = vunpack.c.0.s8 %v665
        %v667 = vlaneseq
        %v668 = vshrl.u32 %v667, 7
        %v669 = vsub.s32 %v666, %v668
        %v670 = vrot.slane %v662, %v669
        %v672 = vunpack.c.l.s4 1983009808
        %v673 = vunpack.c.0.s8 %v672
        %v674 = vlaneseq
        %v675 = vshrl.u32 %v674, 7
        %v676 = vsub.s32 %v673, %v675
        %v677 = vrot.slane %v663, %v676
        %v678 = vcombine.low %v591, %v639
        %v679 = vcombine.high %v591, %v639
        %v681 = vunpack.c.l.s4 1983009808
        %v682 = vunpack.c.0.s8 %v681
        %v683 = vlaneseq
        %v684 = vshrl.u32 %v683, 7
        %v685 = vsub.s32 %v682, %v684
        %v686 = vrot.slane %v678, %v685
        %v688 = vunpack.c.l.s4 1983009808
        %v689 = vunpack.c.0.s8 %v688
        %v690 = vlaneseq
        %v691 = vshrl.u32 %v690, 7
        %v692 = vsub.s32 %v689, %v691
        %v693 = vrot.slane %v679, %v692
        %v694 = vcombine.low %v670, %v686
        %v695 = vcombine.high %v670, %v686
        %v697 = vunpack.c.l.s4 1934713408
        %v698 = vunpack.c.0.s8 %v697
        %v699 = vlaneseq
        %v700 = vshrl.u32 %v699, 7
        %v701 = vsub.s32 %v698, %v700
        %v702 = vrot.slane %v694, %v701
        %v704 = vunpack.c.l.s4 1934713408
        %v705 = vunpack.c.0.s8 %v704
        %v706 = vlaneseq
        %v707 = vshrl.u32 %v706, 7
        %v708 = vsub.s32 %v705, %v707
        %v709 = vrot.slane %v695, %v708
        %v710 = vcombine.low %v677, %v693
        %v711 = vcombine.high %v677, %v693
        %v713 = vunpack.c.l.s4 1934713408
        %v714 = vunpack.c.0.s8 %v713
        %v715 = vlaneseq
        %v716 = vshrl.u32 %v715, 7
        %v717 = vsub.s32 %v714, %v716
        %v718 = vrot.slane %v710, %v717
        %v720 = vunpack.c.l.s4 1934713408
        %v721 = vunpack.c.0.s8 %v720
        %v722 = vlaneseq
        %v723 = vshrl.u32 %v722, 7
        %v724 = vsub.s32 %v721, %v723
        %v725 = vrot.slane %v711, %v724
        %v726 = vcombine.high %v702, 0.0
        %v727 = vcombine.high %v709, 0.0
        %v728 = vcombine.high %v718, 0.0
        %v729 = vcombine.high %v725, 0.0
        %v730 = vcombine.low %v575, %v617
        %v731 = vcombine.high %v575, %v617
        %v733 = vunpack.c.l.s4 1983009808
        %v734 = vunpack.c.0.s8 %v733
        %v735 = vlaneseq
        %v736 = vshrl.u32 %v735, 7
        %v737 = vsub.s32 %v734, %v736
        %v738 = vrot.slane %v730, %v737
        %v740 = vunpack.c.l.s4 1983009808
        %v741 = vunpack.c.0.s8 %v740
        %v742 = vlaneseq
        %v743 = vshrl.u32 %v742, 7
        %v744 = vsub.s32 %v741, %v743
        %v745 = vrot.slane %v731, %v744
        %v746 = vcombine.low %v593, %v641
        %v747 = vcombine.high %v593, %v641
        %v749 = vunpack.c.l.s4 1983009808
        %v750 = vunpack.c.0.s8 %v749
        %v751 = vlaneseq
        %v752 = vshrl.u32 %v751, 7
        %v753 = vsub.s32 %v750, %v752
        %v754 = vrot.slane %v746, %v753
        %v756 = vunpack.c.l.s4 1983009808
        %v757 = vunpack.c.0.s8 %v756
        %v758 = vlaneseq
        %v759 = vshrl.u32 %v758, 7
        %v760 = vsub.s32 %v757, %v759
        %v761 = vrot.slane %v747, %v760
        %v762 = vcombine.low %v738, %v754
        %v763 = vcombine.high %v738, %v754
        %v765 = vunpack.c.l.s4 1934713408
        %v766 = vunpack.c.0.s8 %v765
        %v767 = vlaneseq
        %v768 = vshrl.u32 %v767, 7
        %v769 = vsub.s32 %v766, %v768
        %v770 = vrot.slane %v762, %v769
        %v772 = vunpack.c.l.s4 1934713408
        %v773 = vunpack.c.0.s8 %v772
        %v774 = vlaneseq
        %v775 = vshrl.u32 %v774, 7
        %v776 = vsub.s32 %v773, %v775
        %v777 = vrot.slane %v763, %v776
        %v778 = vcombine.low %v745, %v761
        %v779 = vcombine.high %v745, %v761
        %v781 = vunpack.c.l.s4 1934713408
        %v782 = vunpack.c.0.s8 %v781
        %v783 = vlaneseq
        %v784 = vshrl.u32 %v783, 7
        %v785 = vsub.s32 %v782, %v784
        %v786 = vrot.slane %v778, %v785
        %v788 = vunpack.c.l.s4 1934713408
        %v789 = vunpack.c.0.s8 %v788
        %v790 = vlaneseq
        %v791 = vshrl.u32 %v790, 7
        %v792 = vsub.s32 %v789, %v791
        %v793 = vrot.slane %v779, %v792
        %v794 = vcombine.high %v770, 0.0
        %v795 = vcombine.high %v777, 0.0
        %v796 = vcombine.high %v786, 0.0
        %v797 = vcombine.high %v793, 0.0
        %v798 = vcombine.low %v576, %v619
        %v799 = vcombine.high %v576, %v619
        %v801 = vunpack.c.l.s4 1983009808
        %v802 = vunpack.c.0.s8 %v801
        %v803 = vlaneseq
        %v804 = vshrl.u32 %v803, 7
        %v805 = vsub.s32 %v802, %v804
        %v806 = vrot.slane %v798, %v805
        %v808 = vunpack.c.l.s4 1983009808
        %v809 = vunpack.c.0.s8 %v808
        %v810 = vlaneseq
        %v811 = vshrl.u32 %v810, 7
        %v812 = vsub.s32 %v809, %v811
        %v813 = vrot.slane %v799, %v812
        %v814 = vcombine.low %v595, %v643
        %v815 = vcombine.high %v595, %v643
        %v817 = vunpack.c.l.s4 1983009808
        %v818 = vunpack.c.0.s8 %v817
        %v819 = vlaneseq
        %v820 = vshrl.u32 %v819, 7
        %v821 = vsub.s32 %v818, %v820
        %v822 = vrot.slane %v814, %v821
        %v824 = vunpack.c.l.s4 1983009808
        %v825 = vunpack.c.0.s8 %v824
        %v826 = vlaneseq
        %v827 = vshrl.u32 %v826, 7
        %v828 = vsub.s32 %v825, %v827
        %v829 = vrot.slane %v815, %v828
        %v830 = vcombine.low %v806, %v822
        %v831 = vcombine.high %v806, %v822
        %v833 = vunpack.c.l.s4 1934713408
        %v834 = vunpack.c.0.s8 %v833
        %v835 = vlaneseq
        %v836 = vshrl.u32 %v835, 7
        %v837 = vsub.s32 %v834, %v836
        %v838 = vrot.slane %v830, %v837
        %v840 = vunpack.c.l.s4 1934713408
        %v841 = vunpack.c.0.s8 %v840
        %v842 = vlaneseq
        %v843 = vshrl.u32 %v842, 7
        %v844 = vsub.s32 %v841, %v843
        %v845 = vrot.slane %v831, %v844
        %v846 = vcombine.low %v813, %v829
        %v847 = vcombine.high %v813, %v829
        %v849 = vunpack.c.l.s4 1934713408
        %v850 = vunpack.c.0.s8 %v849
        %v851 = vlaneseq
        %v852 = vshrl.u32 %v851, 7
        %v853 = vsub.s32 %v850, %v852
        %v854 = vrot.slane %v846, %v853
        %v856 = vunpack.c.l.s4 1934713408
        %v857 = vunpack.c.0.s8 %v856
        %v858 = vlaneseq
        %v859 = vshrl.u32 %v858, 7
        %v860 = vsub.s32 %v857, %v859
        %v861 = vrot.slane %v847, %v860
        %v862 = vcombine.high %v838, 0.0
        %v863 = vcombine.high %v845, 0.0
        %v864 = vcombine.high %v854, 0.0
        %v865 = vcombine.high %v861, 0.0
        %v866 = vcombine.low %v577, %v621
        %v867 = vcombine.high %v577, %v621
        %v869 = vunpack.c.l.s4 1983009808
        %v870 = vunpack.c.0.s8 %v869
        %v871 = vlaneseq
        %v872 = vshrl.u32 %v871, 7
        %v873 = vsub.s32 %v870, %v872
        %v874 = vrot.slane %v866, %v873
        %v876 = vunpack.c.l.s4 1983009808
        %v877 = vunpack.c.0.s8 %v876
        %v878 = vlaneseq
        %v879 = vshrl.u32 %v878, 7
        %v880 = vsub.s32 %v877, %v879
        %v881 = vrot.slane %v867, %v880
        %v882 = vcombine.low %v597, %v645
        %v883 = vcombine.high %v597, %v645
        %v885 = vunpack.c.l.s4 1983009808
        %v886 = vunpack.c.0.s8 %v885
        %v887 = vlaneseq
        %v888 = vshrl.u32 %v887, 7
        %v889 = vsub.s32 %v886, %v888
        %v890 = vrot.slane %v882, %v889
        %v892 = vunpack.c.l.s4 1983009808
        %v893 = vunpack.c.0.s8 %v892
        %v894 = vlaneseq
        %v895 = vshrl.u32 %v894, 7
        %v896 = vsub.s32 %v893, %v895
        %v897 = vrot.slane %v883, %v896
        %v898 = vcombine.low %v874, %v890
        %v899 = vcombine.high %v874, %v890
        %v901 = vunpack.c.l.s4 1934713408
        %v902 = vunpack.c.0.s8 %v901
        %v903 = vlaneseq
        %v904 = vshrl.u32 %v903, 7
        %v905 = vsub.s32 %v902, %v904
        %v906 = vrot.slane %v898, %v905
        %v908 = vunpack.c.l.s4 1934713408
        %v909 = vunpack.c.0.s8 %v908
        %v910 = vlaneseq
        %v911 = vshrl.u32 %v910, 7
        %v912 = vsub.s32 %v909, %v911
        %v913 = vrot.slane %v899, %v912
        %v914 = vcombine.low %v881, %v897
        %v915 = vcombine.high %v881, %v897
        %v917 = vunpack.c.l.s4 1934713408
        %v918 = vunpack.c.0.s8 %v917
        %v919 = vlaneseq
        %v920 = vshrl.u32 %v919, 7
        %v921 = vsub.s32 %v918, %v920
        %v922 = vrot.slane %v914, %v921
        %v924 = vunpack.c.l.s4 1934713408
        %v925 = vunpack.c.0.s8 %v924
        %v926 = vlaneseq
        %v927 = vshrl.u32 %v926, 7
        %v928 = vsub.s32 %v925, %v927
        %v929 = vrot.slane %v915, %v928
        %v930 = vcombine.high %v906, 0.0
        %v931 = vcombine.high %v913, 0.0
        %v932 = vcombine.high %v922, 0.0
        %v933 = vcombine.high %v929, 0.0
        %v934 = vcombine.low %v578, %v623
        %v935 = vcombine.high %v578, %v623
        %v937 = vunpack.c.l.s4 1983009808
        %v938 = vunpack.c.0.s8 %v937
        %v939 = vlaneseq
        %v940 = vshrl.u32 %v939, 7
        %v941 = vsub.s32 %v938, %v940
        %v942 = vrot.slane %v934, %v941
        %v944 = vunpack.c.l.s4 1983009808
        %v945 = vunpack.c.0.s8 %v944
        %v946 = vlaneseq
        %v947 = vshrl.u32 %v946, 7
        %v948 = vsub.s32 %v945, %v947
        %v949 = vrot.slane %v935, %v948
        %v950 = vcombine.low %v599, %v647
        %v951 = vcombine.high %v599, %v647
        %v953 = vunpack.c.l.s4 1983009808
        %v954 = vunpack.c.0.s8 %v953
        %v955 = vlaneseq
        %v956 = vshrl.u32 %v955, 7
        %v957 = vsub.s32 %v954, %v956
        %v958 = vrot.slane %v950, %v957
        %v960 = vunpack.c.l.s4 1983009808
        %v961 = vunpack.c.0.s8 %v960
        %v962 = vlaneseq
        %v963 = vshrl.u32 %v962, 7
        %v964 = vsub.s32 %v961, %v963
        %v965 = vrot.slane %v951, %v964
        %v966 = vcombine.low %v942, %v958
        %v967 = vcombine.high %v942, %v958
        %v969 = vunpack.c.l.s4 1934713408
        %v970 = vunpack.c.0.s8 %v969
        %v971 = vlaneseq
        %v972 = vshrl.u32 %v971, 7
        %v973 = vsub.s32 %v970, %v972
        %v974 = vrot.slane %v966, %v973
        %v976 = vunpack.c.l.s4 1934713408
        %v977 = vunpack.c.0.s8 %v976
        %v978 = vlaneseq
        %v979 = vshrl.u32 %v978, 7
        %v980 = vsub.s32 %v977, %v979
        %v981 = vrot.slane %v967, %v980
        %v982 = vcombine.low %v949, %v965
        %v983 = vcombine.high %v949, %v965
        %v985 = vunpack.c.l.s4 1934713408
        %v986 = vunpack.c.0.s8 %v985
        %v987 = vlaneseq
        %v988 = vshrl.u32 %v987, 7
        %v989 = vsub.s32 %v986, %v988
        %v990 = vrot.slane %v982, %v989
        %v992 = vunpack.c.l.s4 1934713408
        %v993 = vunpack.c.0.s8 %v992
        %v994 = vlaneseq
        %v995 = vshrl.u32 %v994, 7
        %v996 = vsub.s32 %v993, %v995
        %v997 = vrot.slane %v983, %v996
        %v998 = vcombine.high %v974, 0.0
        %v999 = vcombine.high %v981, 0.0
        %v1000 = vcombine.high %v990, 0.0
        %v1001 = vcombine.high %v997, 0.0
        %v1002 = vcombine.low %v579, %v625
        %v1003 = vcombine.high %v579, %v625
        %v1005 = vunpack.c.l.s4 1983009808
        %v1006 = vunpack.c.0.s8 %v1005
        %v1007 = vlaneseq
        %v1008 = vshrl.u32 %v1007, 7
        %v1009 = vsub.s32 %v1006, %v1008
        %v1010 = vrot.slane %v1002, %v1009
        %v1012 = vunpack.c.l.s4 1983009808
        %v1013 = vunpack.c.0.s8 %v1012
        %v1014 = vlaneseq
        %v1015 = vshrl.u32 %v1014, 7
        %v1016 = vsub.s32 %v1013, %v1015
        %v1017 = vrot.slane %v1003, %v1016
        %v1018 = vcombine.low %v601, %v649
        %v1019 = vcombine.high %v601, %v649
        %v1021 = vunpack.c.l.s4 1983009808
        %v1022 = vunpack.c.0.s8 %v1021
        %v1023 = vlaneseq
        %v1024 = vshrl.u32 %v1023, 7
        %v1025 = vsub.s32 %v1022, %v1024
        %v1026 = vrot.slane %v1018, %v1025
        %v1028 = vunpack.c.l.s4 1983009808
        %v1029 = vunpack.c.0.s8 %v1028
        %v1030 = vlaneseq
        %v1031 = vshrl.u32 %v1030, 7
        %v1032 = vsub.s32 %v1029, %v1031
        %v1033 = vrot.slane %v1019, %v1032
        %v1034 = vcombine.low %v1010, %v1026
        %v1035 = vcombine.high %v1010, %v1026
        %v1037 = vunpack.c.l.s4 1934713408
        %v1038 = vunpack.c.0.s8 %v1037
        %v1039 = vlaneseq
        %v1040 = vshrl.u32 %v1039, 7
        %v1041 = vsub.s32 %v1038, %v1040
        %v1042 = vrot.slane %v1034, %v1041
        %v1044 = vunpack.c.l.s4 1934713408
        %v1045 = vunpack.c.0.s8 %v1044
        %v1046 = vlaneseq
        %v1047 = vshrl.u32 %v1046, 7
        %v1048 = vsub.s32 %v1045, %v1047
        %v1049 = vrot.slane %v1035, %v1048
        %v1050 = vcombine.low %v1017, %v1033
        %v1051 = vcombine.high %v1017, %v1033
        %v1053 = vunpack.c.l.s4 1934713408
        %v1054 = vunpack.c.0.s8 %v1053
        %v1055 = vlaneseq
        %v1056 = vshrl.u32 %v1055, 7
        %v1057 = vsub.s32 %v1054, %v1056
        %v1058 = vrot.slane %v1050, %v1057
        %v1060 = vunpack.c.l.s4 1934713408
        %v1061 = vunpack.c.0.s8 %v1060
        %v1062 = vlaneseq
        %v1063 = vshrl.u32 %v1062, 7
        %v1064 = vsub.s32 %v1061, %v1063
        %v1065 = vrot.slane %v1051, %v1064
        %v1066 = vcombine.high %v1042, 0.0
        %v1067 = vcombine.high %v1049, 0.0
        %v1068 = vcombine.high %v1058, 0.0
        %v1069 = vcombine.high %v1065, 0.0
        %v1070 = vcombine.low %v580, %v627
        %v1071 = vcombine.high %v580, %v627
        %v1073 = vunpack.c.l.s4 1983009808
        %v1074 = vunpack.c.0.s8 %v1073
        %v1075 = vlaneseq
        %v1076 = vshrl.u32 %v1075, 7
        %v1077 = vsub.s32 %v1074, %v1076
        %v1078 = vrot.slane %v1070, %v1077
        %v1080 = vunpack.c.l.s4 1983009808
        %v1081 = vunpack.c.0.s8 %v1080
        %v1082 = vlaneseq
        %v1083 = vshrl.u32 %v1082, 7
        %v1084 = vsub.s32 %v1081, %v1083
        %v1085 = vrot.slane %v1071, %v1084
        %v1086 = vcombine.low %v603, %v651
        %v1087 = vcombine.high %v603, %v651
        %v1089 = vunpack.c.l.s4 1983009808
        %v1090 = vunpack.c.0.s8 %v1089
        %v1091 = vlaneseq
        %v1092 = vshrl.u32 %v1091, 7
        %v1093 = vsub.s32 %v1090, %v1092
        %v1094 = vrot.slane %v1086, %v1093
        %v1096 = vunpack.c.l.s4 1983009808
        %v1097 = vunpack.c.0.s8 %v1096
        %v1098 = vlaneseq
        %v1099 = vshrl.u32 %v1098, 7
        %v1100 = vsub.s32 %v1097, %v1099
        %v1101 = vrot.slane %v1087, %v1100
        %v1102 = vcombine.low %v1078, %v1094
        %v1103 = vcombine.high %v1078, %v1094
        %v1105 = vunpack.c.l.s4 1934713408
        %v1106 = vunpack.c.0.s8 %v1105
        %v1107 = vlaneseq
        %v1108 = vshrl.u32 %v1107, 7
        %v1109 = vsub.s32 %v1106, %v1108
        %v1110 = vrot.slane %v1102, %v1109
        %v1112 = vunpack.c.l.s4 1934713408
        %v1113 = vunpack.c.0.s8 %v1112
        %v1114 = vlaneseq
        %v1115 = vshrl.u32 %v1114, 7
        %v1116 = vsub.s32 %v1113, %v1115
        %v1117 = vrot.slane %v1103, %v1116
        %v1118 = vcombine.low %v1085, %v1101
        %v1119 = vcombine.high %v1085, %v1101
        %v1121 = vunpack.c.l.s4 1934713408
        %v1122 = vunpack.c.0.s8 %v1121
        %v1123 = vlaneseq
        %v1124 = vshrl.u32 %v1123, 7
        %v1125 = vsub.s32 %v1122, %v1124
        %v1126 = vrot.slane %v1118, %v1125
        %v1128 = vunpack.c.l.s4 1934713408
        %v1129 = vunpack.c.0.s8 %v1128
        %v1130 = vlaneseq
        %v1131 = vshrl.u32 %v1130, 7
        %v1132 = vsub.s32 %v1129, %v1131
        %v1133 = vrot.slane %v1119, %v1132
        %v1134 = vcombine.high %v1110, 0.0
        %v1135 = vcombine.high %v1117, 0.0
        %v1136 = vcombine.high %v1126, 0.0
        %v1137 = vcombine.high %v1133, 0.0
        %v1138 = vcombine.low %v581, %v629
        %v1139 = vcombine.high %v581, %v629
        %v1141 = vunpack.c.l.s4 1983009808
        %v1142 = vunpack.c.0.s8 %v1141
        %v1143 = vlaneseq
        %v1144 = vshrl.u32 %v1143, 7
        %v1145 = vsub.s32 %v1142, %v1144
        %v1146 = vrot.slane %v1138, %v1145
        %v1148 = vunpack.c.l.s4 1983009808
        %v1149 = vunpack.c.0.s8 %v1148
        %v1150 = vlaneseq
        %v1151 = vshrl.u32 %v1150, 7
        %v1152 = vsub.s32 %v1149, %v1151
        %v1153 = vrot.slane %v1139, %v1152
        %v1154 = vcombine.low %v605, %v653
        %v1155 = vcombine.high %v605, %v653
        %v1157 = vunpack.c.l.s4 1983009808
        %v1158 = vunpack.c.0.s8 %v1157
        %v1159 = vlaneseq
        %v1160 = vshrl.u32 %v1159, 7
        %v1161 = vsub.s32 %v1158, %v1160
        %v1162 = vrot.slane %v1154, %v1161
        %v1164 = vunpack.c.l.s4 1983009808
        %v1165 = vunpack.c.0.s8 %v1164
        %v1166 = vlaneseq
        %v1167 = vshrl.u32 %v1166, 7
        %v1168 = vsub.s32 %v1165, %v1167
        %v1169 = vrot.slane %v1155, %v1168
        %v1170 = vcombine.low %v1146, %v1162
        %v1171 = vcombine.high %v1146, %v1162
        %v1173 = vunpack.c.l.s4 1934713408
        %v1174 = vunpack.c.0.s8 %v1173
        %v1175 = vlaneseq
        %v1176 = vshrl.u32 %v1175, 7
        %v1177 = vsub.s32 %v1174, %v1176
        %v1178 = vrot.slane %v1170, %v1177
        %v1180 = vunpack.c.l.s4 1934713408
        %v1181 = vunpack.c.0.s8 %v1180
        %v1182 = vlaneseq
        %v1183 = vshrl.u32 %v1182, 7
        %v1184 = vsub.s32 %v1181, %v1183
        %v1185 = vrot.slane %v1171, %v1184
        %v1186 = vcombine.low %v1153, %v1169
        %v1187 = vcombine.high %v1153, %v1169
        %v1189 = vunpack.c.l.s4 1934713408
        %v1190 = vunpack.c.0.s8 %v1189
        %v1191 = vlaneseq
        %v1192 = vshrl.u32 %v1191, 7
        %v1193 = vsub.s32 %v1190, %v1192
        %v1194 = vrot.slane %v1186, %v1193
        %v1196 = vunpack.c.l.s4 1934713408
        %v1197 = vunpack.c.0.s8 %v1196
        %v1198 = vlaneseq
        %v1199 = vshrl.u32 %v1198, 7
        %v1200 = vsub.s32 %v1197, %v1199
        %v1201 = vrot.slane %v1187, %v1200
        %v1202 = vcombine.high %v1178, 0.0
        %v1203 = vcombine.high %v1185, 0.0
        %v1204 = vcombine.high %v1194, 0.0
        %v1205 = vcombine.high %v1201, 0.0
        %v1206 = vcombine.low %v702, %v709
        %v1208 = vunpack.c.l.s4 1983009808
        %v1209 = vunpack.c.0.s8 %v1208
        %v1210 = vlaneseq
        %v1211 = vshrl.u32 %v1210, 7
        %v1212 = vsub.s32 %v1209, %v1211
        %v1213 = vrot.slane %v1206, %v1212
        %v1214 = vcombine.low %v726, %v727
        %v1216 = vunpack.c.l.s4 1983009808
        %v1217 = vunpack.c.0.s8 %v1216
        %v1218 = vlaneseq
        %v1219 = vshrl.u32 %v1218, 7
        %v1220 = vsub.s32 %v1217, %v1219
        %v1221 = vrot.slane %v1214, %v1220
        %v1222 = vcombine.low %v718, %v725
        %v1224 = vunpack.c.l.s4 1983009808
        %v1225 = vunpack.c.0.s8 %v1224
        %v1226 = vlaneseq
        %v1227 = vshrl.u32 %v1226, 7
        %v1228 = vsub.s32 %v1225, %v1227
        %v1229 = vrot.slane %v1222, %v1228
        %v1230 = vcombine.low %v728, %v729
        %v1232 = vunpack.c.l.s4 1983009808
        %v1233 = vunpack.c.0.s8 %v1232
        %v1234 = vlaneseq
        %v1235 = vshrl.u32 %v1234, 7
        %v1236 = vsub.s32 %v1233, %v1235
        %v1237 = vrot.slane %v1230, %v1236
        %v1238 = vcombine.low %v1213, %v1221
        %v1239 = vcombine.high %v1213, %v1221
        %v1241 = vunpack.c.l.s4 1934713408
        %v1242 = vunpack.c.0.s8 %v1241
        %v1243 = vlaneseq
        %v1244 = vshrl.u32 %v1243, 7
        %v1245 = vsub.s32 %v1242, %v1244
        %v1246 = vrot.slane %v1238, %v1245
        %v1248 = vunpack.c.l.s4 1934713408
        %v1249 = vunpack.c.0.s8 %v1248
        %v1250 = vlaneseq
        %v1251 = vshrl.u32 %v1250, 7
        %v1252 = vsub.s32 %v1249, %v1251
        %v1253 = vrot.slane %v1239, %v1252
        %v1254 = vcombine.low %v1229, %v1237
        %v1255 = vcombine.high %v1229, %v1237
        %v1257 = vunpack.c.l.s4 1934713408
        %v1258 = vunpack.c.0.s8 %v1257
        %v1259 = vlaneseq
        %v1260 = vshrl.u32 %v1259, 7
        %v1261 = vsub.s32 %v1258, %v1260
        %v1262 = vrot.slane %v1254, %v1261
        %v1264 = vunpack.c.l.s4 1934713408
        %v1265 = vunpack.c.0.s8 %v1264
        %v1266 = vlaneseq
        %v1267 = vshrl.u32 %v1266, 7
        %v1268 = vsub.s32 %v1265, %v1267
        %v1269 = vrot.slane %v1255, %v1268
        %v1270 = vcombine.low %v1246, %v1262
        %v1271 = vcombine.high %v1246, %v1262
        %v1272 = vcombine.low %v1253, %v1269
        %v1273 = vcombine.high %v1253, %v1269
        %v1274 = vcombine.low %v770, %v777
        %v1276 = vunpack.c.l.s4 1983009808
        %v1277 = vunpack.c.0.s8 %v1276
        %v1278 = vlaneseq
        %v1279 = vshrl.u32 %v1278, 7
        %v1280 = vsub.s32 %v1277, %v1279
        %v1281 = vrot.slane %v1274, %v1280
        %v1282 = vcombine.low %v794, %v795
        %v1284 = vunpack.c.l.s4 1983009808
        %v1285 = vunpack.c.0.s8 %v1284
        %v1286 = vlaneseq
        %v1287 = vshrl.u32 %v1286, 7
        %v1288 = vsub.s32 %v1285, %v1287
        %v1289 = vrot.slane %v1282, %v1288
        %v1290 = vcombine.low %v786, %v793
        %v1292 = vunpack.c.l.s4 1983009808
        %v1293 = vunpack.c.0.s8 %v1292
        %v1294 = vlaneseq
        %v1295 = vshrl.u32 %v1294, 7
        %v1296 = vsub.s32 %v1293, %v1295
        %v1297 = vrot.slane %v1290, %v1296
        %v1298 = vcombine.low %v796, %v797
        %v1300 = vunpack.c.l.s4 1983009808
        %v1301 = vunpack.c.0.s8 %v1300
        %v1302 = vlaneseq
        %v1303 = vshrl.u32 %v1302, 7
        %v1304 = vsub.s32 %v1301, %v1303
        %v1305 = vrot.slane %v1298, %v1304
        %v1306 = vcombine.low %v1281, %v1289
        %v1307 = vcombine.high %v1281, %v1289
        %v1309 = vunpack.c.l.s4 1934713408
        %v1310 = vunpack.c.0.s8 %v1309
        %v1311 = vlaneseq
        %v1312 = vshrl.u32 %v1311, 7
        %v1313 = vsub.s32 %v1310, %v1312
        %v1314 = vrot.slane %v1306, %v1313
        %v1316 = vunpack.c.l.s4 1934713408
        %v1317 = vunpack.c.0.s8 %v1316
        %v1318 = vlaneseq
        %v1319 = vshrl.u32 %v1318, 7
        %v1320 = vsub.s32 %v1317, %v1319
        %v1321 = vrot.slane %v1307, %v1320
        %v1322 = vcombine.low %v1297, %v1305
        %v1323 = vcombine.high %v1297, %v1305
        %v1325 = vunpack.c.l.s4 1934713408
        %v1326 = vunpack.c.0.s8 %v1325
        %v1327 = vlaneseq
        %v1328 = vshrl.u32 %v1327, 7
        %v1329 = vsub.s32 %v1326, %v1328
        %v1330 = vrot.slane %v1322, %v1329
        %v1332 = vunpack.c.l.s4 1934713408
        %v1333 = vunpack.c.0.s8 %v1332
        %v1334 = vlaneseq
        %v1335 = vshrl.u32 %v1334, 7
        %v1336 = vsub.s32 %v1333, %v1335
        %v1337 = vrot.slane %v1323, %v1336
        %v1338 = vcombine.low %v1314, %v1330
        %v1339 = vcombine.high %v1314, %v1330
        %v1340 = vcombine.low %v1321, %v1337
        %v1341 = vcombine.high %v1321, %v1337
        %v1342 = vcombine.low %v838, %v845
        %v1344 = vunpack.c.l.s4 1983009808
        %v1345 = vunpack.c.0.s8 %v1344
        %v1346 = vlaneseq
        %v1347 = vshrl.u32 %v1346, 7
        %v1348 = vsub.s32 %v1345, %v1347
        %v1349 = vrot.slane %v1342, %v1348
        %v1350 = vcombine.low %v862, %v863
        %v1352 = vunpack.c.l.s4 1983009808
        %v1353 = vunpack.c.0.s8 %v1352
        %v1354 = vlaneseq
        %v1355 = vshrl.u32 %v1354, 7
        %v1356 = vsub.s32 %v1353, %v1355
        %v1357 = vrot.slane %v1350, %v1356
        %v1358 = vcombine.low %v854, %v861
        %v1360 = vunpack.c.l.s4 1983009808
        %v1361 = vunpack.c.0.s8 %v1360
        %v1362 = vlaneseq
        %v1363 = vshrl.u32 %v1362, 7
        %v1364 = vsub.s32 %v1361, %v1363
        %v1365 = vrot.slane %v1358, %v1364
        %v1366 = vcombine.low %v864, %v865
        %v1368 = vunpack.c.l.s4 1983009808
        %v1369 = vunpack.c.0.s8 %v1368
        %v1370 = vlaneseq
        %v1371 = vshrl.u32 %v1370, 7
        %v1372 = vsub.s32 %v1369, %v1371
        %v1373 = vrot.slane %v1366, %v1372
        %v1374 = vcombine.low %v1349, %v1357
        %v1375 = vcombine.high %v1349, %v1357
        %v1377 = vunpack.c.l.s4 1934713408
        %v1378 = vunpack.c.0.s8 %v1377
        %v1379 = vlaneseq
        %v1380 = vshrl.u32 %v1379, 7
        %v1381 = vsub.s32 %v1378, %v1380
        %v1382 = vrot.slane %v1374, %v1381
        %v1384 = vunpack.c.l.s4 1934713408
        %v1385 = vunpack.c.0.s8 %v1384
        %v1386 = vlaneseq
        %v1387 = vshrl.u32 %v1386, 7
        %v1388 = vsub.s32 %v1385, %v1387
        %v1389 = vrot.slane %v1375, %v1388
        %v1390 = vcombine.low %v1365, %v1373
        %v1391 = vcombine.high %v1365, %v1373
        %v1393 = vunpack.c.l.s4 1934713408
        %v1394 = vunpack.c.0.s8 %v1393
        %v1395 = vlaneseq
        %v1396 = vshrl.u32 %v1395, 7
        %v1397 = vsub.s32 %v1394, %v1396
        %v1398 = vrot.slane %v1390, %v1397
        %v1400 = vunpack.c.l.s4 1934713408
        %v1401 = vunpack.c.0.s8 %v1400
        %v1402 = vlaneseq
        %v1403 = vshrl.u32 %v1402, 7
        %v1404 = vsub.s32 %v1401, %v1403
        %v1405 = vrot.slane %v1391, %v1404
        %v1406 = vcombine.low %v1382, %v1398
        %v1407 = vcombine.high %v1382, %v1398
        %v1408 = vcombine.low %v1389, %v1405
        %v1409 = vcombine.high %v1389, %v1405
        %v1410 = vcombine.low %v906, %v913
        %v1412 = vunpack.c.l.s4 1983009808
        %v1413 = vunpack.c.0.s8 %v1412
        %v1414 = vlaneseq
        %v1415 = vshrl.u32 %v1414, 7
        %v1416 = vsub.s32 %v1413, %v1415
        %v1417 = vrot.slane %v1410, %v1416
        %v1418 = vcombine.low %v930, %v931
        %v1420 = vunpack.c.l.s4 1983009808
        %v1421 = vunpack.c.0.s8 %v1420
        %v1422 = vlaneseq
        %v1423 = vshrl.u32 %v1422, 7
        %v1424 = vsub.s32 %v1421, %v1423
        %v1425 = vrot.slane %v1418, %v1424
        %v1426 = vcombine.low %v922, %v929
        %v1428 = vunpack.c.l.s4 1983009808
        %v1429 = vunpack.c.0.s8 %v1428
        %v1430 = vlaneseq
        %v1431 = vshrl.u32 %v1430, 7
        %v1432 = vsub.s32 %v1429, %v1431
        %v1433 = vrot.slane %v1426, %v1432
        %v1434 = vcombine.low %v932, %v933
        %v1436 = vunpack.c.l.s4 1983009808
        %v1437 = vunpack.c.0.s8 %v1436
        %v1438 = vlaneseq
        %v1439 = vshrl.u32 %v1438, 7
        %v1440 = vsub.s32 %v1437, %v1439
        %v1441 = vrot.slane %v1434, %v1440
        %v1442 = vcombine.low %v1417, %v1425
        %v1443 = vcombine.high %v1417, %v1425
        %v1445 = vunpack.c.l.s4 1934713408
        %v1446 = vunpack.c.0.s8 %v1445
        %v1447 = vlaneseq
        %v1448 = vshrl.u32 %v1447, 7
        %v1449 = vsub.s32 %v1446, %v1448
        %v1450 = vrot.slane %v1442, %v1449
        %v1452 = vunpack.c.l.s4 1934713408
        %v1453 = vunpack.c.0.s8 %v1452
        %v1454 = vlaneseq
        %v1455 = vshrl.u32 %v1454, 7
        %v1456 = vsub.s32 %v1453, %v1455
        %v1457 = vrot.slane %v1443, %v1456
        %v1458 = vcombine.low %v1433, %v1441
        %v1459 = vcombine.high %v1433, %v1441
        %v1461 = vunpack.c.l.s4 1934713408
        %v1462 = vunpack.c.0.s8 %v1461
        %v1463 = vlaneseq
        %v1464 = vshrl.u32 %v1463, 7
        %v1465 = vsub.s32 %v1462, %v1464
        %v1466 = vrot.slane %v1458, %v1465
        %v1468 = vunpack.c.l.s4 1934713408
        %v1469 = vunpack.c.0.s8 %v1468
        %v1470 = vlaneseq
        %v1471 = vshrl.u32 %v1470, 7
        %v1472 = vsub.s32 %v1469, %v1471
        %v1473 = vrot.slane %v1459, %v1472
        %v1474 = vcombine.low %v1450, %v1466
        %v1475 = vcombine.high %v1450, %v1466
        %v1476 = vcombine.low %v1457, %v1473
        %v1477 = vcombine.high %v1457, %v1473
        %v1478 = vcombine.low %v974, %v981
        %v1480 = vunpack.c.l.s4 1983009808
        %v1481 = vunpack.c.0.s8 %v1480
        %v1482 = vlaneseq
        %v1483 = vshrl.u32 %v1482, 7
        %v1484 = vsub.s32 %v1481, %v1483
        %v1485 = vrot.slane %v1478, %v1484
        %v1486 = vcombine.low %v998, %v999
        %v1488 = vunpack.c.l.s4 1983009808
        %v1489 = vunpack.c.0.s8 %v1488
        %v1490 = vlaneseq
        %v1491 = vshrl.u32 %v1490, 7
        %v1492 = vsub.s32 %v1489, %v1491
        %v1493 = vrot.slane %v1486, %v1492
        %v1494 = vcombine.low %v990, %v997
        %v1496 = vunpack.c.l.s4 1983009808
        %v1497 = vunpack.c.0.s8 %v1496
        %v1498 = vlaneseq
        %v1499 = vshrl.u32 %v1498, 7
        %v1500 = vsub.s32 %v1497, %v1499
        %v1501 = vrot.slane %v1494, %v1500
        %v1502 = vcombine.low %v1000, %v1001
        %v1504 = vunpack.c.l.s4 1983009808
        %v1505 = vunpack.c.0.s8 %v1504
        %v1506 = vlaneseq
        %v1507 = vshrl.u32 %v1506, 7
        %v1508 = vsub.s32 %v1505, %v1507
        %v1509 = vrot.slane %v1502, %v1508
        %v1510 = vcombine.low %v1485, %v1493
        %v1511 = vcombine.high %v1485, %v1493
        %v1513 = vunpack.c.l.s4 1934713408
        %v1514 = vunpack.c.0.s8 %v1513
        %v1515 = vlaneseq
        %v1516 = vshrl.u32 %v1515, 7
        %v1517 = vsub.s32 %v1514, %v1516
        %v1518 = vrot.slane %v1510, %v1517
        %v1520 = vunpack.c.l.s4 1934713408
        %v1521 = vunpack.c.0.s8 %v1520
        %v1522 = vlaneseq
        %v1523 = vshrl.u32 %v1522, 7
        %v1524 = vsub.s32 %v1521, %v1523
        %v1525 = vrot.slane %v1511, %v1524
        %v1526 = vcombine.low %v1501, %v1509
        %v1527 = vcombine.high %v1501, %v1509
        %v1529 = vunpack.c.l.s4 1934713408
        %v1530 = vunpack.c.0.s8 %v1529
        %v1531 = vlaneseq
        %v1532 = vshrl.u32 %v1531, 7
        %v1533 = vsub.s32 %v1530, %v1532
        %v1534 = vrot.slane %v1526, %v1533
        %v1536 = vunpack.c.l.s4 1934713408
        %v1537 = vunpack.c.0.s8 %v1536
        %v1538 = vlaneseq
        %v1539 = vshrl.u32 %v1538, 7
        %v1540 = vsub.s32 %v1537, %v1539
        %v1541 = vrot.slane %v1527, %v1540
        %v1542 = vcombine.low %v1518, %v1534
        %v1543 = vcombine.high %v1518, %v1534
        %v1544 = vcombine.low %v1525, %v1541
        %v1545 = vcombine.high %v1525, %v1541
        %v1546 = vcombine.low %v1042, %v1049
        %v1548 = vunpack.c.l.s4 1983009808
        %v1549 = vunpack.c.0.s8 %v1548
        %v1550 = vlaneseq
        %v1551 = vshrl.u32 %v1550, 7
        %v1552 = vsub.s32 %v1549, %v1551
        %v1553 = vrot.slane %v1546, %v1552
        %v1554 = vcombine.low %v1066, %v1067
        %v1556 = vunpack.c.l.s4 1983009808
        %v1557 = vunpack.c.0.s8 %v1556
        %v1558 = vlaneseq
        %v1559 = vshrl.u32 %v1558, 7
        %v1560 = vsub.s32 %v1557, %v1559
        %v1561 = vrot.slane %v1554, %v1560
        %v1562 = vcombine.low %v1058, %v1065
        %v1564 = vunpack.c.l.s4 1983009808
        %v1565 = vunpack.c.0.s8 %v1564
        %v1566 = vlaneseq
        %v1567 = vshrl.u32 %v1566, 7
        %v1568 = vsub.s32 %v1565, %v1567
        %v1569 = vrot.slane %v1562, %v1568
        %v1570 = vcombine.low %v1068, %v1069
        %v1572 = vunpack.c.l.s4 1983009808
        %v1573 = vunpack.c.0.s8 %v1572
        %v1574 = vlaneseq
        %v1575 = vshrl.u32 %v1574, 7
        %v1576 = vsub.s32 %v1573, %v1575
        %v1577 = vrot.slane %v1570, %v1576
        %v1578 = vcombine.low %v1553, %v1561
        %v1579 = vcombine.high %v1553, %v1561
        %v1581 = vunpack.c.l.s4 1934713408
        %v1582 = vunpack.c.0.s8 %v1581
        %v1583 = vlaneseq
        %v1584 = vshrl.u32 %v1583, 7
        %v1585 = vsub.s32 %v1582, %v1584
        %v1586 = vrot.slane %v1578, %v1585
        %v1588 = vunpack.c.l.s4 1934713408
        %v1589 = vunpack.c.0.s8 %v1588
        %v1590 = vlaneseq
        %v1591 = vshrl.u32 %v1590, 7
        %v1592 = vsub.s32 %v1589, %v1591
        %v1593 = vrot.slane %v1579, %v1592
        %v1594 = vcombine.low %v1569, %v1577
        %v1595 = vcombine.high %v1569, %v1577
        %v1597 = vunpack.c.l.s4 1934713408
        %v1598 = vunpack.c.0.s8 %v1597
        %v1599 = vlaneseq
        %v1600 = vshrl.u32 %v1599, 7
        %v1601 = vsub.s32 %v1598, %v1600
        %v1602 = vrot.slane %v1594, %v1601
        %v1604 = vunpack.c.l.s4 1934713408
        %v1605 = vunpack.c.0.s8 %v1604
        %v1606 = vlaneseq
        %v1607 = vshrl.u32 %v1606, 7
        %v1608 = vsub.s32 %v1605, %v1607
        %v1609 = vrot.slane %v1595, %v1608
        %v1610 = vcombine.low %v1586, %v1602
        %v1611 = vcombine.high %v1586, %v1602
        %v1612 = vcombine.low %v1593, %v1609
        %v1613 = vcombine.high %v1593, %v1609
        %v1614 = vcombine.low %v1110, %v1117
        %v1616 = vunpack.c.l.s4 1983009808
        %v1617 = vunpack.c.0.s8 %v1616
        %v1618 = vlaneseq
        %v1619 = vshrl.u32 %v1618, 7
        %v1620 = vsub.s32 %v1617, %v1619
        %v1621 = vrot.slane %v1614, %v1620
        %v1622 = vcombine.low %v1134, %v1135
        %v1624 = vunpack.c.l.s4 1983009808
        %v1625 = vunpack.c.0.s8 %v1624
        %v1626 = vlaneseq
        %v1627 = vshrl.u32 %v1626, 7
        %v1628 = vsub.s32 %v1625, %v1627
        %v1629 = vrot.slane %v1622, %v1628
        %v1630 = vcombine.low %v1126, %v1133
        %v1632 = vunpack.c.l.s4 1983009808
        %v1633 = vunpack.c.0.s8 %v1632
        %v1634 = vlaneseq
        %v1635 = vshrl.u32 %v1634, 7
        %v1636 = vsub.s32 %v1633, %v1635
        %v1637 = vrot.slane %v1630, %v1636
        %v1638 = vcombine.low %v1136, %v1137
        %v1640 = vunpack.c.l.s4 1983009808
        %v1641 = vunpack.c.0.s8 %v1640
        %v1642 = vlaneseq
        %v1643 = vshrl.u32 %v1642, 7
        %v1644 = vsub.s32 %v1641, %v1643
        %v1645 = vrot.slane %v1638, %v1644
        %v1646 = vcombine.low %v1621, %v1629
        %v1647 = vcombine.high %v1621, %v1629
        %v1649 = vunpack.c.l.s4 1934713408
        %v1650 = vunpack.c.0.s8 %v1649
        %v1651 = vlaneseq
        %v1652 = vshrl.u32 %v1651, 7
        %v1653 = vsub.s32 %v1650, %v1652
        %v1654 = vrot.slane %v1646, %v1653
        %v1656 = vunpack.c.l.s4 1934713408
        %v1657 = vunpack.c.0.s8 %v1656
        %v1658 = vlaneseq
        %v1659 = vshrl.u32 %v1658, 7
        %v1660 = vsub.s32 %v1657, %v1659
        %v1661 = vrot.slane %v1647, %v1660
        %v1662 = vcombine.low %v1637, %v1645
        %v1663 = vcombine.high %v1637, %v1645
        %v1665 = vunpack.c.l.s4 1934713408
        %v1666 = vunpack.c.0.s8 %v1665
        %v1667 = vlaneseq
        %v1668 = vshrl.u32 %v1667, 7
        %v1669 = vsub.s32 %v1666, %v1668
        %v1670 = vrot.slane %v1662, %v1669
        %v1672 = vunpack.c.l.s4 1934713408
        %v1673 = vunpack.c.0.s8 %v1672
        %v1674 = vlaneseq
        %v1675 = vshrl.u32 %v1674, 7
        %v1676 = vsub.s32 %v1673, %v1675
        %v1677 = vrot.slane %v1663, %v1676
        %v1678 = vcombine.low %v1654, %v1670
        %v1679 = vcombine.high %v1654, %v1670
        %v1680 = vcombine.low %v1661, %v1677
        %v1681 = vcombine.high %v1661, %v1677
        %v1682 = vcombine.low %v1178, %v1185
        %v1684 = vunpack.c.l.s4 1983009808
        %v1685 = vunpack.c.0.s8 %v1684
        %v1686 = vlaneseq
        %v1687 = vshrl.u32 %v1686, 7
        %v1688 = vsub.s32 %v1685, %v1687
        %v1689 = vrot.slane %v1682, %v1688
        %v1690 = vcombine.low %v1202, %v1203
        %v1692 = vunpack.c.l.s4 1983009808
        %v1693 = vunpack.c.0.s8 %v1692
        %v1694 = vlaneseq
        %v1695 = vshrl.u32 %v1694, 7
        %v1696 = vsub.s32 %v1693, %v1695
        %v1697 = vrot.slane %v1690, %v1696
        %v1698 = vcombine.low %v1194, %v1201
        %v1700 = vunpack.c.l.s4 1983009808
        %v1701 = vunpack.c.0.s8 %v1700
        %v1702 = vlaneseq
        %v1703 = vshrl.u32 %v1702, 7
        %v1704 = vsub.s32 %v1701, %v1703
        %v1705 = vrot.slane %v1698, %v1704
        %v1706 = vcombine.low %v1204, %v1205
        %v1708 = vunpack.c.l.s4 1983009808
        %v1709 = vunpack.c.0.s8 %v1708
        %v1710 = vlaneseq
        %v1711 = vshrl.u32 %v1710, 7
        %v1712 = vsub.s32 %v1709, %v1711
        %v1713 = vrot.slane %v1706, %v1712
        %v1714 = vcombine.low %v1689, %v1697
        %v1715 = vcombine.high %v1689, %v1697
        %v1717 = vunpack.c.l.s4 1934713408
        %v1718 = vunpack.c.0.s8 %v1717
        %v1719 = vlaneseq
        %v1720 = vshrl.u32 %v1719, 7
        %v1721 = vsub.s32 %v1718, %v1720
        %v1722 = vrot.slane %v1714, %v1721
        %v1724 = vunpack.c.l.s4 1934713408
        %v1725 = vunpack.c.0.s8 %v1724
        %v1726 = vlaneseq
        %v1727 = vshrl.u32 %v1726, 7
        %v1728 = vsub.s32 %v1725, %v1727
        %v1729 = vrot.slane %v1715, %v1728
        %v1730 = vcombine.low %v1705, %v1713
        %v1731 = vcombine.high %v1705, %v1713
        %v1733 = vunpack.c.l.s4 1934713408
        %v1734 = vunpack.c.0.s8 %v1733
        %v1735 = vlaneseq
        %v1736 = vshrl.u32 %v1735, 7
        %v1737 = vsub.s32 %v1734, %v1736
        %v1738 = vrot.slane %v1730, %v1737
        %v1740 = vunpack.c.l.s4 1934713408
        %v1741 = vunpack.c.0.s8 %v1740
        %v1742 = vlaneseq
        %v1743 = vshrl.u32 %v1742, 7
        %v1744 = vsub.s32 %v1741, %v1743
        %v1745 = vrot.slane %v1731, %v1744
        %v1746 = vcombine.low %v1722, %v1738
        %v1747 = vcombine.high %v1722, %v1738
        %v1748 = vcombine.low %v1729, %v1745
        %v1749 = vcombine.high %v1729, %v1745
        %v1750 = vpack.c.bf16 %v1338, %v1270
        %v1751 = vpack.c.bf16 %v1474, %v1406
        %v1752 = vpack.c.bf16 %v1610, %v1542
        %v1753 = vpack.c.bf16 %v1746, %v1678
        %v1754 = vpack.c.bf16 %v1339, %v1271
        %v1755 = vpack.c.bf16 %v1475, %v1407
        %v1756 = vpack.c.bf16 %v1611, %v1543
        %v1757 = vpack.c.bf16 %v1747, %v1679
        %v1758 = vpack.c.bf16 %v1340, %v1272
        %v1759 = vpack.c.bf16 %v1476, %v1408
        %v1760 = vpack.c.bf16 %v1612, %v1544
        %v1761 = vpack.c.bf16 %v1748, %v1680
        %v1762 = vpack.c.bf16 %v1341, %v1273
        %v1763 = vpack.c.bf16 %v1477, %v1409
        %v1764 = vpack.c.bf16 %v1613, %v1545
        %v1765 = vpack.c.bf16 %v1749, %v1681
        %v1766 = vld [vmem:[#allocation5] sm:$0xf]
        %v1767 = vld [vmem:[#allocation5 + $0x4] sm:$0xf]
        %v1768 = vld [vmem:[#allocation5 + $0x8] sm:$0xf]
        %v1769 = vld [vmem:[#allocation5 + $0xc] sm:$0xf]
        %v1774 = vunpack.c.l.b16 %v1766
        %v1775 = vunpack.c.l.b16 %v1767
        %v1776 = vunpack.c.l.b16 %v1768
        %v1777 = vunpack.c.l.b16 %v1769
        %v1778 = vpack.c.b16 %v1775, %v1774
        %v1779 = vpack.c.b16 %v1777, %v1776
        %vm1782 = vcmask 261120
        %v1784 = vsel %vm1782, %v1750, 0
        %v1787 = vsel %vm1782, %v1751, 0
        %v1790 = vsel %vm1782, %v1752, 0
        %v1793 = vsel %vm1782, %v1753, 0
        %v1796 = vsel %vm1782, %v1754, 0
        %v1799 = vsel %vm1782, %v1755, 0
        %v1802 = vsel %vm1782, %v1756, 0
        %v1805 = vsel %vm1782, %v1757, 0
        %v1808 = vsel %vm1782, %v1758, 0
        %v1811 = vsel %vm1782, %v1759, 0
        %v1814 = vsel %vm1782, %v1760, 0
        %v1817 = vsel %vm1782, %v1761, 0
        %v1820 = vsel %vm1782, %v1762, 0
        %v1823 = vsel %vm1782, %v1763, 0
        %v1826 = vsel %vm1782, %v1764, 0
        %v1829 = vsel %vm1782, %v1765, 0
        %1831 = vmatprep.subr.bf16.mxu0 0
        %1832 = vmatpush1.bf16.msra.mxu0 %v1778
        %1833 = vmatprep.subr.bf16.mxu0 0
        %1834 = vmatpush1.bf16.msra.mxu0 %v1779
        %1835 = vmatprep.subr.bf16.mxu0 0
        %1836 = vmatpush1.bf16.msra.mxu0 0
        %1837 = vmatprep.subr.bf16.mxu0 0
        %1838 = vmatpush1.bf16.msra.mxu0 0
        %1839 = vmatprep.subr.bf16.mxu0 0
        %1840 = vmatpush1.bf16.msra.mxu0 0
        %1841 = vmatprep.subr.bf16.mxu0 0
        %1842 = vmatpush1.bf16.msra.mxu0 0
        %1843 = vmatprep.subr.bf16.mxu0 0
        %1844 = vmatpush1.bf16.msra.mxu0 0
        %1845 = vmatprep.subr.bf16.mxu0 0
        %1846 = vmatpush1.bf16.msra.mxu0 0
        %1847 = vmatprep.subr.bf16.mxu0 0
        %1848 = vmatpush1.bf16.msra.mxu0 0
        %1849 = vmatprep.subr.bf16.mxu0 0
        %1850 = vmatpush1.bf16.msra.mxu0 0
        %1851 = vmatprep.subr.bf16.mxu0 0
        %1852 = vmatpush1.bf16.msra.mxu0 0
        %1853 = vmatprep.subr.bf16.mxu0 0
        %1854 = vmatpush1.bf16.msra.mxu0 0
        %1855 = vmatprep.subr.bf16.mxu0 0
        %1856 = vmatpush1.bf16.msra.mxu0 0
        %1857 = vmatprep.subr.bf16.mxu0 0
        %1858 = vmatpush1.bf16.msra.mxu0 0
        %1859 = vmatprep.subr.bf16.mxu0 0
        %1860 = vmatpush1.bf16.msra.mxu0 0
        %1861 = vmatprep.subr.bf16.mxu0 0
        %1862 = vmatpush1.bf16.msra.mxu0 0
        %1863 = vmatprep.mubr.bf16.mxu0 0
        %1864 = vmatmul.mubr.bf16.gmra.mrb[0].mxu0 %v1784
        %v1865 = vpop.f32.mrb[0].mxu0
        %v1866 = vadd.f32 0.0, %v1865
        %v1867 = vpop.f32.mrb[0].mxu0
        %v1868 = vpop.f32.mrb[0].mxu0
        %v1869 = vadd.f32 0.0, %v1868
        %v1870 = vpop.f32.mrb[0].mxu0
        %1871 = vmatprep.mubr.bf16.mxu0 0
        %1872 = vmatmul.mubr.bf16.gmra.mrb[0].mxu0 %v1787
        %v1873 = vpop.f32.mrb[0].mxu0
        %v1874 = vadd.f32 0.0, %v1873
        %v1875 = vpop.f32.mrb[0].mxu0
        %v1876 = vpop.f32.mrb[0].mxu0
        %v1877 = vadd.f32 0.0, %v1876
        %v1878 = vpop.f32.mrb[0].mxu0
        %1879 = vmatprep.mubr.bf16.mxu0 0
        %1880 = vmatmul.mubr.bf16.gmra.mrb[0].mxu0 %v1790
        %v1881 = vpop.f32.mrb[0].mxu0
        %v1882 = vadd.f32 0.0, %v1881
        %v1883 = vpop.f32.mrb[0].mxu0
        %v1884 = vpop.f32.mrb[0].mxu0
        %v1885 = vadd.f32 0.0, %v1884
        %v1886 = vpop.f32.mrb[0].mxu0
        %1887 = vmatprep.mubr.bf16.mxu0 0
        %1888 = vmatmul.mubr.bf16.gmra.mrb[0].mxu0 %v1793
        %v1889 = vpop.f32.mrb[0].mxu0
        %v1890 = vadd.f32 0.0, %v1889
        %v1891 = vpop.f32.mrb[0].mxu0
        %v1892 = vpop.f32.mrb[0].mxu0
        %v1893 = vadd.f32 0.0, %v1892
        %v1894 = vpop.f32.mrb[0].mxu0
        %1895 = vmatprep.mubr.bf16.mxu0 0
        %1896 = vmatmul.mubr.bf16.gmra.mrb[0].mxu0 %v1796
        %v1897 = vpop.f32.mrb[0].mxu0
        %v1898 = vadd.f32 0.0, %v1897
        %v1899 = vpop.f32.mrb[0].mxu0
        %v1900 = vpop.f32.mrb[0].mxu0
        %v1901 = vadd.f32 0.0, %v1900
        %v1902 = vpop.f32.mrb[0].mxu0
        %1903 = vmatprep.mubr.bf16.mxu0 0
        %1904 = vmatmul.mubr.bf16.gmra.mrb[0].mxu0 %v1799
        %v1905 = vpop.f32.mrb[0].mxu0
        %v1906 = vadd.f32 0.0, %v1905
        %v1907 = vpop.f32.mrb[0].mxu0
        %v1908 = vpop.f32.mrb[0].mxu0
        %v1909 = vadd.f32 0.0, %v1908
        %v1910 = vpop.f32.mrb[0].mxu0
        %1911 = vmatprep.mubr.bf16.mxu0 0
        %1912 = vmatmul.mubr.bf16.gmra.mrb[0].mxu0 %v1802
        %v1913 = vpop.f32.mrb[0].mxu0
        %v1914 = vadd.f32 0.0, %v1913
        %v1915 = vpop.f32.mrb[0].mxu0
        %v1916 = vpop.f32.mrb[0].mxu0
        %v1917 = vadd.f32 0.0, %v1916
        %v1918 = vpop.f32.mrb[0].mxu0
        %1919 = vmatprep.mubr.bf16.mxu0 0
        %1920 = vmatmul.mubr.bf16.gmra.mrb[0].mxu0 %v1805
        %v1921 = vpop.f32.mrb[0].mxu0
        %v1922 = vadd.f32 0.0, %v1921
        %v1923 = vpop.f32.mrb[0].mxu0
        %v1924 = vpop.f32.mrb[0].mxu0
        %v1925 = vadd.f32 0.0, %v1924
        %v1926 = vpop.f32.mrb[0].mxu0
        %1927 = vmatprep.mubr.bf16.mxu0 0
        %1928 = vmatmul.mubr.bf16.gmra.mrb[0].mxu0 %v1808
        %v1929 = vpop.f32.mrb[0].mxu0
        %v1930 = vadd.f32 0.0, %v1929
        %v1931 = vpop.f32.mrb[0].mxu0
        %v1932 = vpop.f32.mrb[0].mxu0
        %v1933 = vadd.f32 0.0, %v1932
        %v1934 = vpop.f32.mrb[0].mxu0
        %1935 = vmatprep.mubr.bf16.mxu0 0
        %1936 = vmatmul.mubr.bf16.gmra.mrb[0].mxu0 %v1811
        %v1937 = vpop.f32.mrb[0].mxu0
        %v1938 = vadd.f32 0.0, %v1937
        %v1939 = vpop.f32.mrb[0].mxu0
        %v1940 = vpop.f32.mrb[0].mxu0
        %v1941 = vadd.f32 0.0, %v1940
        %v1942 = vpop.f32.mrb[0].mxu0
        %1943 = vmatprep.mubr.bf16.mxu0 0
        %1944 = vmatmul.mubr.bf16.gmra.mrb[0].mxu0 %v1814
        %v1945 = vpop.f32.mrb[0].mxu0
        %v1946 = vadd.f32 0.0, %v1945
        %v1947 = vpop.f32.mrb[0].mxu0
        %v1948 = vpop.f32.mrb[0].mxu0
        %v1949 = vadd.f32 0.0, %v1948
        %v1950 = vpop.f32.mrb[0].mxu0
        %1951 = vmatprep.mubr.bf16.mxu0 0
        %1952 = vmatmul.mubr.bf16.gmra.mrb[0].mxu0 %v1817
        %v1953 = vpop.f32.mrb[0].mxu0
        %v1954 = vadd.f32 0.0, %v1953
        %v1955 = vpop.f32.mrb[0].mxu0
        %v1956 = vpop.f32.mrb[0].mxu0
        %v1957 = vadd.f32 0.0, %v1956
        %v1958 = vpop.f32.mrb[0].mxu0
        %1959 = vmatprep.mubr.bf16.mxu0 0
        %1960 = vmatmul.mubr.bf16.gmra.mrb[0].mxu0 %v1820
        %v1961 = vpop.f32.mrb[0].mxu0
        %v1962 = vadd.f32 0.0, %v1961
        %v1963 = vpop.f32.mrb[0].mxu0
        %v1964 = vpop.f32.mrb[0].mxu0
        %v1965 = vadd.f32 0.0, %v1964
        %v1966 = vpop.f32.mrb[0].mxu0
        %1967 = vmatprep.mubr.bf16.mxu0 0
        %1968 = vmatmul.mubr.bf16.gmra.mrb[0].mxu0 %v1823
        %v1969 = vpop.f32.mrb[0].mxu0
        %v1970 = vadd.f32 0.0, %v1969
        %v1971 = vpop.f32.mrb[0].mxu0
        %v1972 = vpop.f32.mrb[0].mxu0
        %v1973 = vadd.f32 0.0, %v1972
        %v1974 = vpop.f32.mrb[0].mxu0
        %1975 = vmatprep.mubr.bf16.mxu0 0
        %1976 = vmatmul.mubr.bf16.gmra.mrb[0].mxu0 %v1826
        %v1977 = vpop.f32.mrb[0].mxu0
        %v1978 = vadd.f32 0.0, %v1977
        %v1979 = vpop.f32.mrb[0].mxu0
        %v1980 = vpop.f32.mrb[0].mxu0
        %v1981 = vadd.f32 0.0, %v1980
        %v1982 = vpop.f32.mrb[0].mxu0
        %1983 = vmatprep.mubr.bf16.mxu0 0
        %1984 = vmatmul.mubr.bf16.gmra.mrb[0].mxu0 %v1829
        %v1985 = vpop.f32.mrb[0].mxu0
        %v1986 = vadd.f32 0.0, %v1985
        %v1987 = vpop.f32.mrb[0].mxu0
        %v1988 = vpop.f32.mrb[0].mxu0
        %v1989 = vadd.f32 0.0, %v1988
        %v1990 = vpop.f32.mrb[0].mxu0
        %1991 = vdwg.mxu0
        %v1992 = vpack.c.bf16 %v1869, %v1866
        %v1993 = vpack.c.bf16 %v1877, %v1874
        %v1994 = vpack.c.bf16 %v1885, %v1882
        %v1995 = vpack.c.bf16 %v1893, %v1890
        %v1996 = vpack.c.bf16 %v1901, %v1898
        %v1997 = vpack.c.bf16 %v1909, %v1906
        %v1998 = vpack.c.bf16 %v1917, %v1914
        %v1999 = vpack.c.bf16 %v1925, %v1922
        %v2000 = vpack.c.bf16 %v1933, %v1930
        %v2001 = vpack.c.bf16 %v1941, %v1938
        %v2002 = vpack.c.bf16 %v1949, %v1946
        %v2003 = vpack.c.bf16 %v1957, %v1954
        %v2004 = vpack.c.bf16 %v1965, %v1962
        %v2005 = vpack.c.bf16 %v1973, %v1970
        %v2006 = vpack.c.bf16 %v1981, %v1978
        %v2007 = vpack.c.bf16 %v1989, %v1986
        %v2008 = vld [vmem:[#allocation7] sm:$0xf]
        %v2009 = vld [vmem:[#allocation7 + $0x4] sm:$0xf]
        %v2010 = vld [vmem:[#allocation7 + $0x8] sm:$0xf]
        %v2011 = vld [vmem:[#allocation7 + $0xc] sm:$0xf]
        %v2016 = vunpack.c.l.b16 %v2008
        %v2017 = vunpack.c.l.b16 %v2009
        %v2018 = vunpack.c.l.b16 %v2010
        %v2019 = vunpack.c.l.b16 %v2011
        %v2020 = vpack.c.b16 %v2017, %v2016
        %v2021 = vpack.c.b16 %v2019, %v2018
        %2024 = vmatprep.subr.bf16.mxu0 0
        %2025 = vmatpush1.bf16.msra.mxu0 %v2020
        %2026 = vmatprep.subr.bf16.mxu0 0
        %2027 = vmatpush1.bf16.msra.mxu0 %v2021
        %2028 = vmatprep.subr.bf16.mxu0 0
        %2029 = vmatpush1.bf16.msra.mxu0 0
        %2030 = vmatprep.subr.bf16.mxu0 0
        %2031 = vmatpush1.bf16.msra.mxu0 0
        %2032 = vmatprep.subr.bf16.mxu0 0
        %2033 = vmatpush1.bf16.msra.mxu0 0
        %2034 = vmatprep.subr.bf16.mxu0 0
        %2035 = vmatpush1.bf16.msra.mxu0 0
        %2036 = vmatprep.subr.bf16.mxu0 0
        %2037 = vmatpush1.bf16.msra.mxu0 0
        %2038 = vmatprep.subr.bf16.mxu0 0
        %2039 = vmatpush1.bf16.msra.mxu0 0
        %2040 = vmatprep.subr.bf16.mxu0 0
        %2041 = vmatpush1.bf16.msra.mxu0 0
        %2042 = vmatprep.subr.bf16.mxu0 0
        %2043 = vmatpush1.bf16.msra.mxu0 0
        %2044 = vmatprep.subr.bf16.mxu0 0
        %2045 = vmatpush1.bf16.msra.mxu0 0
        %2046 = vmatprep.subr.bf16.mxu0 0
        %2047 = vmatpush1.bf16.msra.mxu0 0
        %2048 = vmatprep.subr.bf16.mxu0 0
        %2049 = vmatpush1.bf16.msra.mxu0 0
        %2050 = vmatprep.subr.bf16.mxu0 0
        %2051 = vmatpush1.bf16.msra.mxu0 0
        %2052 = vmatprep.subr.bf16.mxu0 0
        %2053 = vmatpush1.bf16.msra.mxu0 0
        %2054 = vmatprep.subr.bf16.mxu0 0
        %2055 = vmatpush1.bf16.msra.mxu0 0
        %2056 = vmatprep.mubr.bf16.mxu0 0
        %2057 = vmatmul.mubr.bf16.gmra.mrb[0].mxu0 %v1784
        %v2058 = vpop.f32.mrb[0].mxu0
        %v2059 = vadd.f32 0.0, %v2058
        %v2060 = vpop.f32.mrb[0].mxu0
        %v2061 = vpop.f32.mrb[0].mxu0
        %v2062 = vadd.f32 0.0, %v2061
        %v2063 = vpop.f32.mrb[0].mxu0
        %2064 = vmatprep.mubr.bf16.mxu0 0
        %2065 = vmatmul.mubr.bf16.gmra.mrb[0].mxu0 %v1787
        %v2066 = vpop.f32.mrb[0].mxu0
        %v2067 = vadd.f32 0.0, %v2066
        %v2068 = vpop.f32.mrb[0].mxu0
        %v2069 = vpop.f32.mrb[0].mxu0
        %v2070 = vadd.f32 0.0, %v2069
        %v2071 = vpop.f32.mrb[0].mxu0
        %2072 = vmatprep.mubr.bf16.mxu0 0
        %2073 = vmatmul.mubr.bf16.gmra.mrb[0].mxu0 %v1790
        %v2074 = vpop.f32.mrb[0].mxu0
        %v2075 = vadd.f32 0.0, %v2074
        %v2076 = vpop.f32.mrb[0].mxu0
        %v2077 = vpop.f32.mrb[0].mxu0
        %v2078 = vadd.f32 0.0, %v2077
        %v2079 = vpop.f32.mrb[0].mxu0
        %2080 = vmatprep.mubr.bf16.mxu0 0
        %2081 = vmatmul.mubr.bf16.gmra.mrb[0].mxu0 %v1793
        %v2082 = vpop.f32.mrb[0].mxu0
        %v2083 = vadd.f32 0.0, %v2082
        %v2084 = vpop.f32.mrb[0].mxu0
        %v2085 = vpop.f32.mrb[0].mxu0
        %v2086 = vadd.f32 0.0, %v2085
        %v2087 = vpop.f32.mrb[0].mxu0
        %2088 = vmatprep.mubr.bf16.mxu0 0
        %2089 = vmatmul.mubr.bf16.gmra.mrb[0].mxu0 %v1796
        %v2090 = vpop.f32.mrb[0].mxu0
        %v2091 = vadd.f32 0.0, %v2090
        %v2092 = vpop.f32.mrb[0].mxu0
        %v2093 = vpop.f32.mrb[0].mxu0
        %v2094 = vadd.f32 0.0, %v2093
        %v2095 = vpop.f32.mrb[0].mxu0
        %2096 = vmatprep.mubr.bf16.mxu0 0
        %2097 = vmatmul.mubr.bf16.gmra.mrb[0].mxu0 %v1799
        %v2098 = vpop.f32.mrb[0].mxu0
        %v2099 = vadd.f32 0.0, %v2098
        %v2100 = vpop.f32.mrb[0].mxu0
        %v2101 = vpop.f32.mrb[0].mxu0
        %v2102 = vadd.f32 0.0, %v2101
        %v2103 = vpop.f32.mrb[0].mxu0
        %2104 = vmatprep.mubr.bf16.mxu0 0
        %2105 = vmatmul.mubr.bf16.gmra.mrb[0].mxu0 %v1802
        %v2106 = vpop.f32.mrb[0].mxu0
        %v2107 = vadd.f32 0.0, %v2106
        %v2108 = vpop.f32.mrb[0].mxu0
        %v2109 = vpop.f32.mrb[0].mxu0
        %v2110 = vadd.f32 0.0, %v2109
        %v2111 = vpop.f32.mrb[0].mxu0
        %2112 = vmatprep.mubr.bf16.mxu0 0
        %2113 = vmatmul.mubr.bf16.gmra.mrb[0].mxu0 %v1805
        %v2114 = vpop.f32.mrb[0].mxu0
        %v2115 = vadd.f32 0.0, %v2114
        %v2116 = vpop.f32.mrb[0].mxu0
        %v2117 = vpop.f32.mrb[0].mxu0
        %v2118 = vadd.f32 0.0, %v2117
        %v2119 = vpop.f32.mrb[0].mxu0
        %2120 = vmatprep.mubr.bf16.mxu0 0
        %2121 = vmatmul.mubr.bf16.gmra.mrb[0].mxu0 %v1808
        %v2122 = vpop.f32.mrb[0].mxu0
        %v2123 = vadd.f32 0.0, %v2122
        %v2124 = vpop.f32.mrb[0].mxu0
        %v2125 = vpop.f32.mrb[0].mxu0
        %v2126 = vadd.f32 0.0, %v2125
        %v2127 = vpop.f32.mrb[0].mxu0
        %2128 = vmatprep.mubr.bf16.mxu0 0
        %2129 = vmatmul.mubr.bf16.gmra.mrb[0].mxu0 %v1811
        %v2130 = vpop.f32.mrb[0].mxu0
        %v2131 = vadd.f32 0.0, %v2130
        %v2132 = vpop.f32.mrb[0].mxu0
        %v2133 = vpop.f32.mrb[0].mxu0
        %v2134 = vadd.f32 0.0, %v2133
        %v2135 = vpop.f32.mrb[0].mxu0
        %2136 = vmatprep.mubr.bf16.mxu0 0
        %2137 = vmatmul.mubr.bf16.gmra.mrb[0].mxu0 %v1814
        %v2138 = vpop.f32.mrb[0].mxu0
        %v2139 = vadd.f32 0.0, %v2138
        %v2140 = vpop.f32.mrb[0].mxu0
        %v2141 = vpop.f32.mrb[0].mxu0
        %v2142 = vadd.f32 0.0, %v2141
        %v2143 = vpop.f32.mrb[0].mxu0
        %2144 = vmatprep.mubr.bf16.mxu0 0
        %2145 = vmatmul.mubr.bf16.gmra.mrb[0].mxu0 %v1817
        %v2146 = vpop.f32.mrb[0].mxu0
        %v2147 = vadd.f32 0.0, %v2146
        %v2148 = vpop.f32.mrb[0].mxu0
        %v2149 = vpop.f32.mrb[0].mxu0
        %v2150 = vadd.f32 0.0, %v2149
        %v2151 = vpop.f32.mrb[0].mxu0
        %2152 = vmatprep.mubr.bf16.mxu0 0
        %2153 = vmatmul.mubr.bf16.gmra.mrb[0].mxu0 %v1820
        %v2154 = vpop.f32.mrb[0].mxu0
        %v2155 = vadd.f32 0.0, %v2154
        %v2156 = vpop.f32.mrb[0].mxu0
        %v2157 = vpop.f32.mrb[0].mxu0
        %v2158 = vadd.f32 0.0, %v2157
        %v2159 = vpop.f32.mrb[0].mxu0
        %2160 = vmatprep.mubr.bf16.mxu0 0
        %2161 = vmatmul.mubr.bf16.gmra.mrb[0].mxu0 %v1823
        %v2162 = vpop.f32.mrb[0].mxu0
        %v2163 = vadd.f32 0.0, %v2162
        %v2164 = vpop.f32.mrb[0].mxu0
        %v2165 = vpop.f32.mrb[0].mxu0
        %v2166 = vadd.f32 0.0, %v2165
        %v2167 = vpop.f32.mrb[0].mxu0
        %2168 = vmatprep.mubr.bf16.mxu0 0
        %2169 = vmatmul.mubr.bf16.gmra.mrb[0].mxu0 %v1826
        %v2170 = vpop.f32.mrb[0].mxu0
        %v2171 = vadd.f32 0.0, %v2170
        %v2172 = vpop.f32.mrb[0].mxu0
        %v2173 = vpop.f32.mrb[0].mxu0
        %v2174 = vadd.f32 0.0, %v2173
        %v2175 = vpop.f32.mrb[0].mxu0
        %2176 = vmatprep.mubr.bf16.mxu0 0
        %2177 = vmatmul.mubr.bf16.gmra.mrb[0].mxu0 %v1829
        %v2178 = vpop.f32.mrb[0].mxu0
        %v2179 = vadd.f32 0.0, %v2178
        %v2180 = vpop.f32.mrb[0].mxu0
        %v2181 = vpop.f32.mrb[0].mxu0
        %v2182 = vadd.f32 0.0, %v2181
        %v2183 = vpop.f32.mrb[0].mxu0
        %2184 = vdwg.mxu0
        %v2185 = vpack.c.bf16 %v2062, %v2059
        %v2186 = vpack.c.bf16 %v2070, %v2067
        %v2187 = vpack.c.bf16 %v2078, %v2075
        %v2188 = vpack.c.bf16 %v2086, %v2083
        %v2189 = vpack.c.bf16 %v2094, %v2091
        %v2190 = vpack.c.bf16 %v2102, %v2099
        %v2191 = vpack.c.bf16 %v2110, %v2107
        %v2192 = vpack.c.bf16 %v2118, %v2115
        %v2193 = vpack.c.bf16 %v2126, %v2123
        %v2194 = vpack.c.bf16 %v2134, %v2131
        %v2195 = vpack.c.bf16 %v2142, %v2139
        %v2196 = vpack.c.bf16 %v2150, %v2147
        %v2197 = vpack.c.bf16 %v2158, %v2155
        %v2198 = vpack.c.bf16 %v2166, %v2163
        %v2199 = vpack.c.bf16 %v2174, %v2171
        %v2200 = vpack.c.bf16 %v2182, %v2179
        %v2201 = vld [vmem:[#allocation8] sm:$0xf]
        %v2202 = vld [vmem:[#allocation8 + $0x4] sm:$0xf]
        %v2203 = vld [vmem:[#allocation8 + $0x8] sm:$0xf]
        %v2204 = vld [vmem:[#allocation8 + $0xc] sm:$0xf]
        %v2209 = vunpack.c.l.b16 %v2201
        %v2210 = vunpack.c.l.b16 %v2202
        %v2211 = vunpack.c.l.b16 %v2203
        %v2212 = vunpack.c.l.b16 %v2204
        %v2213 = vpack.c.b16 %v2210, %v2209
        %v2214 = vpack.c.b16 %v2212, %v2211
        %2217 = vmatprep.subr.bf16.mxu0 0
        %2218 = vmatpush1.bf16.msra.mxu0 %v2213
        %2219 = vmatprep.subr.bf16.mxu0 0
        %2220 = vmatpush1.bf16.msra.mxu0 %v2214
        %2221 = vmatprep.subr.bf16.mxu0 0
        %2222 = vmatpush1.bf16.msra.mxu0 0
        %2223 = vmatprep.subr.bf16.mxu0 0
        %2224 = vmatpush1.bf16.msra.mxu0 0
        %2225 = vmatprep.subr.bf16.mxu0 0
        %2226 = vmatpush1.bf16.msra.mxu0 0
        %2227 = vmatprep.subr.bf16.mxu0 0
        %2228 = vmatpush1.bf16.msra.mxu0 0
        %2229 = vmatprep.subr.bf16.mxu0 0
        %2230 = vmatpush1.bf16.msra.mxu0 0
        %2231 = vmatprep.subr.bf16.mxu0 0
        %2232 = vmatpush1.bf16.msra.mxu0 0
        %2233 = vmatprep.subr.bf16.mxu0 0
        %2234 = vmatpush1.bf16.msra.mxu0 0
        %2235 = vmatprep.subr.bf16.mxu0 0
        %2236 = vmatpush1.bf16.msra.mxu0 0
        %2237 = vmatprep.subr.bf16.mxu0 0
        %2238 = vmatpush1.bf16.msra.mxu0 0
        %2239 = vmatprep.subr.bf16.mxu0 0
        %2240 = vmatpush1.bf16.msra.mxu0 0
        %2241 = vmatprep.subr.bf16.mxu0 0
        %2242 = vmatpush1.bf16.msra.mxu0 0
        %2243 = vmatprep.subr.bf16.mxu0 0
        %2244 = vmatpush1.bf16.msra.mxu0 0
        %2245 = vmatprep.subr.bf16.mxu0 0
        %2246 = vmatpush1.bf16.msra.mxu0 0
        %2247 = vmatprep.subr.bf16.mxu0 0
        %2248 = vmatpush1.bf16.msra.mxu0 0
        %2249 = vmatprep.mubr.bf16.mxu0 0
        %2250 = vmatmul.mubr.bf16.gmra.mrb[0].mxu0 %v1784
        %v2251 = vpop.f32.mrb[0].mxu0
        %v2252 = vadd.f32 0.0, %v2251
        %v2253 = vpop.f32.mrb[0].mxu0
        %v2254 = vpop.f32.mrb[0].mxu0
        %v2255 = vadd.f32 0.0, %v2254
        %v2256 = vpop.f32.mrb[0].mxu0
        %2257 = vmatprep.mubr.bf16.mxu0 0
        %2258 = vmatmul.mubr.bf16.gmra.mrb[0].mxu0 %v1787
        %v2259 = vpop.f32.mrb[0].mxu0
        %v2260 = vadd.f32 0.0, %v2259
        %v2261 = vpop.f32.mrb[0].mxu0
        %v2262 = vpop.f32.mrb[0].mxu0
        %v2263 = vadd.f32 0.0, %v2262
        %v2264 = vpop.f32.mrb[0].mxu0
        %2265 = vmatprep.mubr.bf16.mxu0 0
        %2266 = vmatmul.mubr.bf16.gmra.mrb[0].mxu0 %v1790
        %v2267 = vpop.f32.mrb[0].mxu0
        %v2268 = vadd.f32 0.0, %v2267
        %v2269 = vpop.f32.mrb[0].mxu0
        %v2270 = vpop.f32.mrb[0].mxu0
        %v2271 = vadd.f32 0.0, %v2270
        %v2272 = vpop.f32.mrb[0].mxu0
        %2273 = vmatprep.mubr.bf16.mxu0 0
        %2274 = vmatmul.mubr.bf16.gmra.mrb[0].mxu0 %v1793
        %v2275 = vpop.f32.mrb[0].mxu0
        %v2276 = vadd.f32 0.0, %v2275
        %v2277 = vpop.f32.mrb[0].mxu0
        %v2278 = vpop.f32.mrb[0].mxu0
        %v2279 = vadd.f32 0.0, %v2278
        %v2280 = vpop.f32.mrb[0].mxu0
        %2281 = vmatprep.mubr.bf16.mxu0 0
        %2282 = vmatmul.mubr.bf16.gmra.mrb[0].mxu0 %v1796
        %v2283 = vpop.f32.mrb[0].mxu0
        %v2284 = vadd.f32 0.0, %v2283
        %v2285 = vpop.f32.mrb[0].mxu0
        %v2286 = vpop.f32.mrb[0].mxu0
        %v2287 = vadd.f32 0.0, %v2286
        %v2288 = vpop.f32.mrb[0].mxu0
        %2289 = vmatprep.mubr.bf16.mxu0 0
        %2290 = vmatmul.mubr.bf16.gmra.mrb[0].mxu0 %v1799
        %v2291 = vpop.f32.mrb[0].mxu0
        %v2292 = vadd.f32 0.0, %v2291
        %v2293 = vpop.f32.mrb[0].mxu0
        %v2294 = vpop.f32.mrb[0].mxu0
        %v2295 = vadd.f32 0.0, %v2294
        %v2296 = vpop.f32.mrb[0].mxu0
        %2297 = vmatprep.mubr.bf16.mxu0 0
        %2298 = vmatmul.mubr.bf16.gmra.mrb[0].mxu0 %v1802
        %v2299 = vpop.f32.mrb[0].mxu0
        %v2300 = vadd.f32 0.0, %v2299
        %v2301 = vpop.f32.mrb[0].mxu0
        %v2302 = vpop.f32.mrb[0].mxu0
        %v2303 = vadd.f32 0.0, %v2302
        %v2304 = vpop.f32.mrb[0].mxu0
        %2305 = vmatprep.mubr.bf16.mxu0 0
        %2306 = vmatmul.mubr.bf16.gmra.mrb[0].mxu0 %v1805
        %v2307 = vpop.f32.mrb[0].mxu0
        %v2308 = vadd.f32 0.0, %v2307
        %v2309 = vpop.f32.mrb[0].mxu0
        %v2310 = vpop.f32.mrb[0].mxu0
        %v2311 = vadd.f32 0.0, %v2310
        %v2312 = vpop.f32.mrb[0].mxu0
        %2313 = vmatprep.mubr.bf16.mxu0 0
        %2314 = vmatmul.mubr.bf16.gmra.mrb[0].mxu0 %v1808
        %v2315 = vpop.f32.mrb[0].mxu0
        %v2316 = vadd.f32 0.0, %v2315
        %v2317 = vpop.f32.mrb[0].mxu0
        %v2318 = vpop.f32.mrb[0].mxu0
        %v2319 = vadd.f32 0.0, %v2318
        %v2320 = vpop.f32.mrb[0].mxu0
        %2321 = vmatprep.mubr.bf16.mxu0 0
        %2322 = vmatmul.mubr.bf16.gmra.mrb[0].mxu0 %v1811
        %v2323 = vpop.f32.mrb[0].mxu0
        %v2324 = vadd.f32 0.0, %v2323
        %v2325 = vpop.f32.mrb[0].mxu0
        %v2326 = vpop.f32.mrb[0].mxu0
        %v2327 = vadd.f32 0.0, %v2326
        %v2328 = vpop.f32.mrb[0].mxu0
        %2329 = vmatprep.mubr.bf16.mxu0 0
        %2330 = vmatmul.mubr.bf16.gmra.mrb[0].mxu0 %v1814
        %v2331 = vpop.f32.mrb[0].mxu0
        %v2332 = vadd.f32 0.0, %v2331
        %v2333 = vpop.f32.mrb[0].mxu0
        %v2334 = vpop.f32.mrb[0].mxu0
        %v2335 = vadd.f32 0.0, %v2334
        %v2336 = vpop.f32.mrb[0].mxu0
        %2337 = vmatprep.mubr.bf16.mxu0 0
        %2338 = vmatmul.mubr.bf16.gmra.mrb[0].mxu0 %v1817
        %v2339 = vpop.f32.mrb[0].mxu0
        %v2340 = vadd.f32 0.0, %v2339
        %v2341 = vpop.f32.mrb[0].mxu0
        %v2342 = vpop.f32.mrb[0].mxu0
        %v2343 = vadd.f32 0.0, %v2342
        %v2344 = vpop.f32.mrb[0].mxu0
        %2345 = vmatprep.mubr.bf16.mxu0 0
        %2346 = vmatmul.mubr.bf16.gmra.mrb[0].mxu0 %v1820
        %v2347 = vpop.f32.mrb[0].mxu0
        %v2348 = vadd.f32 0.0, %v2347
        %v2349 = vpop.f32.mrb[0].mxu0
        %v2350 = vpop.f32.mrb[0].mxu0
        %v2351 = vadd.f32 0.0, %v2350
        %v2352 = vpop.f32.mrb[0].mxu0
        %2353 = vmatprep.mubr.bf16.mxu0 0
        %2354 = vmatmul.mubr.bf16.gmra.mrb[0].mxu0 %v1823
        %v2355 = vpop.f32.mrb[0].mxu0
        %v2356 = vadd.f32 0.0, %v2355
        %v2357 = vpop.f32.mrb[0].mxu0
        %v2358 = vpop.f32.mrb[0].mxu0
        %v2359 = vadd.f32 0.0, %v2358
        %v2360 = vpop.f32.mrb[0].mxu0
        %2361 = vmatprep.mubr.bf16.mxu0 0
        %2362 = vmatmul.mubr.bf16.gmra.mrb[0].mxu0 %v1826
        %v2363 = vpop.f32.mrb[0].mxu0
        %v2364 = vadd.f32 0.0, %v2363
        %v2365 = vpop.f32.mrb[0].mxu0
        %v2366 = vpop.f32.mrb[0].mxu0
        %v2367 = vadd.f32 0.0, %v2366
        %v2368 = vpop.f32.mrb[0].mxu0
        %2369 = vmatprep.mubr.bf16.mxu0 0
        %2370 = vmatmul.mubr.bf16.gmra.mrb[0].mxu0 %v1829
        %v2371 = vpop.f32.mrb[0].mxu0
        %v2372 = vadd.f32 0.0, %v2371
        %v2373 = vpop.f32.mrb[0].mxu0
        %v2374 = vpop.f32.mrb[0].mxu0
        %v2375 = vadd.f32 0.0, %v2374
        %v2376 = vpop.f32.mrb[0].mxu0
        %2377 = vdwg.mxu0
        %v2378 = vpack.c.bf16 %v2255, %v2252
        %v2379 = vpack.c.bf16 %v2263, %v2260
        %v2380 = vpack.c.bf16 %v2271, %v2268
        %v2381 = vpack.c.bf16 %v2279, %v2276
        %v2382 = vpack.c.bf16 %v2287, %v2284
        %v2383 = vpack.c.bf16 %v2295, %v2292
        %v2384 = vpack.c.bf16 %v2303, %v2300
        %v2385 = vpack.c.bf16 %v2311, %v2308
        %v2386 = vpack.c.bf16 %v2319, %v2316
        %v2387 = vpack.c.bf16 %v2327, %v2324
        %v2388 = vpack.c.bf16 %v2335, %v2332
        %v2389 = vpack.c.bf16 %v2343, %v2340
        %v2390 = vpack.c.bf16 %v2351, %v2348
        %v2391 = vpack.c.bf16 %v2359, %v2356
        %v2392 = vpack.c.bf16 %v2367, %v2364
        %v2393 = vpack.c.bf16 %v2375, %v2372
        %v2395 = vsel %vm1782, %v1992, 0
        %v2398 = vsel %vm1782, %v1993, 0
        %v2401 = vsel %vm1782, %v1994, 0
        %v2404 = vsel %vm1782, %v1995, 0
        %v2407 = vsel %vm1782, %v2185, 0
        %v2410 = vsel %vm1782, %v2186, 0
        %v2413 = vsel %vm1782, %v2187, 0
        %v2416 = vsel %vm1782, %v2188, 0
        %2418 = vmatprep.subr.bf16.mxu0 0
        %2419 = vmatpush1.bf16.xpose.msra.mxu0 %v2407
        %2420 = vmatprep.subr.bf16.mxu0 0
        %2421 = vmatpush1.bf16.xpose.msra.mxu0 %v2410
        %2422 = vmatprep.subr.bf16.mxu0 0
        %2423 = vmatpush1.bf16.xpose.msra.mxu0 %v2413
        %2424 = vmatprep.subr.bf16.mxu0 0
        %2425 = vmatpush1.bf16.xpose.msra.mxu0 %v2416
        %2426 = vmatprep.subr.bf16.mxu0 0
        %2427 = vmatpush1.bf16.xpose.msra.mxu0 0
        %2428 = vmatprep.subr.bf16.mxu0 0
        %2429 = vmatpush1.bf16.xpose.msra.mxu0 0
        %2430 = vmatprep.subr.bf16.mxu0 0
        %2431 = vmatpush1.bf16.xpose.msra.mxu0 0
        %2432 = vmatprep.subr.bf16.mxu0 0
        %2433 = vmatpush1.bf16.xpose.msra.mxu0 0
        %2434 = vmatprep.subr.bf16.mxu0 0
        %2435 = vmatpush1.bf16.xpose.msra.mxu0 0
        %2436 = vmatprep.subr.bf16.mxu0 0
        %2437 = vmatpush1.bf16.xpose.msra.mxu0 0
        %2438 = vmatprep.subr.bf16.mxu0 0
        %2439 = vmatpush1.bf16.xpose.msra.mxu0 0
        %2440 = vmatprep.subr.bf16.mxu0 0
        %2441 = vmatpush1.bf16.xpose.msra.mxu0 0
        %2442 = vmatprep.subr.bf16.mxu0 0
        %2443 = vmatpush1.bf16.xpose.msra.mxu0 0
        %2444 = vmatprep.subr.bf16.mxu0 0
        %2445 = vmatpush1.bf16.xpose.msra.mxu0 0
        %2446 = vmatprep.subr.bf16.mxu0 0
        %2447 = vmatpush1.bf16.xpose.msra.mxu0 0
        %2448 = vmatprep.subr.bf16.mxu0 0
        %2449 = vmatpush1.bf16.xpose.msra.mxu0 0
        %2450 = vmatprep.mubr.bf16.mxu0 0
        %2451 = vmatmul.mubr.bf16.gmra.mrb[0].mxu0 %v2395
        %v2452 = vpop.f32.mrb[0].mxu0
        %v2453 = vadd.f32 0.0, %v2452
        %v2454 = vpop.f32.mrb[0].mxu0
        %v2455 = vpop.f32.mrb[0].mxu0
        %v2456 = vadd.f32 0.0, %v2455
        %v2457 = vpop.f32.mrb[0].mxu0
        %2458 = vmatprep.mubr.bf16.mxu0 0
        %2459 = vmatmul.mubr.bf16.gmra.mrb[0].mxu0 %v2398
        %v2460 = vpop.f32.mrb[0].mxu0
        %v2461 = vadd.f32 0.0, %v2460
        %v2462 = vpop.f32.mrb[0].mxu0
        %v2463 = vpop.f32.mrb[0].mxu0
        %v2464 = vadd.f32 0.0, %v2463
        %v2465 = vpop.f32.mrb[0].mxu0
        %2466 = vmatprep.mubr.bf16.mxu0 0
        %2467 = vmatmul.mubr.bf16.gmra.mrb[0].mxu0 %v2401
        %v2468 = vpop.f32.mrb[0].mxu0
        %v2469 = vadd.f32 0.0, %v2468
        %v2470 = vpop.f32.mrb[0].mxu0
        %v2471 = vpop.f32.mrb[0].mxu0
        %v2472 = vadd.f32 0.0, %v2471
        %v2473 = vpop.f32.mrb[0].mxu0
        %2474 = vmatprep.mubr.bf16.mxu0 0
        %2475 = vmatmul.mubr.bf16.gmra.mrb[0].mxu0 %v2404
        %v2476 = vpop.f32.mrb[0].mxu0
        %v2477 = vadd.f32 0.0, %v2476
        %v2478 = vpop.f32.mrb[0].mxu0
        %v2479 = vpop.f32.mrb[0].mxu0
        %v2480 = vadd.f32 0.0, %v2479
        %v2481 = vpop.f32.mrb[0].mxu0
        %2482 = vdwg.mxu0
        %v2484 = vsel %vm1782, %v1996, 0
        %v2487 = vsel %vm1782, %v1997, 0
        %v2490 = vsel %vm1782, %v1998, 0
        %v2493 = vsel %vm1782, %v1999, 0
        %v2496 = vsel %vm1782, %v2189, 0
        %v2499 = vsel %vm1782, %v2190, 0
        %v2502 = vsel %vm1782, %v2191, 0
        %v2505 = vsel %vm1782, %v2192, 0
        %2507 = vmatprep.subr.bf16.mxu0 0
        %2508 = vmatpush1.bf16.xpose.msra.mxu0 %v2496
        %2509 = vmatprep.subr.bf16.mxu0 0
        %2510 = vmatpush1.bf16.xpose.msra.mxu0 %v2499
        %2511 = vmatprep.subr.bf16.mxu0 0
        %2512 = vmatpush1.bf16.xpose.msra.mxu0 %v2502
        %2513 = vmatprep.subr.bf16.mxu0 0
        %2514 = vmatpush1.bf16.xpose.msra.mxu0 %v2505
        %2515 = vmatprep.subr.bf16.mxu0 0
        %2516 = vmatpush1.bf16.xpose.msra.mxu0 0
        %2517 = vmatprep.subr.bf16.mxu0 0
        %2518 = vmatpush1.bf16.xpose.msra.mxu0 0
        %2519 = vmatprep.subr.bf16.mxu0 0
        %2520 = vmatpush1.bf16.xpose.msra.mxu0 0
        %2521 = vmatprep.subr.bf16.mxu0 0
        %2522 = vmatpush1.bf16.xpose.msra.mxu0 0
        %2523 = vmatprep.subr.bf16.mxu0 0
        %2524 = vmatpush1.bf16.xpose.msra.mxu0 0
        %2525 = vmatprep.subr.bf16.mxu0 0
        %2526 = vmatpush1.bf16.xpose.msra.mxu0 0
        %2527 = vmatprep.subr.bf16.mxu0 0
        %2528 = vmatpush1.bf16.xpose.msra.mxu0 0
        %2529 = vmatprep.subr.bf16.mxu0 0
        %2530 = vmatpush1.bf16.xpose.msra.mxu0 0
        %2531 = vmatprep.subr.bf16.mxu0 0
        %2532 = vmatpush1.bf16.xpose.msra.mxu0 0
        %2533 = vmatprep.subr.bf16.mxu0 0
        %2534 = vmatpush1.bf16.xpose.msra.mxu0 0
        %2535 = vmatprep.subr.bf16.mxu0 0
        %2536 = vmatpush1.bf16.xpose.msra.mxu0 0
        %2537 = vmatprep.subr.bf16.mxu0 0
        %2538 = vmatpush1.bf16.xpose.msra.mxu0 0
        %2539 = vmatprep.mubr.bf16.mxu0 0
        %2540 = vmatmul.mubr.bf16.gmra.mrb[0].mxu0 %v2484
        %v2541 = vpop.f32.mrb[0].mxu0
        %v2542 = vadd.f32 0.0, %v2541
        %v2543 = vpop.f32.mrb[0].mxu0
        %v2544 = vpop.f32.mrb[0].mxu0
        %v2545 = vadd.f32 0.0, %v2544
        %v2546 = vpop.f32.mrb[0].mxu0
        %2547 = vmatprep.mubr.bf16.mxu0 0
        %2548 = vmatmul.mubr.bf16.gmra.mrb[0].mxu0 %v2487
        %v2549 = vpop.f32.mrb[0].mxu0
        %v2550 = vadd.f32 0.0, %v2549
        %v2551 = vpop.f32.mrb[0].mxu0
        %v2552 = vpop.f32.mrb[0].mxu0
        %v2553 = vadd.f32 0.0, %v2552
        %v2554 = vpop.f32.mrb[0].mxu0
        %2555 = vmatprep.mubr.bf16.mxu0 0
        %2556 = vmatmul.mubr.bf16.gmra.mrb[0].mxu0 %v2490
        %v2557 = vpop.f32.mrb[0].mxu0
        %v2558 = vadd.f32 0.0, %v2557
        %v2559 = vpop.f32.mrb[0].mxu0
        %v2560 = vpop.f32.mrb[0].mxu0
        %v2561 = vadd.f32 0.0, %v2560
        %v2562 = vpop.f32.mrb[0].mxu0
        %2563 = vmatprep.mubr.bf16.mxu0 0
        %2564 = vmatmul.mubr.bf16.gmra.mrb[0].mxu0 %v2493
        %v2565 = vpop.f32.mrb[0].mxu0
        %v2566 = vadd.f32 0.0, %v2565
        %v2567 = vpop.f32.mrb[0].mxu0
        %v2568 = vpop.f32.mrb[0].mxu0
        %v2569 = vadd.f32 0.0, %v2568
        %v2570 = vpop.f32.mrb[0].mxu0
        %2571 = vdwg.mxu0
        %v2573 = vsel %vm1782, %v2000, 0
        %v2576 = vsel %vm1782, %v2001, 0
        %v2579 = vsel %vm1782, %v2002, 0
        %v2582 = vsel %vm1782, %v2003, 0
        %v2585 = vsel %vm1782, %v2193, 0
        %v2588 = vsel %vm1782, %v2194, 0
        %v2591 = vsel %vm1782, %v2195, 0
        %v2594 = vsel %vm1782, %v2196, 0
        %2596 = vmatprep.subr.bf16.mxu0 0
        %2597 = vmatpush1.bf16.xpose.msra.mxu0 %v2585
        %2598 = vmatprep.subr.bf16.mxu0 0
        %2599 = vmatpush1.bf16.xpose.msra.mxu0 %v2588
        %2600 = vmatprep.subr.bf16.mxu0 0
        %2601 = vmatpush1.bf16.xpose.msra.mxu0 %v2591
        %2602 = vmatprep.subr.bf16.mxu0 0
        %2603 = vmatpush1.bf16.xpose.msra.mxu0 %v2594
        %2604 = vmatprep.subr.bf16.mxu0 0
        %2605 = vmatpush1.bf16.xpose.msra.mxu0 0
        %2606 = vmatprep.subr.bf16.mxu0 0
        %2607 = vmatpush1.bf16.xpose.msra.mxu0 0
        %2608 = vmatprep.subr.bf16.mxu0 0
        %2609 = vmatpush1.bf16.xpose.msra.mxu0 0
        %2610 = vmatprep.subr.bf16.mxu0 0
        %2611 = vmatpush1.bf16.xpose.msra.mxu0 0
        %2612 = vmatprep.subr.bf16.mxu0 0
        %2613 = vmatpush1.bf16.xpose.msra.mxu0 0
        %2614 = vmatprep.subr.bf16.mxu0 0
        %2615 = vmatpush1.bf16.xpose.msra.mxu0 0
        %2616 = vmatprep.subr.bf16.mxu0 0
        %2617 = vmatpush1.bf16.xpose.msra.mxu0 0
        %2618 = vmatprep.subr.bf16.mxu0 0
        %2619 = vmatpush1.bf16.xpose.msra.mxu0 0
        %2620 = vmatprep.subr.bf16.mxu0 0
        %2621 = vmatpush1.bf16.xpose.msra.mxu0 0
        %2622 = vmatprep.subr.bf16.mxu0 0
        %2623 = vmatpush1.bf16.xpose.msra.mxu0 0
        %2624 = vmatprep.subr.bf16.mxu0 0
        %2625 = vmatpush1.bf16.xpose.msra.mxu0 0
        %2626 = vmatprep.subr.bf16.mxu0 0
        %2627 = vmatpush1.bf16.xpose.msra.mxu0 0
        %2628 = vmatprep.mubr.bf16.mxu0 0
        %2629 = vmatmul.mubr.bf16.gmra.mrb[0].mxu0 %v2573
        %v2630 = vpop.f32.mrb[0].mxu0
        %v2631 = vadd.f32 0.0, %v2630
        %v2632 = vpop.f32.mrb[0].mxu0
        %v2633 = vpop.f32.mrb[0].mxu0
        %v2634 = vadd.f32 0.0, %v2633
        %v2635 = vpop.f32.mrb[0].mxu0
        %2636 = vmatprep.mubr.bf16.mxu0 0
        %2637 = vmatmul.mubr.bf16.gmra.mrb[0].mxu0 %v2576
        %v2638 = vpop.f32.mrb[0].mxu0
        %v2639 = vadd.f32 0.0, %v2638
        %v2640 = vpop.f32.mrb[0].mxu0
        %v2641 = vpop.f32.mrb[0].mxu0
        %v2642 = vadd.f32 0.0, %v2641
        %v2643 = vpop.f32.mrb[0].mxu0
        %2644 = vmatprep.mubr.bf16.mxu0 0
        %2645 = vmatmul.mubr.bf16.gmra.mrb[0].mxu0 %v2579
        %v2646 = vpop.f32.mrb[0].mxu0
        %v2647 = vadd.f32 0.0, %v2646
        %v2648 = vpop.f32.mrb[0].mxu0
        %v2649 = vpop.f32.mrb[0].mxu0
        %v2650 = vadd.f32 0.0, %v2649
        %v2651 = vpop.f32.mrb[0].mxu0
        %2652 = vmatprep.mubr.bf16.mxu0 0
        %2653 = vmatmul.mubr.bf16.gmra.mrb[0].mxu0 %v2582
        %v2654 = vpop.f32.mrb[0].mxu0
        %v2655 = vadd.f32 0.0, %v2654
        %v2656 = vpop.f32.mrb[0].mxu0
        %v2657 = vpop.f32.mrb[0].mxu0
        %v2658 = vadd.f32 0.0, %v2657
        %v2659 = vpop.f32.mrb[0].mxu0
        %2660 = vdwg.mxu0
        %v2662 = vsel %vm1782, %v2004, 0
        %v2665 = vsel %vm1782, %v2005, 0
        %v2668 = vsel %vm1782, %v2006, 0
        %v2671 = vsel %vm1782, %v2007, 0
        %v2674 = vsel %vm1782, %v2197, 0
        %v2677 = vsel %vm1782, %v2198, 0
        %v2680 = vsel %vm1782, %v2199, 0
        %v2683 = vsel %vm1782, %v2200, 0
        %2685 = vmatprep.subr.bf16.mxu0 0
        %2686 = vmatpush1.bf16.xpose.msra.mxu0 %v2674
        %2687 = vmatprep.subr.bf16.mxu0 0
        %2688 = vmatpush1.bf16.xpose.msra.mxu0 %v2677
        %2689 = vmatprep.subr.bf16.mxu0 0
        %2690 = vmatpush1.bf16.xpose.msra.mxu0 %v2680
        %2691 = vmatprep.subr.bf16.mxu0 0
        %2692 = vmatpush1.bf16.xpose.msra.mxu0 %v2683
        %2693 = vmatprep.subr.bf16.mxu0 0
        %2694 = vmatpush1.bf16.xpose.msra.mxu0 0
        %2695 = vmatprep.subr.bf16.mxu0 0
        %2696 = vmatpush1.bf16.xpose.msra.mxu0 0
        %2697 = vmatprep.subr.bf16.mxu0 0
        %2698 = vmatpush1.bf16.xpose.msra.mxu0 0
        %2699 = vmatprep.subr.bf16.mxu0 0
        %2700 = vmatpush1.bf16.xpose.msra.mxu0 0
        %2701 = vmatprep.subr.bf16.mxu0 0
        %2702 = vmatpush1.bf16.xpose.msra.mxu0 0
        %2703 = vmatprep.subr.bf16.mxu0 0
        %2704 = vmatpush1.bf16.xpose.msra.mxu0 0
        %2705 = vmatprep.subr.bf16.mxu0 0
        %2706 = vmatpush1.bf16.xpose.msra.mxu0 0
        %2707 = vmatprep.subr.bf16.mxu0 0
        %2708 = vmatpush1.bf16.xpose.msra.mxu0 0
        %2709 = vmatprep.subr.bf16.mxu0 0
        %2710 = vmatpush1.bf16.xpose.msra.mxu0 0
        %2711 = vmatprep.subr.bf16.mxu0 0
        %2712 = vmatpush1.bf16.xpose.msra.mxu0 0
        %2713 = vmatprep.subr.bf16.mxu0 0
        %2714 = vmatpush1.bf16.xpose.msra.mxu0 0
        %2715 = vmatprep.subr.bf16.mxu0 0
        %2716 = vmatpush1.bf16.xpose.msra.mxu0 0
        %2717 = vmatprep.mubr.bf16.mxu0 0
        %2718 = vmatmul.mubr.bf16.gmra.mrb[0].mxu0 %v2662
        %v2719 = vpop.f32.mrb[0].mxu0
        %v2720 = vadd.f32 0.0, %v2719
        %v2721 = vpop.f32.mrb[0].mxu0
        %v2722 = vpop.f32.mrb[0].mxu0
        %v2723 = vadd.f32 0.0, %v2722
        %v2724 = vpop.f32.mrb[0].mxu0
        %2725 = vmatprep.mubr.bf16.mxu0 0
        %2726 = vmatmul.mubr.bf16.gmra.mrb[0].mxu0 %v2665
        %v2727 = vpop.f32.mrb[0].mxu0
        %v2728 = vadd.f32 0.0, %v2727
        %v2729 = vpop.f32.mrb[0].mxu0
        %v2730 = vpop.f32.mrb[0].mxu0
        %v2731 = vadd.f32 0.0, %v2730
        %v2732 = vpop.f32.mrb[0].mxu0
        %2733 = vmatprep.mubr.bf16.mxu0 0
        %2734 = vmatmul.mubr.bf16.gmra.mrb[0].mxu0 %v2668
        %v2735 = vpop.f32.mrb[0].mxu0
        %v2736 = vadd.f32 0.0, %v2735
        %v2737 = vpop.f32.mrb[0].mxu0
        %v2738 = vpop.f32.mrb[0].mxu0
        %v2739 = vadd.f32 0.0, %v2738
        %v2740 = vpop.f32.mrb[0].mxu0
        %2741 = vmatprep.mubr.bf16.mxu0 0
        %2742 = vmatmul.mubr.bf16.gmra.mrb[0].mxu0 %v2671
        %v2743 = vpop.f32.mrb[0].mxu0
        %v2744 = vadd.f32 0.0, %v2743
        %v2745 = vpop.f32.mrb[0].mxu0
        %v2746 = vpop.f32.mrb[0].mxu0
        %v2747 = vadd.f32 0.0, %v2746
        %v2748 = vpop.f32.mrb[0].mxu0
        %2749 = vdwg.mxu0
        %vm2750 = vcmask 523264
        %v2751 = vsel %vm2750, %v2453, -inf
        %2752 = vmax.xlane.f32.xlu0 %v2751
        %v2753 = vpop.xlane.xlu0 %2752
        %v2754 = vsel %vm2750, %v2456, -inf
        %2755 = vmax.xlane.f32.xlu0 %v2754
        %v2756 = vpop.xlane.xlu0 %2755
        %v2757 = vsel %vm2750, %v2461, -inf
        %2758 = vmax.xlane.f32.xlu0 %v2757
        %v2759 = vpop.xlane.xlu0 %2758
        %v2760 = vsel %vm2750, %v2464, -inf
        %2761 = vmax.xlane.f32.xlu0 %v2760
        %v2762 = vpop.xlane.xlu0 %2761
        %v2763 = vsel %vm2750, %v2469, -inf
        %2764 = vmax.xlane.f32.xlu0 %v2763
        %v2765 = vpop.xlane.xlu0 %2764
        %v2766 = vsel %vm2750, %v2472, -inf
        %2767 = vmax.xlane.f32.xlu0 %v2766
        %v2768 = vpop.xlane.xlu0 %2767
        %v2769 = vsel %vm2750, %v2477, -inf
        %2770 = vmax.xlane.f32.xlu0 %v2769
        %v2771 = vpop.xlane.xlu0 %2770
        %v2772 = vsel %vm2750, %v2480, -inf
        %2773 = vmax.xlane.f32.xlu0 %v2772
        %v2774 = vpop.xlane.xlu0 %2773
        %v2775 = vsel %vm2750, %v2542, -inf
        %2776 = vmax.xlane.f32.xlu0 %v2775
        %v2777 = vpop.xlane.xlu0 %2776
        %v2778 = vsel %vm2750, %v2545, -inf
        %2779 = vmax.xlane.f32.xlu0 %v2778
        %v2780 = vpop.xlane.xlu0 %2779
        %v2781 = vsel %vm2750, %v2550, -inf
        %2782 = vmax.xlane.f32.xlu0 %v2781
        %v2783 = vpop.xlane.xlu0 %2782
        %v2784 = vsel %vm2750, %v2553, -inf
        %2785 = vmax.xlane.f32.xlu0 %v2784
        %v2786 = vpop.xlane.xlu0 %2785
        %v2787 = vsel %vm2750, %v2558, -inf
        %2788 = vmax.xlane.f32.xlu0 %v2787
        %v2789 = vpop.xlane.xlu0 %2788
        %v2790 = vsel %vm2750, %v2561, -inf
        %2791 = vmax.xlane.f32.xlu0 %v2790
        %v2792 = vpop.xlane.xlu0 %2791
        %v2793 = vsel %vm2750, %v2566, -inf
        %2794 = vmax.xlane.f32.xlu0 %v2793
        %v2795 = vpop.xlane.xlu0 %2794
        %v2796 = vsel %vm2750, %v2569, -inf
        %2797 = vmax.xlane.f32.xlu0 %v2796
        %v2798 = vpop.xlane.xlu0 %2797
        %v2799 = vsel %vm2750, %v2631, -inf
        %2800 = vmax.xlane.f32.xlu0 %v2799
        %v2801 = vpop.xlane.xlu0 %2800
        %v2802 = vsel %vm2750, %v2634, -inf
        %2803 = vmax.xlane.f32.xlu0 %v2802
        %v2804 = vpop.xlane.xlu0 %2803
        %v2805 = vsel %vm2750, %v2639, -inf
        %2806 = vmax.xlane.f32.xlu0 %v2805
        %v2807 = vpop.xlane.xlu0 %2806
        %v2808 = vsel %vm2750, %v2642, -inf
        %2809 = vmax.xlane.f32.xlu0 %v2808
        %v2810 = vpop.xlane.xlu0 %2809
        %v2811 = vsel %vm2750, %v2647, -inf
        %2812 = vmax.xlane.f32.xlu0 %v2811
        %v2813 = vpop.xlane.xlu0 %2812
        %v2814 = vsel %vm2750, %v2650, -inf
        %2815 = vmax.xlane.f32.xlu0 %v2814
        %v2816 = vpop.xlane.xlu0 %2815
        %v2817 = vsel %vm2750, %v2655, -inf
        %2818 = vmax.xlane.f32.xlu0 %v2817
        %v2819 = vpop.xlane.xlu0 %2818
        %v2820 = vsel %vm2750, %v2658, -inf
        %2821 = vmax.xlane.f32.xlu0 %v2820
        %v2822 = vpop.xlane.xlu0 %2821
        %v2823 = vsel %vm2750, %v2720, -inf
        %2824 = vmax.xlane.f32.xlu0 %v2823
        %v2825 = vpop.xlane.xlu0 %2824
        %v2826 = vsel %vm2750, %v2723, -inf
        %2827 = vmax.xlane.f32.xlu0 %v2826
        %v2828 = vpop.xlane.xlu0 %2827
        %v2829 = vsel %vm2750, %v2728, -inf
        %2830 = vmax.xlane.f32.xlu0 %v2829
        %v2831 = vpop.xlane.xlu0 %2830
        %v2832 = vsel %vm2750, %v2731, -inf
        %2833 = vmax.xlane.f32.xlu0 %v2832
        %v2834 = vpop.xlane.xlu0 %2833
        %v2835 = vsel %vm2750, %v2736, -inf
        %2836 = vmax.xlane.f32.xlu0 %v2835
        %v2837 = vpop.xlane.xlu0 %2836
        %v2838 = vsel %vm2750, %v2739, -inf
        %2839 = vmax.xlane.f32.xlu0 %v2838
        %v2840 = vpop.xlane.xlu0 %2839
        %v2841 = vsel %vm2750, %v2744, -inf
        %2842 = vmax.xlane.f32.xlu0 %v2841
        %v2843 = vpop.xlane.xlu0 %2842
        %v2844 = vsel %vm2750, %v2747, -inf
        %2845 = vmax.xlane.f32.xlu0 %v2844
        %v2846 = vpop.xlane.xlu0 %2845
        %v2847 = vsub.f32 %v2453, %v2753
        %v2848 = vsub.f32 %v2456, %v2756
        %v2849 = vsub.f32 %v2461, %v2759
        %v2850 = vsub.f32 %v2464, %v2762
        %v2851 = vsub.f32 %v2469, %v2765
        %v2852 = vsub.f32 %v2472, %v2768
        %v2853 = vsub.f32 %v2477, %v2771
        %v2854 = vsub.f32 %v2480, %v2774
        %v2855 = vsub.f32 %v2542, %v2777
        %v2856 = vsub.f32 %v2545, %v2780
        %v2857 = vsub.f32 %v2550, %v2783
        %v2858 = vsub.f32 %v2553, %v2786
        %v2859 = vsub.f32 %v2558, %v2789
        %v2860 = vsub.f32 %v2561, %v2792
        %v2861 = vsub.f32 %v2566, %v2795
        %v2862 = vsub.f32 %v2569, %v2798
        %v2863 = vsub.f32 %v2631, %v2801
        %v2864 = vsub.f32 %v2634, %v2804
        %v2865 = vsub.f32 %v2639, %v2807
        %v2866 = vsub.f32 %v2642, %v2810
        %v2867 = vsub.f32 %v2647, %v2813
        %v2868 = vsub.f32 %v2650, %v2816
        %v2869 = vsub.f32 %v2655, %v2819
        %v2870 = vsub.f32 %v2658, %v2822
        %v2871 = vsub.f32 %v2720, %v2825
        %v2872 = vsub.f32 %v2723, %v2828
        %v2873 = vsub.f32 %v2728, %v2831
        %v2874 = vsub.f32 %v2731, %v2834
        %v2875 = vsub.f32 %v2736, %v2837
        %v2876 = vsub.f32 %v2739, %v2840
        %v2877 = vsub.f32 %v2744, %v2843
        %v2878 = vsub.f32 %v2747, %v2846
        %v2879 = vmul.f32 %v2847, 1.442695
        %v2880 = vpow.pop %v2879
        %v2881 = vmul.f32 %v2848, 1.442695
        %v2882 = vpow.pop %v2881
        %v2883 = vmul.f32 %v2849, 1.442695
        %v2884 = vpow.pop %v2883
        %v2885 = vmul.f32 %v2850, 1.442695
        %v2886 = vpow.pop %v2885
        %v2887 = vmul.f32 %v2851, 1.442695
        %v2888 = vpow.pop %v2887
        %v2889 = vmul.f32 %v2852, 1.442695
        %v2890 = vpow.pop %v2889
        %v2891 = vmul.f32 %v2853, 1.442695
        %v2892 = vpow.pop %v2891
        %v2893 = vmul.f32 %v2854, 1.442695
        %v2894 = vpow.pop %v2893
        %v2895 = vmul.f32 %v2855, 1.442695
        %v2896 = vpow.pop %v2895
        %v2897 = vmul.f32 %v2856, 1.442695
        %v2898 = vpow.pop %v2897
        %v2899 = vmul.f32 %v2857, 1.442695
        %v2900 = vpow.pop %v2899
        %v2901 = vmul.f32 %v2858, 1.442695
        %v2902 = vpow.pop %v2901
        %v2903 = vmul.f32 %v2859, 1.442695
        %v2904 = vpow.pop %v2903
        %v2905 = vmul.f32 %v2860, 1.442695
        %v2906 = vpow.pop %v2905
        %v2907 = vmul.f32 %v2861, 1.442695
        %v2908 = vpow.pop %v2907
        %v2909 = vmul.f32 %v2862, 1.442695
        %v2910 = vpow.pop %v2909
        %v2911 = vmul.f32 %v2863, 1.442695
        %v2912 = vpow.pop %v2911
        %v2913 = vmul.f32 %v2864, 1.442695
        %v2914 = vpow.pop %v2913
        %v2915 = vmul.f32 %v2865, 1.442695
        %v2916 = vpow.pop %v2915
        %v2917 = vmul.f32 %v2866, 1.442695
        %v2918 = vpow.pop %v2917
        %v2919 = vmul.f32 %v2867, 1.442695
        %v2920 = vpow.pop %v2919
        %v2921 = vmul.f32 %v2868, 1.442695
        %v2922 = vpow.pop %v2921
        %v2923 = vmul.f32 %v2869, 1.442695
        %v2924 = vpow.pop %v2923
        %v2925 = vmul.f32 %v2870, 1.442695
        %v2926 = vpow.pop %v2925
        %v2927 = vmul.f32 %v2871, 1.442695
        %v2928 = vpow.pop %v2927
        %v2929 = vmul.f32 %v2872, 1.442695
        %v2930 = vpow.pop %v2929
        %v2931 = vmul.f32 %v2873, 1.442695
        %v2932 = vpow.pop %v2931
        %v2933 = vmul.f32 %v2874, 1.442695
        %v2934 = vpow.pop %v2933
        %v2935 = vmul.f32 %v2875, 1.442695
        %v2936 = vpow.pop %v2935
        %v2937 = vmul.f32 %v2876, 1.442695
        %v2938 = vpow.pop %v2937
        %v2939 = vmul.f32 %v2877, 1.442695
        %v2940 = vpow.pop %v2939
        %v2941 = vmul.f32 %v2878, 1.442695
        %v2942 = vpow.pop %v2941
        %v2943 = vsel %vm2750, %v2880, 0.0
        %2944 = vadd.xlane.f32.xlu0 %v2943
        %v2945 = vpop.xlane.xlu0 %2944
        %v2946 = vsel %vm2750, %v2882, 0.0
        %2947 = vadd.xlane.f32.xlu0 %v2946
        %v2948 = vpop.xlane.xlu0 %2947
        %v2949 = vsel %vm2750, %v2884, 0.0
        %2950 = vadd.xlane.f32.xlu0 %v2949
        %v2951 = vpop.xlane.xlu0 %2950
        %v2952 = vsel %vm2750, %v2886, 0.0
        %2953 = vadd.xlane.f32.xlu0 %v2952
        %v2954 = vpop.xlane.xlu0 %2953
        %v2955 = vsel %vm2750, %v2888, 0.0
        %2956 = vadd.xlane.f32.xlu0 %v2955
        %v2957 = vpop.xlane.xlu0 %2956
        %v2958 = vsel %vm2750, %v2890, 0.0
        %2959 = vadd.xlane.f32.xlu0 %v2958
        %v2960 = vpop.xlane.xlu0 %2959
        %v2961 = vsel %vm2750, %v2892, 0.0
        %2962 = vadd.xlane.f32.xlu0 %v2961
        %v2963 = vpop.xlane.xlu0 %2962
        %v2964 = vsel %vm2750, %v2894, 0.0
        %2965 = vadd.xlane.f32.xlu0 %v2964
        %v2966 = vpop.xlane.xlu0 %2965
        %v2967 = vsel %vm2750, %v2896, 0.0
        %2968 = vadd.xlane.f32.xlu0 %v2967
        %v2969 = vpop.xlane.xlu0 %2968
        %v2970 = vsel %vm2750, %v2898, 0.0
        %2971 = vadd.xlane.f32.xlu0 %v2970
        %v2972 = vpop.xlane.xlu0 %2971
        %v2973 = vsel %vm2750, %v2900, 0.0
        %2974 = vadd.xlane.f32.xlu0 %v2973
        %v2975 = vpop.xlane.xlu0 %2974
        %v2976 = vsel %vm2750, %v2902, 0.0
        %2977 = vadd.xlane.f32.xlu0 %v2976
        %v2978 = vpop.xlane.xlu0 %2977
        %v2979 = vsel %vm2750, %v2904, 0.0
        %2980 = vadd.xlane.f32.xlu0 %v2979
        %v2981 = vpop.xlane.xlu0 %2980
        %v2982 = vsel %vm2750, %v2906, 0.0
        %2983 = vadd.xlane.f32.xlu0 %v2982
        %v2984 = vpop.xlane.xlu0 %2983
        %v2985 = vsel %vm2750, %v2908, 0.0
        %2986 = vadd.xlane.f32.xlu0 %v2985
        %v2987 = vpop.xlane.xlu0 %2986
        %v2988 = vsel %vm2750, %v2910, 0.0
        %2989 = vadd.xlane.f32.xlu0 %v2988
        %v2990 = vpop.xlane.xlu0 %2989
        %v2991 = vsel %vm2750, %v2912, 0.0
        %2992 = vadd.xlane.f32.xlu0 %v2991
        %v2993 = vpop.xlane.xlu0 %2992
        %v2994 = vsel %vm2750, %v2914, 0.0
        %2995 = vadd.xlane.f32.xlu0 %v2994
        %v2996 = vpop.xlane.xlu0 %2995
        %v2997 = vsel %vm2750, %v2916, 0.0
        %2998 = vadd.xlane.f32.xlu0 %v2997
        %v2999 = vpop.xlane.xlu0 %2998
        %v3000 = vsel %vm2750, %v2918, 0.0
        %3001 = vadd.xlane.f32.xlu0 %v3000
        %v3002 = vpop.xlane.xlu0 %3001
        %v3003 = vsel %vm2750, %v2920, 0.0
        %3004 = vadd.xlane.f32.xlu0 %v3003
        %v3005 = vpop.xlane.xlu0 %3004
        %v3006 = vsel %vm2750, %v2922, 0.0
        %3007 = vadd.xlane.f32.xlu0 %v3006
        %v3008 = vpop.xlane.xlu0 %3007
        %v3009 = vsel %vm2750, %v2924, 0.0
        %3010 = vadd.xlane.f32.xlu0 %v3009
        %v3011 = vpop.xlane.xlu0 %3010
        %v3012 = vsel %vm2750, %v2926, 0.0
        %3013 = vadd.xlane.f32.xlu0 %v3012
        %v3014 = vpop.xlane.xlu0 %3013
        %v3015 = vsel %vm2750, %v2928, 0.0
        %3016 = vadd.xlane.f32.xlu0 %v3015
        %v3017 = vpop.xlane.xlu0 %3016
        %v3018 = vsel %vm2750, %v2930, 0.0
        %3019 = vadd.xlane.f32.xlu0 %v3018
        %v3020 = vpop.xlane.xlu0 %3019
        %v3021 = vsel %vm2750, %v2932, 0.0
        %3022 = vadd.xlane.f32.xlu0 %v3021
        %v3023 = vpop.xlane.xlu0 %3022
        %v3024 = vsel %vm2750, %v2934, 0.0
        %3025 = vadd.xlane.f32.xlu0 %v3024
        %v3026 = vpop.xlane.xlu0 %3025
        %v3027 = vsel %vm2750, %v2936, 0.0
        %3028 = vadd.xlane.f32.xlu0 %v3027
        %v3029 = vpop.xlane.xlu0 %3028
        %v3030 = vsel %vm2750, %v2938, 0.0
        %3031 = vadd.xlane.f32.xlu0 %v3030
        %v3032 = vpop.xlane.xlu0 %3031
        %v3033 = vsel %vm2750, %v2940, 0.0
        %3034 = vadd.xlane.f32.xlu0 %v3033
        %v3035 = vpop.xlane.xlu0 %3034
        %v3036 = vsel %vm2750, %v2942, 0.0
        %3037 = vadd.xlane.f32.xlu0 %v3036
        %v3038 = vpop.xlane.xlu0 %3037
        %v3039 = vrcp.pop %v2945
        %v3040 = vrcp.pop %v2948
        %v3041 = vrcp.pop %v2951
        %v3042 = vrcp.pop %v2954
        %v3043 = vrcp.pop %v2957
        %v3044 = vrcp.pop %v2960
        %v3045 = vrcp.pop %v2963
        %v3046 = vrcp.pop %v2966
        %v3047 = vrcp.pop %v2969
        %v3048 = vrcp.pop %v2972
        %v3049 = vrcp.pop %v2975
        %v3050 = vrcp.pop %v2978
        %v3051 = vrcp.pop %v2981
        %v3052 = vrcp.pop %v2984
        %v3053 = vrcp.pop %v2987
        %v3054 = vrcp.pop %v2990
        %v3055 = vrcp.pop %v2993
        %v3056 = vrcp.pop %v2996
        %v3057 = vrcp.pop %v2999
        %v3058 = vrcp.pop %v3002
        %v3059 = vrcp.pop %v3005
        %v3060 = vrcp.pop %v3008
        %v3061 = vrcp.pop %v3011
        %v3062 = vrcp.pop %v3014
        %v3063 = vrcp.pop %v3017
        %v3064 = vrcp.pop %v3020
        %v3065 = vrcp.pop %v3023
        %v3066 = vrcp.pop %v3026
        %v3067 = vrcp.pop %v3029
        %v3068 = vrcp.pop %v3032
        %v3069 = vrcp.pop %v3035
        %v3070 = vrcp.pop %v3038
        %v3071 = vmul.f32 %v2880, %v3039
        %v3072 = vmul.f32 %v2882, %v3040
        %v3073 = vmul.f32 %v2884, %v3041
        %v3074 = vmul.f32 %v2886, %v3042
        %v3075 = vmul.f32 %v2888, %v3043
        %v3076 = vmul.f32 %v2890, %v3044
        %v3077 = vmul.f32 %v2892, %v3045
        %v3078 = vmul.f32 %v2894, %v3046
        %v3079 = vmul.f32 %v2896, %v3047
        %v3080 = vmul.f32 %v2898, %v3048
        %v3081 = vmul.f32 %v2900, %v3049
        %v3082 = vmul.f32 %v2902, %v3050
        %v3083 = vmul.f32 %v2904, %v3051
        %v3084 = vmul.f32 %v2906, %v3052
        %v3085 = vmul.f32 %v2908, %v3053
        %v3086 = vmul.f32 %v2910, %v3054
        %v3087 = vmul.f32 %v2912, %v3055
        %v3088 = vmul.f32 %v2914, %v3056
        %v3089 = vmul.f32 %v2916, %v3057
        %v3090 = vmul.f32 %v2918, %v3058
        %v3091 = vmul.f32 %v2920, %v3059
        %v3092 = vmul.f32 %v2922, %v3060
        %v3093 = vmul.f32 %v2924, %v3061
        %v3094 = vmul.f32 %v2926, %v3062
        %v3095 = vmul.f32 %v2928, %v3063
        %v3096 = vmul.f32 %v2930, %v3064
        %v3097 = vmul.f32 %v2932, %v3065
        %v3098 = vmul.f32 %v2934, %v3066
        %v3099 = vmul.f32 %v2936, %v3067
        %v3100 = vmul.f32 %v2938, %v3068
        %v3101 = vmul.f32 %v2940, %v3069
        %v3102 = vmul.f32 %v2942, %v3070
        %v3103 = vpack.c.bf16 %v3072, %v3071
        %v3104 = vpack.c.bf16 %v3074, %v3073
        %v3105 = vpack.c.bf16 %v3076, %v3075
        %v3106 = vpack.c.bf16 %v3078, %v3077
        %v3107 = vpack.c.bf16 %v3080, %v3079
        %v3108 = vpack.c.bf16 %v3082, %v3081
        %v3109 = vpack.c.bf16 %v3084, %v3083
        %v3110 = vpack.c.bf16 %v3086, %v3085
        %v3111 = vpack.c.bf16 %v3088, %v3087
        %v3112 = vpack.c.bf16 %v3090, %v3089
        %v3113 = vpack.c.bf16 %v3092, %v3091
        %v3114 = vpack.c.bf16 %v3094, %v3093
        %v3115 = vpack.c.bf16 %v3096, %v3095
        %v3116 = vpack.c.bf16 %v3098, %v3097
        %v3117 = vpack.c.bf16 %v3100, %v3099
        %v3118 = vpack.c.bf16 %v3102, %v3101
        %v3120 = vsel %vm2750, %v3103, 0
        %v3123 = vsel %vm2750, %v3104, 0
        %v3126 = vsel %vm2750, %v3105, 0
        %v3129 = vsel %vm2750, %v3106, 0
        %3131 = vmatprep.subr.bf16.mxu0 0
        %3132 = vmatpush1.bf16.msra.mxu0 %v2378
        %3133 = vmatprep.subr.bf16.mxu0 0
        %3134 = vmatpush1.bf16.msra.mxu0 %v2379
        %3135 = vmatprep.subr.bf16.mxu0 0
        %3136 = vmatpush1.bf16.msra.mxu0 %v2380
        %3137 = vmatprep.subr.bf16.mxu0 0
        %3138 = vmatpush1.bf16.msra.mxu0 %v2381
        %3139 = vmatprep.subr.bf16.mxu0 0
        %3140 = vmatpush1.bf16.msra.mxu0 0
        %3141 = vmatprep.subr.bf16.mxu0 0
        %3142 = vmatpush1.bf16.msra.mxu0 0
        %3143 = vmatprep.subr.bf16.mxu0 0
        %3144 = vmatpush1.bf16.msra.mxu0 0
        %3145 = vmatprep.subr.bf16.mxu0 0
        %3146 = vmatpush1.bf16.msra.mxu0 0
        %3147 = vmatprep.subr.bf16.mxu0 0
        %3148 = vmatpush1.bf16.msra.mxu0 0
        %3149 = vmatprep.subr.bf16.mxu0 0
        %3150 = vmatpush1.bf16.msra.mxu0 0
        %3151 = vmatprep.subr.bf16.mxu0 0
        %3152 = vmatpush1.bf16.msra.mxu0 0
        %3153 = vmatprep.subr.bf16.mxu0 0
        %3154 = vmatpush1.bf16.msra.mxu0 0
        %3155 = vmatprep.subr.bf16.mxu0 0
        %3156 = vmatpush1.bf16.msra.mxu0 0
        %3157 = vmatprep.subr.bf16.mxu0 0
        %3158 = vmatpush1.bf16.msra.mxu0 0
        %3159 = vmatprep.subr.bf16.mxu0 0
        %3160 = vmatpush1.bf16.msra.mxu0 0
        %3161 = vmatprep.subr.bf16.mxu0 0
        %3162 = vmatpush1.bf16.msra.mxu0 0
        %3163 = vmatprep.mubr.bf16.mxu0 0
        %3164 = vmatmul.mubr.bf16.gmra.mrb[0].mxu0 %v3120
        %v3165 = vpop.f32.mrb[0].mxu0
        %v3166 = vadd.f32 0.0, %v3165
        %v3167 = vpop.f32.mrb[0].mxu0
        %v3168 = vpop.f32.mrb[0].mxu0
        %v3169 = vadd.f32 0.0, %v3168
        %v3170 = vpop.f32.mrb[0].mxu0
        %3171 = vmatprep.mubr.bf16.mxu0 0
        %3172 = vmatmul.mubr.bf16.gmra.mrb[0].mxu0 %v3123
        %v3173 = vpop.f32.mrb[0].mxu0
        %v3174 = vadd.f32 0.0, %v3173
        %v3175 = vpop.f32.mrb[0].mxu0
        %v3176 = vpop.f32.mrb[0].mxu0
        %v3177 = vadd.f32 0.0, %v3176
        %v3178 = vpop.f32.mrb[0].mxu0
        %3179 = vmatprep.mubr.bf16.mxu0 0
        %3180 = vmatmul.mubr.bf16.gmra.mrb[0].mxu0 %v3126
        %v3181 = vpop.f32.mrb[0].mxu0
        %v3182 = vadd.f32 0.0, %v3181
        %v3183 = vpop.f32.mrb[0].mxu0
        %v3184 = vpop.f32.mrb[0].mxu0
        %v3185 = vadd.f32 0.0, %v3184
        %v3186 = vpop.f32.mrb[0].mxu0
        %3187 = vmatprep.mubr.bf16.mxu0 0
        %3188 = vmatmul.mubr.bf16.gmra.mrb[0].mxu0 %v3129
        %v3189 = vpop.f32.mrb[0].mxu0
        %v3190 = vadd.f32 0.0, %v3189
        %v3191 = vpop.f32.mrb[0].mxu0
        %v3192 = vpop.f32.mrb[0].mxu0
        %v3193 = vadd.f32 0.0, %v3192
        %v3194 = vpop.f32.mrb[0].mxu0
        %3195 = vdwg.mxu0
        %v3197 = vsel %vm2750, %v3107, 0
        %v3200 = vsel %vm2750, %v3108, 0
        %v3203 = vsel %vm2750, %v3109, 0
        %v3206 = vsel %vm2750, %v3110, 0
        %3208 = vmatprep.subr.bf16.mxu0 0
        %3209 = vmatpush1.bf16.msra.mxu0 %v2382
        %3210 = vmatprep.subr.bf16.mxu0 0
        %3211 = vmatpush1.bf16.msra.mxu0 %v2383
        %3212 = vmatprep.subr.bf16.mxu0 0
        %3213 = vmatpush1.bf16.msra.mxu0 %v2384
        %3214 = vmatprep.subr.bf16.mxu0 0
        %3215 = vmatpush1.bf16.msra.mxu0 %v2385
        %3216 = vmatprep.subr.bf16.mxu0 0
        %3217 = vmatpush1.bf16.msra.mxu0 0
        %3218 = vmatprep.subr.bf16.mxu0 0
        %3219 = vmatpush1.bf16.msra.mxu0 0
        %3220 = vmatprep.subr.bf16.mxu0 0
        %3221 = vmatpush1.bf16.msra.mxu0 0
        %3222 = vmatprep.subr.bf16.mxu0 0
        %3223 = vmatpush1.bf16.msra.mxu0 0
        %3224 = vmatprep.subr.bf16.mxu0 0
        %3225 = vmatpush1.bf16.msra.mxu0 0
        %3226 = vmatprep.subr.bf16.mxu0 0
        %3227 = vmatpush1.bf16.msra.mxu0 0
        %3228 = vmatprep.subr.bf16.mxu0 0
        %3229 = vmatpush1.bf16.msra.mxu0 0
        %3230 = vmatprep.subr.bf16.mxu0 0
        %3231 = vmatpush1.bf16.msra.mxu0 0
        %3232 = vmatprep.subr.bf16.mxu0 0
        %3233 = vmatpush1.bf16.msra.mxu0 0
        %3234 = vmatprep.subr.bf16.mxu0 0
        %3235 = vmatpush1.bf16.msra.mxu0 0
        %3236 = vmatprep.subr.bf16.mxu0 0
        %3237 = vmatpush1.bf16.msra.mxu0 0
        %3238 = vmatprep.subr.bf16.mxu0 0
        %3239 = vmatpush1.bf16.msra.mxu0 0
        %3240 = vmatprep.mubr.bf16.mxu0 0
        %3241 = vmatmul.mubr.bf16.gmra.mrb[0].mxu0 %v3197
        %v3242 = vpop.f32.mrb[0].mxu0
        %v3243 = vadd.f32 0.0, %v3242
        %v3244 = vpop.f32.mrb[0].mxu0
        %v3245 = vpop.f32.mrb[0].mxu0
        %v3246 = vadd.f32 0.0, %v3245
        %v3247 = vpop.f32.mrb[0].mxu0
        %3248 = vmatprep.mubr.bf16.mxu0 0
        %3249 = vmatmul.mubr.bf16.gmra.mrb[0].mxu0 %v3200
        %v3250 = vpop.f32.mrb[0].mxu0
        %v3251 = vadd.f32 0.0, %v3250
        %v3252 = vpop.f32.mrb[0].mxu0
        %v3253 = vpop.f32.mrb[0].mxu0
        %v3254 = vadd.f32 0.0, %v3253
        %v3255 = vpop.f32.mrb[0].mxu0
        %3256 = vmatprep.mubr.bf16.mxu0 0
        %3257 = vmatmul.mubr.bf16.gmra.mrb[0].mxu0 %v3203
        %v3258 = vpop.f32.mrb[0].mxu0
        %v3259 = vadd.f32 0.0, %v3258
        %v3260 = vpop.f32.mrb[0].mxu0
        %v3261 = vpop.f32.mrb[0].mxu0
        %v3262 = vadd.f32 0.0, %v3261
        %v3263 = vpop.f32.mrb[0].mxu0
        %3264 = vmatprep.mubr.bf16.mxu0 0
        %3265 = vmatmul.mubr.bf16.gmra.mrb[0].mxu0 %v3206
        %v3266 = vpop.f32.mrb[0].mxu0
        %v3267 = vadd.f32 0.0, %v3266
        %v3268 = vpop.f32.mrb[0].mxu0
        %v3269 = vpop.f32.mrb[0].mxu0
        %v3270 = vadd.f32 0.0, %v3269
        %v3271 = vpop.f32.mrb[0].mxu0
        %3272 = vdwg.mxu0
        %v3274 = vsel %vm2750, %v3111, 0
        %v3277 = vsel %vm2750, %v3112, 0
        %v3280 = vsel %vm2750, %v3113, 0
        %v3283 = vsel %vm2750, %v3114, 0
        %3285 = vmatprep.subr.bf16.mxu0 0
        %3286 = vmatpush1.bf16.msra.mxu0 %v2386
        %3287 = vmatprep.subr.bf16.mxu0 0
        %3288 = vmatpush1.bf16.msra.mxu0 %v2387
        %3289 = vmatprep.subr.bf16.mxu0 0
        %3290 = vmatpush1.bf16.msra.mxu0 %v2388
        %3291 = vmatprep.subr.bf16.mxu0 0
        %3292 = vmatpush1.bf16.msra.mxu0 %v2389
        %3293 = vmatprep.subr.bf16.mxu0 0
        %3294 = vmatpush1.bf16.msra.mxu0 0
        %3295 = vmatprep.subr.bf16.mxu0 0
        %3296 = vmatpush1.bf16.msra.mxu0 0
        %3297 = vmatprep.subr.bf16.mxu0 0
        %3298 = vmatpush1.bf16.msra.mxu0 0
        %3299 = vmatprep.subr.bf16.mxu0 0
        %3300 = vmatpush1.bf16.msra.mxu0 0
        %3301 = vmatprep.subr.bf16.mxu0 0
        %3302 = vmatpush1.bf16.msra.mxu0 0
        %3303 = vmatprep.subr.bf16.mxu0 0
        %3304 = vmatpush1.bf16.msra.mxu0 0
        %3305 = vmatprep.subr.bf16.mxu0 0
        %3306 = vmatpush1.bf16.msra.mxu0 0
        %3307 = vmatprep.subr.bf16.mxu0 0
        %3308 = vmatpush1.bf16.msra.mxu0 0
        %3309 = vmatprep.subr.bf16.mxu0 0
        %3310 = vmatpush1.bf16.msra.mxu0 0
        %3311 = vmatprep.subr.bf16.mxu0 0
        %3312 = vmatpush1.bf16.msra.mxu0 0
        %3313 = vmatprep.subr.bf16.mxu0 0
        %3314 = vmatpush1.bf16.msra.mxu0 0
        %3315 = vmatprep.subr.bf16.mxu0 0
        %3316 = vmatpush1.bf16.msra.mxu0 0
        %3317 = vmatprep.mubr.bf16.mxu0 0
        %3318 = vmatmul.mubr.bf16.gmra.mrb[0].mxu0 %v3274
        %v3319 = vpop.f32.mrb[0].mxu0
        %v3320 = vadd.f32 0.0, %v3319
        %v3321 = vpop.f32.mrb[0].mxu0
        %v3322 = vpop.f32.mrb[0].mxu0
        %v3323 = vadd.f32 0.0, %v3322
        %v3324 = vpop.f32.mrb[0].mxu0
        %3325 = vmatprep.mubr.bf16.mxu0 0
        %3326 = vmatmul.mubr.bf16.gmra.mrb[0].mxu0 %v3277
        %v3327 = vpop.f32.mrb[0].mxu0
        %v3328 = vadd.f32 0.0, %v3327
        %v3329 = vpop.f32.mrb[0].mxu0
        %v3330 = vpop.f32.mrb[0].mxu0
        %v3331 = vadd.f32 0.0, %v3330
        %v3332 = vpop.f32.mrb[0].mxu0
        %3333 = vmatprep.mubr.bf16.mxu0 0
        %3334 = vmatmul.mubr.bf16.gmra.mrb[0].mxu0 %v3280
        %v3335 = vpop.f32.mrb[0].mxu0
        %v3336 = vadd.f32 0.0, %v3335
        %v3337 = vpop.f32.mrb[0].mxu0
        %v3338 = vpop.f32.mrb[0].mxu0
        %v3339 = vadd.f32 0.0, %v3338
        %v3340 = vpop.f32.mrb[0].mxu0
        %3341 = vmatprep.mubr.bf16.mxu0 0
        %3342 = vmatmul.mubr.bf16.gmra.mrb[0].mxu0 %v3283
        %v3343 = vpop.f32.mrb[0].mxu0
        %v3344 = vadd.f32 0.0, %v3343
        %v3345 = vpop.f32.mrb[0].mxu0
        %v3346 = vpop.f32.mrb[0].mxu0
        %v3347 = vadd.f32 0.0, %v3346
        %v3348 = vpop.f32.mrb[0].mxu0
        %3349 = vdwg.mxu0
        %v3351 = vsel %vm2750, %v3115, 0
        %v3354 = vsel %vm2750, %v3116, 0
        %v3357 = vsel %vm2750, %v3117, 0
        %v3360 = vsel %vm2750, %v3118, 0
        %3362 = vmatprep.subr.bf16.mxu0 0
        %3363 = vmatpush1.bf16.msra.mxu0 %v2390
        %3364 = vmatprep.subr.bf16.mxu0 0
        %3365 = vmatpush1.bf16.msra.mxu0 %v2391
        %3366 = vmatprep.subr.bf16.mxu0 0
        %3367 = vmatpush1.bf16.msra.mxu0 %v2392
        %3368 = vmatprep.subr.bf16.mxu0 0
        %3369 = vmatpush1.bf16.msra.mxu0 %v2393
        %3370 = vmatprep.subr.bf16.mxu0 0
        %3371 = vmatpush1.bf16.msra.mxu0 0
        %3372 = vmatprep.subr.bf16.mxu0 0
        %3373 = vmatpush1.bf16.msra.mxu0 0
        %3374 = vmatprep.subr.bf16.mxu0 0
        %3375 = vmatpush1.bf16.msra.mxu0 0
        %3376 = vmatprep.subr.bf16.mxu0 0
        %3377 = vmatpush1.bf16.msra.mxu0 0
        %3378 = vmatprep.subr.bf16.mxu0 0
        %3379 = vmatpush1.bf16.msra.mxu0 0
        %3380 = vmatprep.subr.bf16.mxu0 0
        %3381 = vmatpush1.bf16.msra.mxu0 0
        %3382 = vmatprep.subr.bf16.mxu0 0
        %3383 = vmatpush1.bf16.msra.mxu0 0
        %3384 = vmatprep.subr.bf16.mxu0 0
        %3385 = vmatpush1.bf16.msra.mxu0 0
        %3386 = vmatprep.subr.bf16.mxu0 0
        %3387 = vmatpush1.bf16.msra.mxu0 0
        %3388 = vmatprep.subr.bf16.mxu0 0
        %3389 = vmatpush1.bf16.msra.mxu0 0
        %3390 = vmatprep.subr.bf16.mxu0 0
        %3391 = vmatpush1.bf16.msra.mxu0 0
        %3392 = vmatprep.subr.bf16.mxu0 0
        %3393 = vmatpush1.bf16.msra.mxu0 0
        %3394 = vmatprep.mubr.bf16.mxu0 0
        %3395 = vmatmul.mubr.bf16.gmra.mrb[0].mxu0 %v3351
        %v3396 = vpop.f32.mrb[0].mxu0
        %v3397 = vadd.f32 0.0, %v3396
        %v3398 = vpop.f32.mrb[0].mxu0
        %v3399 = vpop.f32.mrb[0].mxu0
        %v3400 = vadd.f32 0.0, %v3399
        %v3401 = vpop.f32.mrb[0].mxu0
        %3402 = vmatprep.mubr.bf16.mxu0 0
        %3403 = vmatmul.mubr.bf16.gmra.mrb[0].mxu0 %v3354
        %v3404 = vpop.f32.mrb[0].mxu0
        %v3405 = vadd.f32 0.0, %v3404
        %v3406 = vpop.f32.mrb[0].mxu0
        %v3407 = vpop.f32.mrb[0].mxu0
        %v3408 = vadd.f32 0.0, %v3407
        %v3409 = vpop.f32.mrb[0].mxu0
        %3410 = vmatprep.mubr.bf16.mxu0 0
        %3411 = vmatmul.mubr.bf16.gmra.mrb[0].mxu0 %v3357
        %v3412 = vpop.f32.mrb[0].mxu0
        %v3413 = vadd.f32 0.0, %v3412
        %v3414 = vpop.f32.mrb[0].mxu0
        %v3415 = vpop.f32.mrb[0].mxu0
        %v3416 = vadd.f32 0.0, %v3415
        %v3417 = vpop.f32.mrb[0].mxu0
        %3418 = vmatprep.mubr.bf16.mxu0 0
        %3419 = vmatmul.mubr.bf16.gmra.mrb[0].mxu0 %v3360
        %v3420 = vpop.f32.mrb[0].mxu0
        %v3421 = vadd.f32 0.0, %v3420
        %v3422 = vpop.f32.mrb[0].mxu0
        %v3423 = vpop.f32.mrb[0].mxu0
        %v3424 = vadd.f32 0.0, %v3423
        %v3425 = vpop.f32.mrb[0].mxu0
        %3426 = vdwg.mxu0
        %v3427 = vcombine.low %v3166, %v3320
        %v3428 = vcombine.high %v3166, %v3320
        %v3430 = vunpack.c.l.s4 1983009808
        %v3431 = vunpack.c.0.s8 %v3430
        %v3432 = vlaneseq
        %v3433 = vshrl.u32 %v3432, 7
        %v3434 = vsub.s32 %v3431, %v3433
        %v3435 = vrot.slane %v3427, %v3434
        %v3437 = vunpack.c.l.s4 1983009808
        %v3438 = vunpack.c.0.s8 %v3437
        %v3439 = vlaneseq
        %v3440 = vshrl.u32 %v3439, 7
        %v3441 = vsub.s32 %v3438, %v3440
        %v3442 = vrot.slane %v3428, %v3441
        %v3443 = vcombine.low %v3243, %v3397
        %v3444 = vcombine.high %v3243, %v3397
        %v3446 = vunpack.c.l.s4 1983009808
        %v3447 = vunpack.c.0.s8 %v3446
        %v3448 = vlaneseq
        %v3449 = vshrl.u32 %v3448, 7
        %v3450 = vsub.s32 %v3447, %v3449
        %v3451 = vrot.slane %v3443, %v3450
        %v3453 = vunpack.c.l.s4 1983009808
        %v3454 = vunpack.c.0.s8 %v3453
        %v3455 = vlaneseq
        %v3456 = vshrl.u32 %v3455, 7
        %v3457 = vsub.s32 %v3454, %v3456
        %v3458 = vrot.slane %v3444, %v3457
        %v3459 = vcombine.low %v3435, %v3451
        %v3460 = vcombine.high %v3435, %v3451
        %v3462 = vunpack.c.l.s4 1934713408
        %v3463 = vunpack.c.0.s8 %v3462
        %v3464 = vlaneseq
        %v3465 = vshrl.u32 %v3464, 7
        %v3466 = vsub.s32 %v3463, %v3465
        %v3467 = vrot.slane %v3459, %v3466
        %v3469 = vunpack.c.l.s4 1934713408
        %v3470 = vunpack.c.0.s8 %v3469
        %v3471 = vlaneseq
        %v3472 = vshrl.u32 %v3471, 7
        %v3473 = vsub.s32 %v3470, %v3472
        %v3474 = vrot.slane %v3460, %v3473
        %v3475 = vcombine.low %v3442, %v3458
        %v3476 = vcombine.high %v3442, %v3458
        %v3478 = vunpack.c.l.s4 1934713408
        %v3479 = vunpack.c.0.s8 %v3478
        %v3480 = vlaneseq
        %v3481 = vshrl.u32 %v3480, 7
        %v3482 = vsub.s32 %v3479, %v3481
        %v3483 = vrot.slane %v3475, %v3482
        %v3485 = vunpack.c.l.s4 1934713408
        %v3486 = vunpack.c.0.s8 %v3485
        %v3487 = vlaneseq
        %v3488 = vshrl.u32 %v3487, 7
        %v3489 = vsub.s32 %v3486, %v3488
        %v3490 = vrot.slane %v3476, %v3489
        %v3491 = vcombine.high %v3467, 0.0
        %v3492 = vcombine.high %v3474, 0.0
        %v3493 = vcombine.high %v3483, 0.0
        %v3494 = vcombine.high %v3490, 0.0
        %v3495 = vcombine.low %v3169, %v3323
        %v3496 = vcombine.high %v3169, %v3323
        %v3498 = vunpack.c.l.s4 1983009808
        %v3499 = vunpack.c.0.s8 %v3498
        %v3500 = vlaneseq
        %v3501 = vshrl.u32 %v3500, 7
        %v3502 = vsub.s32 %v3499, %v3501
        %v3503 = vrot.slane %v3495, %v3502
        %v3505 = vunpack.c.l.s4 1983009808
        %v3506 = vunpack.c.0.s8 %v3505
        %v3507 = vlaneseq
        %v3508 = vshrl.u32 %v3507, 7
        %v3509 = vsub.s32 %v3506, %v3508
        %v3510 = vrot.slane %v3496, %v3509
        %v3511 = vcombine.low %v3246, %v3400
        %v3512 = vcombine.high %v3246, %v3400
        %v3514 = vunpack.c.l.s4 1983009808
        %v3515 = vunpack.c.0.s8 %v3514
        %v3516 = vlaneseq
        %v3517 = vshrl.u32 %v3516, 7
        %v3518 = vsub.s32 %v3515, %v3517
        %v3519 = vrot.slane %v3511, %v3518
        %v3521 = vunpack.c.l.s4 1983009808
        %v3522 = vunpack.c.0.s8 %v3521
        %v3523 = vlaneseq
        %v3524 = vshrl.u32 %v3523, 7
        %v3525 = vsub.s32 %v3522, %v3524
        %v3526 = vrot.slane %v3512, %v3525
        %v3527 = vcombine.low %v3503, %v3519
        %v3528 = vcombine.high %v3503, %v3519
        %v3530 = vunpack.c.l.s4 1934713408
        %v3531 = vunpack.c.0.s8 %v3530
        %v3532 = vlaneseq
        %v3533 = vshrl.u32 %v3532, 7
        %v3534 = vsub.s32 %v3531, %v3533
        %v3535 = vrot.slane %v3527, %v3534
        %v3537 = vunpack.c.l.s4 1934713408
        %v3538 = vunpack.c.0.s8 %v3537
        %v3539 = vlaneseq
        %v3540 = vshrl.u32 %v3539, 7
        %v3541 = vsub.s32 %v3538, %v3540
        %v3542 = vrot.slane %v3528, %v3541
        %v3543 = vcombine.low %v3510, %v3526
        %v3544 = vcombine.high %v3510, %v3526
        %v3546 = vunpack.c.l.s4 1934713408
        %v3547 = vunpack.c.0.s8 %v3546
        %v3548 = vlaneseq
        %v3549 = vshrl.u32 %v3548, 7
        %v3550 = vsub.s32 %v3547, %v3549
        %v3551 = vrot.slane %v3543, %v3550
        %v3553 = vunpack.c.l.s4 1934713408
        %v3554 = vunpack.c.0.s8 %v3553
        %v3555 = vlaneseq
        %v3556 = vshrl.u32 %v3555, 7
        %v3557 = vsub.s32 %v3554, %v3556
        %v3558 = vrot.slane %v3544, %v3557
        %v3559 = vcombine.high %v3535, 0.0
        %v3560 = vcombine.high %v3542, 0.0
        %v3561 = vcombine.high %v3551, 0.0
        %v3562 = vcombine.high %v3558, 0.0
        %v3563 = vcombine.low %v3174, %v3328
        %v3564 = vcombine.high %v3174, %v3328
        %v3566 = vunpack.c.l.s4 1983009808
        %v3567 = vunpack.c.0.s8 %v3566
        %v3568 = vlaneseq
        %v3569 = vshrl.u32 %v3568, 7
        %v3570 = vsub.s32 %v3567, %v3569
        %v3571 = vrot.slane %v3563, %v3570
        %v3573 = vunpack.c.l.s4 1983009808
        %v3574 = vunpack.c.0.s8 %v3573
        %v3575 = vlaneseq
        %v3576 = vshrl.u32 %v3575, 7
        %v3577 = vsub.s32 %v3574, %v3576
        %v3578 = vrot.slane %v3564, %v3577
        %v3579 = vcombine.low %v3251, %v3405
        %v3580 = vcombine.high %v3251, %v3405
        %v3582 = vunpack.c.l.s4 1983009808
        %v3583 = vunpack.c.0.s8 %v3582
        %v3584 = vlaneseq
        %v3585 = vshrl.u32 %v3584, 7
        %v3586 = vsub.s32 %v3583, %v3585
        %v3587 = vrot.slane %v3579, %v3586
        %v3589 = vunpack.c.l.s4 1983009808
        %v3590 = vunpack.c.0.s8 %v3589
        %v3591 = vlaneseq
        %v3592 = vshrl.u32 %v3591, 7
        %v3593 = vsub.s32 %v3590, %v3592
        %v3594 = vrot.slane %v3580, %v3593
        %v3595 = vcombine.low %v3571, %v3587
        %v3596 = vcombine.high %v3571, %v3587
        %v3598 = vunpack.c.l.s4 1934713408
        %v3599 = vunpack.c.0.s8 %v3598
        %v3600 = vlaneseq
        %v3601 = vshrl.u32 %v3600, 7
        %v3602 = vsub.s32 %v3599, %v3601
        %v3603 = vrot.slane %v3595, %v3602
        %v3605 = vunpack.c.l.s4 1934713408
        %v3606 = vunpack.c.0.s8 %v3605
        %v3607 = vlaneseq
        %v3608 = vshrl.u32 %v3607, 7
        %v3609 = vsub.s32 %v3606, %v3608
        %v3610 = vrot.slane %v3596, %v3609
        %v3611 = vcombine.low %v3578, %v3594
        %v3612 = vcombine.high %v3578, %v3594
        %v3614 = vunpack.c.l.s4 1934713408
        %v3615 = vunpack.c.0.s8 %v3614
        %v3616 = vlaneseq
        %v3617 = vshrl.u32 %v3616, 7
        %v3618 = vsub.s32 %v3615, %v3617
        %v3619 = vrot.slane %v3611, %v3618
        %v3621 = vunpack.c.l.s4 1934713408
        %v3622 = vunpack.c.0.s8 %v3621
        %v3623 = vlaneseq
        %v3624 = vshrl.u32 %v3623, 7
        %v3625 = vsub.s32 %v3622, %v3624
        %v3626 = vrot.slane %v3612, %v3625
        %v3627 = vcombine.high %v3603, 0.0
        %v3628 = vcombine.high %v3610, 0.0
        %v3629 = vcombine.high %v3619, 0.0
        %v3630 = vcombine.high %v3626, 0.0
        %v3631 = vcombine.low %v3177, %v3331
        %v3632 = vcombine.high %v3177, %v3331
        %v3634 = vunpack.c.l.s4 1983009808
        %v3635 = vunpack.c.0.s8 %v3634
        %v3636 = vlaneseq
        %v3637 = vshrl.u32 %v3636, 7
        %v3638 = vsub.s32 %v3635, %v3637
        %v3639 = vrot.slane %v3631, %v3638
        %v3641 = vunpack.c.l.s4 1983009808
        %v3642 = vunpack.c.0.s8 %v3641
        %v3643 = vlaneseq
        %v3644 = vshrl.u32 %v3643, 7
        %v3645 = vsub.s32 %v3642, %v3644
        %v3646 = vrot.slane %v3632, %v3645
        %v3647 = vcombine.low %v3254, %v3408
        %v3648 = vcombine.high %v3254, %v3408
        %v3650 = vunpack.c.l.s4 1983009808
        %v3651 = vunpack.c.0.s8 %v3650
        %v3652 = vlaneseq
        %v3653 = vshrl.u32 %v3652, 7
        %v3654 = vsub.s32 %v3651, %v3653
        %v3655 = vrot.slane %v3647, %v3654
        %v3657 = vunpack.c.l.s4 1983009808
        %v3658 = vunpack.c.0.s8 %v3657
        %v3659 = vlaneseq
        %v3660 = vshrl.u32 %v3659, 7
        %v3661 = vsub.s32 %v3658, %v3660
        %v3662 = vrot.slane %v3648, %v3661
        %v3663 = vcombine.low %v3639, %v3655
        %v3664 = vcombine.high %v3639, %v3655
        %v3666 = vunpack.c.l.s4 1934713408
        %v3667 = vunpack.c.0.s8 %v3666
        %v3668 = vlaneseq
        %v3669 = vshrl.u32 %v3668, 7
        %v3670 = vsub.s32 %v3667, %v3669
        %v3671 = vrot.slane %v3663, %v3670
        %v3673 = vunpack.c.l.s4 1934713408
        %v3674 = vunpack.c.0.s8 %v3673
        %v3675 = vlaneseq
        %v3676 = vshrl.u32 %v3675, 7
        %v3677 = vsub.s32 %v3674, %v3676
        %v3678 = vrot.slane %v3664, %v3677
        %v3679 = vcombine.low %v3646, %v3662
        %v3680 = vcombine.high %v3646, %v3662
        %v3682 = vunpack.c.l.s4 1934713408
        %v3683 = vunpack.c.0.s8 %v3682
        %v3684 = vlaneseq
        %v3685 = vshrl.u32 %v3684, 7
        %v3686 = vsub.s32 %v3683, %v3685
        %v3687 = vrot.slane %v3679, %v3686
        %v3689 = vunpack.c.l.s4 1934713408
        %v3690 = vunpack.c.0.s8 %v3689
        %v3691 = vlaneseq
        %v3692 = vshrl.u32 %v3691, 7
        %v3693 = vsub.s32 %v3690, %v3692
        %v3694 = vrot.slane %v3680, %v3693
        %v3695 = vcombine.high %v3671, 0.0
        %v3696 = vcombine.high %v3678, 0.0
        %v3697 = vcombine.high %v3687, 0.0
        %v3698 = vcombine.high %v3694, 0.0
        %v3699 = vcombine.low %v3182, %v3336
        %v3700 = vcombine.high %v3182, %v3336
        %v3702 = vunpack.c.l.s4 1983009808
        %v3703 = vunpack.c.0.s8 %v3702
        %v3704 = vlaneseq
        %v3705 = vshrl.u32 %v3704, 7
        %v3706 = vsub.s32 %v3703, %v3705
        %v3707 = vrot.slane %v3699, %v3706
        %v3709 = vunpack.c.l.s4 1983009808
        %v3710 = vunpack.c.0.s8 %v3709
        %v3711 = vlaneseq
        %v3712 = vshrl.u32 %v3711, 7
        %v3713 = vsub.s32 %v3710, %v3712
        %v3714 = vrot.slane %v3700, %v3713
        %v3715 = vcombine.low %v3259, %v3413
        %v3716 = vcombine.high %v3259, %v3413
        %v3718 = vunpack.c.l.s4 1983009808
        %v3719 = vunpack.c.0.s8 %v3718
        %v3720 = vlaneseq
        %v3721 = vshrl.u32 %v3720, 7
        %v3722 = vsub.s32 %v3719, %v3721
        %v3723 = vrot.slane %v3715, %v3722
        %v3725 = vunpack.c.l.s4 1983009808
        %v3726 = vunpack.c.0.s8 %v3725
        %v3727 = vlaneseq
        %v3728 = vshrl.u32 %v3727, 7
        %v3729 = vsub.s32 %v3726, %v3728
        %v3730 = vrot.slane %v3716, %v3729
        %v3731 = vcombine.low %v3707, %v3723
        %v3732 = vcombine.high %v3707, %v3723
        %v3734 = vunpack.c.l.s4 1934713408
        %v3735 = vunpack.c.0.s8 %v3734
        %v3736 = vlaneseq
        %v3737 = vshrl.u32 %v3736, 7
        %v3738 = vsub.s32 %v3735, %v3737
        %v3739 = vrot.slane %v3731, %v3738
        %v3741 = vunpack.c.l.s4 1934713408
        %v3742 = vunpack.c.0.s8 %v3741
        %v3743 = vlaneseq
        %v3744 = vshrl.u32 %v3743, 7
        %v3745 = vsub.s32 %v3742, %v3744
        %v3746 = vrot.slane %v3732, %v3745
        %v3747 = vcombine.low %v3714, %v3730
        %v3748 = vcombine.high %v3714, %v3730
        %v3750 = vunpack.c.l.s4 1934713408
        %v3751 = vunpack.c.0.s8 %v3750
        %v3752 = vlaneseq
        %v3753 = vshrl.u32 %v3752, 7
        %v3754 = vsub.s32 %v3751, %v3753
        %v3755 = vrot.slane %v3747, %v3754
        %v3757 = vunpack.c.l.s4 1934713408
        %v3758 = vunpack.c.0.s8 %v3757
        %v3759 = vlaneseq
        %v3760 = vshrl.u32 %v3759, 7
        %v3761 = vsub.s32 %v3758, %v3760
        %v3762 = vrot.slane %v3748, %v3761
        %v3763 = vcombine.high %v3739, 0.0
        %v3764 = vcombine.high %v3746, 0.0
        %v3765 = vcombine.high %v3755, 0.0
        %v3766 = vcombine.high %v3762, 0.0
        %v3767 = vcombine.low %v3185, %v3339
        %v3768 = vcombine.high %v3185, %v3339
        %v3770 = vunpack.c.l.s4 1983009808
        %v3771 = vunpack.c.0.s8 %v3770
        %v3772 = vlaneseq
        %v3773 = vshrl.u32 %v3772, 7
        %v3774 = vsub.s32 %v3771, %v3773
        %v3775 = vrot.slane %v3767, %v3774
        %v3777 = vunpack.c.l.s4 1983009808
        %v3778 = vunpack.c.0.s8 %v3777
        %v3779 = vlaneseq
        %v3780 = vshrl.u32 %v3779, 7
        %v3781 = vsub.s32 %v3778, %v3780
        %v3782 = vrot.slane %v3768, %v3781
        %v3783 = vcombine.low %v3262, %v3416
        %v3784 = vcombine.high %v3262, %v3416
        %v3786 = vunpack.c.l.s4 1983009808
        %v3787 = vunpack.c.0.s8 %v3786
        %v3788 = vlaneseq
        %v3789 = vshrl.u32 %v3788, 7
        %v3790 = vsub.s32 %v3787, %v3789
        %v3791 = vrot.slane %v3783, %v3790
        %v3793 = vunpack.c.l.s4 1983009808
        %v3794 = vunpack.c.0.s8 %v3793
        %v3795 = vlaneseq
        %v3796 = vshrl.u32 %v3795, 7
        %v3797 = vsub.s32 %v3794, %v3796
        %v3798 = vrot.slane %v3784, %v3797
        %v3799 = vcombine.low %v3775, %v3791
        %v3800 = vcombine.high %v3775, %v3791
        %v3802 = vunpack.c.l.s4 1934713408
        %v3803 = vunpack.c.0.s8 %v3802
        %v3804 = vlaneseq
        %v3805 = vshrl.u32 %v3804, 7
        %v3806 = vsub.s32 %v3803, %v3805
        %v3807 = vrot.slane %v3799, %v3806
        %v3809 = vunpack.c.l.s4 1934713408
        %v3810 = vunpack.c.0.s8 %v3809
        %v3811 = vlaneseq
        %v3812 = vshrl.u32 %v3811, 7
        %v3813 = vsub.s32 %v3810, %v3812
        %v3814 = vrot.slane %v3800, %v3813
        %v3815 = vcombine.low %v3782, %v3798
        %v3816 = vcombine.high %v3782, %v3798
        %v3818 = vunpack.c.l.s4 1934713408
        %v3819 = vunpack.c.0.s8 %v3818
        %v3820 = vlaneseq
        %v3821 = vshrl.u32 %v3820, 7
        %v3822 = vsub.s32 %v3819, %v3821
        %v3823 = vrot.slane %v3815, %v3822
        %v3825 = vunpack.c.l.s4 1934713408
        %v3826 = vunpack.c.0.s8 %v3825
        %v3827 = vlaneseq
        %v3828 = vshrl.u32 %v3827, 7
        %v3829 = vsub.s32 %v3826, %v3828
        %v3830 = vrot.slane %v3816, %v3829
        %v3831 = vcombine.high %v3807, 0.0
        %v3832 = vcombine.high %v3814, 0.0
        %v3833 = vcombine.high %v3823, 0.0
        %v3834 = vcombine.high %v3830, 0.0
        %v3835 = vcombine.low %v3190, %v3344
        %v3836 = vcombine.high %v3190, %v3344
        %v3838 = vunpack.c.l.s4 1983009808
        %v3839 = vunpack.c.0.s8 %v3838
        %v3840 = vlaneseq
        %v3841 = vshrl.u32 %v3840, 7
        %v3842 = vsub.s32 %v3839, %v3841
        %v3843 = vrot.slane %v3835, %v3842
        %v3845 = vunpack.c.l.s4 1983009808
        %v3846 = vunpack.c.0.s8 %v3845
        %v3847 = vlaneseq
        %v3848 = vshrl.u32 %v3847, 7
        %v3849 = vsub.s32 %v3846, %v3848
        %v3850 = vrot.slane %v3836, %v3849
        %v3851 = vcombine.low %v3267, %v3421
        %v3852 = vcombine.high %v3267, %v3421
        %v3854 = vunpack.c.l.s4 1983009808
        %v3855 = vunpack.c.0.s8 %v3854
        %v3856 = vlaneseq
        %v3857 = vshrl.u32 %v3856, 7
        %v3858 = vsub.s32 %v3855, %v3857
        %v3859 = vrot.slane %v3851, %v3858
        %v3861 = vunpack.c.l.s4 1983009808
        %v3862 = vunpack.c.0.s8 %v3861
        %v3863 = vlaneseq
        %v3864 = vshrl.u32 %v3863, 7
        %v3865 = vsub.s32 %v3862, %v3864
        %v3866 = vrot.slane %v3852, %v3865
        %v3867 = vcombine.low %v3843, %v3859
        %v3868 = vcombine.high %v3843, %v3859
        %v3870 = vunpack.c.l.s4 1934713408
        %v3871 = vunpack.c.0.s8 %v3870
        %v3872 = vlaneseq
        %v3873 = vshrl.u32 %v3872, 7
        %v3874 = vsub.s32 %v3871, %v3873
        %v3875 = vrot.slane %v3867, %v3874
        %v3877 = vunpack.c.l.s4 1934713408
        %v3878 = vunpack.c.0.s8 %v3877
        %v3879 = vlaneseq
        %v3880 = vshrl.u32 %v3879, 7
        %v3881 = vsub.s32 %v3878, %v3880
        %v3882 = vrot.slane %v3868, %v3881
        %v3883 = vcombine.low %v3850, %v3866
        %v3884 = vcombine.high %v3850, %v3866
        %v3886 = vunpack.c.l.s4 1934713408
        %v3887 = vunpack.c.0.s8 %v3886
        %v3888 = vlaneseq
        %v3889 = vshrl.u32 %v3888, 7
        %v3890 = vsub.s32 %v3887, %v3889
        %v3891 = vrot.slane %v3883, %v3890
        %v3893 = vunpack.c.l.s4 1934713408
        %v3894 = vunpack.c.0.s8 %v3893
        %v3895 = vlaneseq
        %v3896 = vshrl.u32 %v3895, 7
        %v3897 = vsub.s32 %v3894, %v3896
        %v3898 = vrot.slane %v3884, %v3897
        %v3899 = vcombine.high %v3875, 0.0
        %v3900 = vcombine.high %v3882, 0.0
        %v3901 = vcombine.high %v3891, 0.0
        %v3902 = vcombine.high %v3898, 0.0
        %v3903 = vcombine.low %v3193, %v3347
        %v3904 = vcombine.high %v3193, %v3347
        %v3906 = vunpack.c.l.s4 1983009808
        %v3907 = vunpack.c.0.s8 %v3906
        %v3908 = vlaneseq
        %v3909 = vshrl.u32 %v3908, 7
        %v3910 = vsub.s32 %v3907, %v3909
        %v3911 = vrot.slane %v3903, %v3910
        %v3913 = vunpack.c.l.s4 1983009808
        %v3914 = vunpack.c.0.s8 %v3913
        %v3915 = vlaneseq
        %v3916 = vshrl.u32 %v3915, 7
        %v3917 = vsub.s32 %v3914, %v3916
        %v3918 = vrot.slane %v3904, %v3917
        %v3919 = vcombine.low %v3270, %v3424
        %v3920 = vcombine.high %v3270, %v3424
        %v3922 = vunpack.c.l.s4 1983009808
        %v3923 = vunpack.c.0.s8 %v3922
        %v3924 = vlaneseq
        %v3925 = vshrl.u32 %v3924, 7
        %v3926 = vsub.s32 %v3923, %v3925
        %v3927 = vrot.slane %v3919, %v3926
        %v3929 = vunpack.c.l.s4 1983009808
        %v3930 = vunpack.c.0.s8 %v3929
        %v3931 = vlaneseq
        %v3932 = vshrl.u32 %v3931, 7
        %v3933 = vsub.s32 %v3930, %v3932
        %v3934 = vrot.slane %v3920, %v3933
        %v3935 = vcombine.low %v3911, %v3927
        %v3936 = vcombine.high %v3911, %v3927
        %v3938 = vunpack.c.l.s4 1934713408
        %v3939 = vunpack.c.0.s8 %v3938
        %v3940 = vlaneseq
        %v3941 = vshrl.u32 %v3940, 7
        %v3942 = vsub.s32 %v3939, %v3941
        %v3943 = vrot.slane %v3935, %v3942
        %v3945 = vunpack.c.l.s4 1934713408
        %v3946 = vunpack.c.0.s8 %v3945
        %v3947 = vlaneseq
        %v3948 = vshrl.u32 %v3947, 7
        %v3949 = vsub.s32 %v3946, %v3948
        %v3950 = vrot.slane %v3936, %v3949
        %v3951 = vcombine.low %v3918, %v3934
        %v3952 = vcombine.high %v3918, %v3934
        %v3954 = vunpack.c.l.s4 1934713408
        %v3955 = vunpack.c.0.s8 %v3954
        %v3956 = vlaneseq
        %v3957 = vshrl.u32 %v3956, 7
        %v3958 = vsub.s32 %v3955, %v3957
        %v3959 = vrot.slane %v3951, %v3958
        %v3961 = vunpack.c.l.s4 1934713408
        %v3962 = vunpack.c.0.s8 %v3961
        %v3963 = vlaneseq
        %v3964 = vshrl.u32 %v3963, 7
        %v3965 = vsub.s32 %v3962, %v3964
        %v3966 = vrot.slane %v3952, %v3965
        %v3967 = vcombine.high %v3943, 0.0
        %v3968 = vcombine.high %v3950, 0.0
        %v3969 = vcombine.high %v3959, 0.0
        %v3970 = vcombine.high %v3966, 0.0
        %v3971 = vcombine.low %v3467, %v3474
        %v3973 = vunpack.c.l.s4 1983009808
        %v3974 = vunpack.c.0.s8 %v3973
        %v3975 = vlaneseq
        %v3976 = vshrl.u32 %v3975, 7
        %v3977 = vsub.s32 %v3974, %v3976
        %v3978 = vrot.slane %v3971, %v3977
        %v3979 = vcombine.low %v3491, %v3492
        %v3981 = vunpack.c.l.s4 1983009808
        %v3982 = vunpack.c.0.s8 %v3981
        %v3983 = vlaneseq
        %v3984 = vshrl.u32 %v3983, 7
        %v3985 = vsub.s32 %v3982, %v3984
        %v3986 = vrot.slane %v3979, %v3985
        %v3987 = vcombine.low %v3483, %v3490
        %v3989 = vunpack.c.l.s4 1983009808
        %v3990 = vunpack.c.0.s8 %v3989
        %v3991 = vlaneseq
        %v3992 = vshrl.u32 %v3991, 7
        %v3993 = vsub.s32 %v3990, %v3992
        %v3994 = vrot.slane %v3987, %v3993
        %v3995 = vcombine.low %v3493, %v3494
        %v3997 = vunpack.c.l.s4 1983009808
        %v3998 = vunpack.c.0.s8 %v3997
        %v3999 = vlaneseq
        %v4000 = vshrl.u32 %v3999, 7
        %v4001 = vsub.s32 %v3998, %v4000
        %v4002 = vrot.slane %v3995, %v4001
        %v4003 = vcombine.low %v3978, %v3986
        %v4004 = vcombine.high %v3978, %v3986
        %v4006 = vunpack.c.l.s4 1934713408
        %v4007 = vunpack.c.0.s8 %v4006
        %v4008 = vlaneseq
        %v4009 = vshrl.u32 %v4008, 7
        %v4010 = vsub.s32 %v4007, %v4009
        %v4011 = vrot.slane %v4003, %v4010
        %v4013 = vunpack.c.l.s4 1934713408
        %v4014 = vunpack.c.0.s8 %v4013
        %v4015 = vlaneseq
        %v4016 = vshrl.u32 %v4015, 7
        %v4017 = vsub.s32 %v4014, %v4016
        %v4018 = vrot.slane %v4004, %v4017
        %v4019 = vcombine.low %v3994, %v4002
        %v4020 = vcombine.high %v3994, %v4002
        %v4022 = vunpack.c.l.s4 1934713408
        %v4023 = vunpack.c.0.s8 %v4022
        %v4024 = vlaneseq
        %v4025 = vshrl.u32 %v4024, 7
        %v4026 = vsub.s32 %v4023, %v4025
        %v4027 = vrot.slane %v4019, %v4026
        %v4029 = vunpack.c.l.s4 1934713408
        %v4030 = vunpack.c.0.s8 %v4029
        %v4031 = vlaneseq
        %v4032 = vshrl.u32 %v4031, 7
        %v4033 = vsub.s32 %v4030, %v4032
        %v4034 = vrot.slane %v4020, %v4033
        %v4035 = vcombine.low %v4011, %v4027
        %v4036 = vcombine.high %v4011, %v4027
        %v4037 = vcombine.low %v4018, %v4034
        %v4038 = vcombine.high %v4018, %v4034
        %v4039 = vcombine.low %v3535, %v3542
        %v4041 = vunpack.c.l.s4 1983009808
        %v4042 = vunpack.c.0.s8 %v4041
        %v4043 = vlaneseq
        %v4044 = vshrl.u32 %v4043, 7
        %v4045 = vsub.s32 %v4042, %v4044
        %v4046 = vrot.slane %v4039, %v4045
        %v4047 = vcombine.low %v3559, %v3560
        %v4049 = vunpack.c.l.s4 1983009808
        %v4050 = vunpack.c.0.s8 %v4049
        %v4051 = vlaneseq
        %v4052 = vshrl.u32 %v4051, 7
        %v4053 = vsub.s32 %v4050, %v4052
        %v4054 = vrot.slane %v4047, %v4053
        %v4055 = vcombine.low %v3551, %v3558
        %v4057 = vunpack.c.l.s4 1983009808
        %v4058 = vunpack.c.0.s8 %v4057
        %v4059 = vlaneseq
        %v4060 = vshrl.u32 %v4059, 7
        %v4061 = vsub.s32 %v4058, %v4060
        %v4062 = vrot.slane %v4055, %v4061
        %v4063 = vcombine.low %v3561, %v3562
        %v4065 = vunpack.c.l.s4 1983009808
        %v4066 = vunpack.c.0.s8 %v4065
        %v4067 = vlaneseq
        %v4068 = vshrl.u32 %v4067, 7
        %v4069 = vsub.s32 %v4066, %v4068
        %v4070 = vrot.slane %v4063, %v4069
        %v4071 = vcombine.low %v4046, %v4054
        %v4072 = vcombine.high %v4046, %v4054
        %v4074 = vunpack.c.l.s4 1934713408
        %v4075 = vunpack.c.0.s8 %v4074
        %v4076 = vlaneseq
        %v4077 = vshrl.u32 %v4076, 7
        %v4078 = vsub.s32 %v4075, %v4077
        %v4079 = vrot.slane %v4071, %v4078
        %v4081 = vunpack.c.l.s4 1934713408
        %v4082 = vunpack.c.0.s8 %v4081
        %v4083 = vlaneseq
        %v4084 = vshrl.u32 %v4083, 7
        %v4085 = vsub.s32 %v4082, %v4084
        %v4086 = vrot.slane %v4072, %v4085
        %v4087 = vcombine.low %v4062, %v4070
        %v4088 = vcombine.high %v4062, %v4070
        %v4090 = vunpack.c.l.s4 1934713408
        %v4091 = vunpack.c.0.s8 %v4090
        %v4092 = vlaneseq
        %v4093 = vshrl.u32 %v4092, 7
        %v4094 = vsub.s32 %v4091, %v4093
        %v4095 = vrot.slane %v4087, %v4094
        %v4097 = vunpack.c.l.s4 1934713408
        %v4098 = vunpack.c.0.s8 %v4097
        %v4099 = vlaneseq
        %v4100 = vshrl.u32 %v4099, 7
        %v4101 = vsub.s32 %v4098, %v4100
        %v4102 = vrot.slane %v4088, %v4101
        %v4103 = vcombine.low %v4079, %v4095
        %v4104 = vcombine.high %v4079, %v4095
        %v4105 = vcombine.low %v4086, %v4102
        %v4106 = vcombine.high %v4086, %v4102
        %v4107 = vcombine.low %v3603, %v3610
        %v4109 = vunpack.c.l.s4 1983009808
        %v4110 = vunpack.c.0.s8 %v4109
        %v4111 = vlaneseq
        %v4112 = vshrl.u32 %v4111, 7
        %v4113 = vsub.s32 %v4110, %v4112
        %v4114 = vrot.slane %v4107, %v4113
        %v4115 = vcombine.low %v3627, %v3628
        %v4117 = vunpack.c.l.s4 1983009808
        %v4118 = vunpack.c.0.s8 %v4117
        %v4119 = vlaneseq
        %v4120 = vshrl.u32 %v4119, 7
        %v4121 = vsub.s32 %v4118, %v4120
        %v4122 = vrot.slane %v4115, %v4121
        %v4123 = vcombine.low %v3619, %v3626
        %v4125 = vunpack.c.l.s4 1983009808
        %v4126 = vunpack.c.0.s8 %v4125
        %v4127 = vlaneseq
        %v4128 = vshrl.u32 %v4127, 7
        %v4129 = vsub.s32 %v4126, %v4128
        %v4130 = vrot.slane %v4123, %v4129
        %v4131 = vcombine.low %v3629, %v3630
        %v4133 = vunpack.c.l.s4 1983009808
        %v4134 = vunpack.c.0.s8 %v4133
        %v4135 = vlaneseq
        %v4136 = vshrl.u32 %v4135, 7
        %v4137 = vsub.s32 %v4134, %v4136
        %v4138 = vrot.slane %v4131, %v4137
        %v4139 = vcombine.low %v4114, %v4122
        %v4140 = vcombine.high %v4114, %v4122
        %v4142 = vunpack.c.l.s4 1934713408
        %v4143 = vunpack.c.0.s8 %v4142
        %v4144 = vlaneseq
        %v4145 = vshrl.u32 %v4144, 7
        %v4146 = vsub.s32 %v4143, %v4145
        %v4147 = vrot.slane %v4139, %v4146
        %v4149 = vunpack.c.l.s4 1934713408
        %v4150 = vunpack.c.0.s8 %v4149
        %v4151 = vlaneseq
        %v4152 = vshrl.u32 %v4151, 7
        %v4153 = vsub.s32 %v4150, %v4152
        %v4154 = vrot.slane %v4140, %v4153
        %v4155 = vcombine.low %v4130, %v4138
        %v4156 = vcombine.high %v4130, %v4138
        %v4158 = vunpack.c.l.s4 1934713408
        %v4159 = vunpack.c.0.s8 %v4158
        %v4160 = vlaneseq
        %v4161 = vshrl.u32 %v4160, 7
        %v4162 = vsub.s32 %v4159, %v4161
        %v4163 = vrot.slane %v4155, %v4162
        %v4165 = vunpack.c.l.s4 1934713408
        %v4166 = vunpack.c.0.s8 %v4165
        %v4167 = vlaneseq
        %v4168 = vshrl.u32 %v4167, 7
        %v4169 = vsub.s32 %v4166, %v4168
        %v4170 = vrot.slane %v4156, %v4169
        %v4171 = vcombine.low %v4147, %v4163
        %v4172 = vcombine.high %v4147, %v4163
        %v4173 = vcombine.low %v4154, %v4170
        %v4174 = vcombine.high %v4154, %v4170
        %v4175 = vcombine.low %v3671, %v3678
        %v4177 = vunpack.c.l.s4 1983009808
        %v4178 = vunpack.c.0.s8 %v4177
        %v4179 = vlaneseq
        %v4180 = vshrl.u32 %v4179, 7
        %v4181 = vsub.s32 %v4178, %v4180
        %v4182 = vrot.slane %v4175, %v4181
        %v4183 = vcombine.low %v3695, %v3696
        %v4185 = vunpack.c.l.s4 1983009808
        %v4186 = vunpack.c.0.s8 %v4185
        %v4187 = vlaneseq
        %v4188 = vshrl.u32 %v4187, 7
        %v4189 = vsub.s32 %v4186, %v4188
        %v4190 = vrot.slane %v4183, %v4189
        %v4191 = vcombine.low %v3687, %v3694
        %v4193 = vunpack.c.l.s4 1983009808
        %v4194 = vunpack.c.0.s8 %v4193
        %v4195 = vlaneseq
        %v4196 = vshrl.u32 %v4195, 7
        %v4197 = vsub.s32 %v4194, %v4196
        %v4198 = vrot.slane %v4191, %v4197
        %v4199 = vcombine.low %v3697, %v3698
        %v4201 = vunpack.c.l.s4 1983009808
        %v4202 = vunpack.c.0.s8 %v4201
        %v4203 = vlaneseq
        %v4204 = vshrl.u32 %v4203, 7
        %v4205 = vsub.s32 %v4202, %v4204
        %v4206 = vrot.slane %v4199, %v4205
        %v4207 = vcombine.low %v4182, %v4190
        %v4208 = vcombine.high %v4182, %v4190
        %v4210 = vunpack.c.l.s4 1934713408
        %v4211 = vunpack.c.0.s8 %v4210
        %v4212 = vlaneseq
        %v4213 = vshrl.u32 %v4212, 7
        %v4214 = vsub.s32 %v4211, %v4213
        %v4215 = vrot.slane %v4207, %v4214
        %v4217 = vunpack.c.l.s4 1934713408
        %v4218 = vunpack.c.0.s8 %v4217
        %v4219 = vlaneseq
        %v4220 = vshrl.u32 %v4219, 7
        %v4221 = vsub.s32 %v4218, %v4220
        %v4222 = vrot.slane %v4208, %v4221
        %v4223 = vcombine.low %v4198, %v4206
        %v4224 = vcombine.high %v4198, %v4206
        %v4226 = vunpack.c.l.s4 1934713408
        %v4227 = vunpack.c.0.s8 %v4226
        %v4228 = vlaneseq
        %v4229 = vshrl.u32 %v4228, 7
        %v4230 = vsub.s32 %v4227, %v4229
        %v4231 = vrot.slane %v4223, %v4230
        %v4233 = vunpack.c.l.s4 1934713408
        %v4234 = vunpack.c.0.s8 %v4233
        %v4235 = vlaneseq
        %v4236 = vshrl.u32 %v4235, 7
        %v4237 = vsub.s32 %v4234, %v4236
        %v4238 = vrot.slane %v4224, %v4237
        %v4239 = vcombine.low %v4215, %v4231
        %v4240 = vcombine.high %v4215, %v4231
        %v4241 = vcombine.low %v4222, %v4238
        %v4242 = vcombine.high %v4222, %v4238
        %v4243 = vcombine.low %v3739, %v3746
        %v4245 = vunpack.c.l.s4 1983009808
        %v4246 = vunpack.c.0.s8 %v4245
        %v4247 = vlaneseq
        %v4248 = vshrl.u32 %v4247, 7
        %v4249 = vsub.s32 %v4246, %v4248
        %v4250 = vrot.slane %v4243, %v4249
        %v4251 = vcombine.low %v3763, %v3764
        %v4253 = vunpack.c.l.s4 1983009808
        %v4254 = vunpack.c.0.s8 %v4253
        %v4255 = vlaneseq
        %v4256 = vshrl.u32 %v4255, 7
        %v4257 = vsub.s32 %v4254, %v4256
        %v4258 = vrot.slane %v4251, %v4257
        %v4259 = vcombine.low %v3755, %v3762
        %v4261 = vunpack.c.l.s4 1983009808
        %v4262 = vunpack.c.0.s8 %v4261
        %v4263 = vlaneseq
        %v4264 = vshrl.u32 %v4263, 7
        %v4265 = vsub.s32 %v4262, %v4264
        %v4266 = vrot.slane %v4259, %v4265
        %v4267 = vcombine.low %v3765, %v3766
        %v4269 = vunpack.c.l.s4 1983009808
        %v4270 = vunpack.c.0.s8 %v4269
        %v4271 = vlaneseq
        %v4272 = vshrl.u32 %v4271, 7
        %v4273 = vsub.s32 %v4270, %v4272
        %v4274 = vrot.slane %v4267, %v4273
        %v4275 = vcombine.low %v4250, %v4258
        %v4276 = vcombine.high %v4250, %v4258
        %v4278 = vunpack.c.l.s4 1934713408
        %v4279 = vunpack.c.0.s8 %v4278
        %v4280 = vlaneseq
        %v4281 = vshrl.u32 %v4280, 7
        %v4282 = vsub.s32 %v4279, %v4281
        %v4283 = vrot.slane %v4275, %v4282
        %v4285 = vunpack.c.l.s4 1934713408
        %v4286 = vunpack.c.0.s8 %v4285
        %v4287 = vlaneseq
        %v4288 = vshrl.u32 %v4287, 7
        %v4289 = vsub.s32 %v4286, %v4288
        %v4290 = vrot.slane %v4276, %v4289
        %v4291 = vcombine.low %v4266, %v4274
        %v4292 = vcombine.high %v4266, %v4274
        %v4294 = vunpack.c.l.s4 1934713408
        %v4295 = vunpack.c.0.s8 %v4294
        %v4296 = vlaneseq
        %v4297 = vshrl.u32 %v4296, 7
        %v4298 = vsub.s32 %v4295, %v4297
        %v4299 = vrot.slane %v4291, %v4298
        %v4301 = vunpack.c.l.s4 1934713408
        %v4302 = vunpack.c.0.s8 %v4301
        %v4303 = vlaneseq
        %v4304 = vshrl.u32 %v4303, 7
        %v4305 = vsub.s32 %v4302, %v4304
        %v4306 = vrot.slane %v4292, %v4305
        %v4307 = vcombine.low %v4283, %v4299
        %v4308 = vcombine.high %v4283, %v4299
        %v4309 = vcombine.low %v4290, %v4306
        %v4310 = vcombine.high %v4290, %v4306
        %v4311 = vcombine.low %v3807, %v3814
        %v4313 = vunpack.c.l.s4 1983009808
        %v4314 = vunpack.c.0.s8 %v4313
        %v4315 = vlaneseq
        %v4316 = vshrl.u32 %v4315, 7
        %v4317 = vsub.s32 %v4314, %v4316
        %v4318 = vrot.slane %v4311, %v4317
        %v4319 = vcombine.low %v3831, %v3832
        %v4321 = vunpack.c.l.s4 1983009808
        %v4322 = vunpack.c.0.s8 %v4321
        %v4323 = vlaneseq
        %v4324 = vshrl.u32 %v4323, 7
        %v4325 = vsub.s32 %v4322, %v4324
        %v4326 = vrot.slane %v4319, %v4325
        %v4327 = vcombine.low %v3823, %v3830
        %v4329 = vunpack.c.l.s4 1983009808
        %v4330 = vunpack.c.0.s8 %v4329
        %v4331 = vlaneseq
        %v4332 = vshrl.u32 %v4331, 7
        %v4333 = vsub.s32 %v4330, %v4332
        %v4334 = vrot.slane %v4327, %v4333
        %v4335 = vcombine.low %v3833, %v3834
        %v4337 = vunpack.c.l.s4 1983009808
        %v4338 = vunpack.c.0.s8 %v4337
        %v4339 = vlaneseq
        %v4340 = vshrl.u32 %v4339, 7
        %v4341 = vsub.s32 %v4338, %v4340
        %v4342 = vrot.slane %v4335, %v4341
        %v4343 = vcombine.low %v4318, %v4326
        %v4344 = vcombine.high %v4318, %v4326
        %v4346 = vunpack.c.l.s4 1934713408
        %v4347 = vunpack.c.0.s8 %v4346
        %v4348 = vlaneseq
        %v4349 = vshrl.u32 %v4348, 7
        %v4350 = vsub.s32 %v4347, %v4349
        %v4351 = vrot.slane %v4343, %v4350
        %v4353 = vunpack.c.l.s4 1934713408
        %v4354 = vunpack.c.0.s8 %v4353
        %v4355 = vlaneseq
        %v4356 = vshrl.u32 %v4355, 7
        %v4357 = vsub.s32 %v4354, %v4356
        %v4358 = vrot.slane %v4344, %v4357
        %v4359 = vcombine.low %v4334, %v4342
        %v4360 = vcombine.high %v4334, %v4342
        %v4362 = vunpack.c.l.s4 1934713408
        %v4363 = vunpack.c.0.s8 %v4362
        %v4364 = vlaneseq
        %v4365 = vshrl.u32 %v4364, 7
        %v4366 = vsub.s32 %v4363, %v4365
        %v4367 = vrot.slane %v4359, %v4366
        %v4369 = vunpack.c.l.s4 1934713408
        %v4370 = vunpack.c.0.s8 %v4369
        %v4371 = vlaneseq
        %v4372 = vshrl.u32 %v4371, 7
        %v4373 = vsub.s32 %v4370, %v4372
        %v4374 = vrot.slane %v4360, %v4373
        %v4375 = vcombine.low %v4351, %v4367
        %v4376 = vcombine.high %v4351, %v4367
        %v4377 = vcombine.low %v4358, %v4374
        %v4378 = vcombine.high %v4358, %v4374
        %v4379 = vcombine.low %v3875, %v3882
        %v4381 = vunpack.c.l.s4 1983009808
        %v4382 = vunpack.c.0.s8 %v4381
        %v4383 = vlaneseq
        %v4384 = vshrl.u32 %v4383, 7
        %v4385 = vsub.s32 %v4382, %v4384
        %v4386 = vrot.slane %v4379, %v4385
        %v4387 = vcombine.low %v3899, %v3900
        %v4389 = vunpack.c.l.s4 1983009808
        %v4390 = vunpack.c.0.s8 %v4389
        %v4391 = vlaneseq
        %v4392 = vshrl.u32 %v4391, 7
        %v4393 = vsub.s32 %v4390, %v4392
        %v4394 = vrot.slane %v4387, %v4393
        %v4395 = vcombine.low %v3891, %v3898
        %v4397 = vunpack.c.l.s4 1983009808
        %v4398 = vunpack.c.0.s8 %v4397
        %v4399 = vlaneseq
        %v4400 = vshrl.u32 %v4399, 7
        %v4401 = vsub.s32 %v4398, %v4400
        %v4402 = vrot.slane %v4395, %v4401
        %v4403 = vcombine.low %v3901, %v3902
        %v4405 = vunpack.c.l.s4 1983009808
        %v4406 = vunpack.c.0.s8 %v4405
        %v4407 = vlaneseq
        %v4408 = vshrl.u32 %v4407, 7
        %v4409 = vsub.s32 %v4406, %v4408
        %v4410 = vrot.slane %v4403, %v4409
        %v4411 = vcombine.low %v4386, %v4394
        %v4412 = vcombine.high %v4386, %v4394
        %v4414 = vunpack.c.l.s4 1934713408
        %v4415 = vunpack.c.0.s8 %v4414
        %v4416 = vlaneseq
        %v4417 = vshrl.u32 %v4416, 7
        %v4418 = vsub.s32 %v4415, %v4417
        %v4419 = vrot.slane %v4411, %v4418
        %v4421 = vunpack.c.l.s4 1934713408
        %v4422 = vunpack.c.0.s8 %v4421
        %v4423 = vlaneseq
        %v4424 = vshrl.u32 %v4423, 7
        %v4425 = vsub.s32 %v4422, %v4424
        %v4426 = vrot.slane %v4412, %v4425
        %v4427 = vcombine.low %v4402, %v4410
        %v4428 = vcombine.high %v4402, %v4410
        %v4430 = vunpack.c.l.s4 1934713408
        %v4431 = vunpack.c.0.s8 %v4430
        %v4432 = vlaneseq
        %v4433 = vshrl.u32 %v4432, 7
        %v4434 = vsub.s32 %v4431, %v4433
        %v4435 = vrot.slane %v4427, %v4434
        %v4437 = vunpack.c.l.s4 1934713408
        %v4438 = vunpack.c.0.s8 %v4437
        %v4439 = vlaneseq
        %v4440 = vshrl.u32 %v4439, 7
        %v4441 = vsub.s32 %v4438, %v4440
        %v4442 = vrot.slane %v4428, %v4441
        %v4443 = vcombine.low %v4419, %v4435
        %v4444 = vcombine.high %v4419, %v4435
        %v4445 = vcombine.low %v4426, %v4442
        %v4446 = vcombine.high %v4426, %v4442
        %v4447 = vcombine.low %v3943, %v3950
        %v4449 = vunpack.c.l.s4 1983009808
        %v4450 = vunpack.c.0.s8 %v4449
        %v4451 = vlaneseq
        %v4452 = vshrl.u32 %v4451, 7
        %v4453 = vsub.s32 %v4450, %v4452
        %v4454 = vrot.slane %v4447, %v4453
        %v4455 = vcombine.low %v3967, %v3968
        %v4457 = vunpack.c.l.s4 1983009808
        %v4458 = vunpack.c.0.s8 %v4457
        %v4459 = vlaneseq
        %v4460 = vshrl.u32 %v4459, 7
        %v4461 = vsub.s32 %v4458, %v4460
        %v4462 = vrot.slane %v4455, %v4461
        %v4463 = vcombine.low %v3959, %v3966
        %v4465 = vunpack.c.l.s4 1983009808
        %v4466 = vunpack.c.0.s8 %v4465
        %v4467 = vlaneseq
        %v4468 = vshrl.u32 %v4467, 7
        %v4469 = vsub.s32 %v4466, %v4468
        %v4470 = vrot.slane %v4463, %v4469
        %v4471 = vcombine.low %v3969, %v3970
        %v4473 = vunpack.c.l.s4 1983009808
        %v4474 = vunpack.c.0.s8 %v4473
        %v4475 = vlaneseq
        %v4476 = vshrl.u32 %v4475, 7
        %v4477 = vsub.s32 %v4474, %v4476
        %v4478 = vrot.slane %v4471, %v4477
        %v4479 = vcombine.low %v4454, %v4462
        %v4480 = vcombine.high %v4454, %v4462
        %v4482 = vunpack.c.l.s4 1934713408
        %v4483 = vunpack.c.0.s8 %v4482
        %v4484 = vlaneseq
        %v4485 = vshrl.u32 %v4484, 7
        %v4486 = vsub.s32 %v4483, %v4485
        %v4487 = vrot.slane %v4479, %v4486
        %v4489 = vunpack.c.l.s4 1934713408
        %v4490 = vunpack.c.0.s8 %v4489
        %v4491 = vlaneseq
        %v4492 = vshrl.u32 %v4491, 7
        %v4493 = vsub.s32 %v4490, %v4492
        %v4494 = vrot.slane %v4480, %v4493
        %v4495 = vcombine.low %v4470, %v4478
        %v4496 = vcombine.high %v4470, %v4478
        %v4498 = vunpack.c.l.s4 1934713408
        %v4499 = vunpack.c.0.s8 %v4498
        %v4500 = vlaneseq
        %v4501 = vshrl.u32 %v4500, 7
        %v4502 = vsub.s32 %v4499, %v4501
        %v4503 = vrot.slane %v4495, %v4502
        %v4505 = vunpack.c.l.s4 1934713408
        %v4506 = vunpack.c.0.s8 %v4505
        %v4507 = vlaneseq
        %v4508 = vshrl.u32 %v4507, 7
        %v4509 = vsub.s32 %v4506, %v4508
        %v4510 = vrot.slane %v4496, %v4509
        %v4511 = vcombine.low %v4487, %v4503
        %v4512 = vcombine.high %v4487, %v4503
        %v4513 = vcombine.low %v4494, %v4510
        %v4514 = vcombine.high %v4494, %v4510
        %4523 = vrot.lane.b32.xlu0 %v4036, 32
        %v4524 = vpop.permute.xlu0 %4523
        %4525 = vrot.lane.b32.xlu0 %v4104, 32
        %v4526 = vpop.permute.xlu0 %4525
        %4527 = vrot.lane.b32.xlu0 %v4172, 32
        %v4528 = vpop.permute.xlu0 %4527
        %4529 = vrot.lane.b32.xlu0 %v4240, 32
        %v4530 = vpop.permute.xlu0 %4529
        %4531 = vrot.lane.b32.xlu0 %v4308, 32
        %v4532 = vpop.permute.xlu0 %4531
        %4533 = vrot.lane.b32.xlu0 %v4376, 32
        %v4534 = vpop.permute.xlu0 %4533
        %4535 = vrot.lane.b32.xlu0 %v4444, 32
        %v4536 = vpop.permute.xlu0 %4535
        %4537 = vrot.lane.b32.xlu0 %v4512, 32
        %v4538 = vpop.permute.xlu0 %4537
        %4555 = vrot.lane.b32.xlu0 %v4037, 64
        %v4556 = vpop.permute.xlu0 %4555
        %4557 = vrot.lane.b32.xlu0 %v4105, 64
        %v4558 = vpop.permute.xlu0 %4557
        %4559 = vrot.lane.b32.xlu0 %v4173, 64
        %v4560 = vpop.permute.xlu0 %4559
        %4561 = vrot.lane.b32.xlu0 %v4241, 64
        %v4562 = vpop.permute.xlu0 %4561
        %4563 = vrot.lane.b32.xlu0 %v4309, 64
        %v4564 = vpop.permute.xlu0 %4563
        %4565 = vrot.lane.b32.xlu0 %v4377, 64
        %v4566 = vpop.permute.xlu0 %4565
        %4567 = vrot.lane.b32.xlu0 %v4445, 64
        %v4568 = vpop.permute.xlu0 %4567
        %4569 = vrot.lane.b32.xlu0 %v4513, 64
        %v4570 = vpop.permute.xlu0 %4569
        %4587 = vrot.lane.b32.xlu0 %v4038, 96
        %v4588 = vpop.permute.xlu0 %4587
        %4589 = vrot.lane.b32.xlu0 %v4106, 96
        %v4590 = vpop.permute.xlu0 %4589
        %4591 = vrot.lane.b32.xlu0 %v4174, 96
        %v4592 = vpop.permute.xlu0 %4591
        %4593 = vrot.lane.b32.xlu0 %v4242, 96
        %v4594 = vpop.permute.xlu0 %4593
        %4595 = vrot.lane.b32.xlu0 %v4310, 96
        %v4596 = vpop.permute.xlu0 %4595
        %4597 = vrot.lane.b32.xlu0 %v4378, 96
        %v4598 = vpop.permute.xlu0 %4597
        %4599 = vrot.lane.b32.xlu0 %v4446, 96
        %v4600 = vpop.permute.xlu0 %4599
        %4601 = vrot.lane.b32.xlu0 %v4514, 96
        %v4602 = vpop.permute.xlu0 %4601
        %v4611 = vsel %vm1782, %v4035, %v4524
        %v4612 = vsel %vm1782, %v4103, %v4526
        %v4613 = vsel %vm1782, %v4171, %v4528
        %v4614 = vsel %vm1782, %v4239, %v4530
        %v4615 = vsel %vm1782, %v4307, %v4532
        %v4616 = vsel %vm1782, %v4375, %v4534
        %v4617 = vsel %vm1782, %v4443, %v4536
        %v4618 = vsel %vm1782, %v4511, %v4538
        %v4619 = vsel %vm2750, %v4611, %v4556
        %v4620 = vsel %vm2750, %v4612, %v4558
        %v4621 = vsel %vm2750, %v4613, %v4560
        %v4622 = vsel %vm2750, %v4614, %v4562
        %v4623 = vsel %vm2750, %v4615, %v4564
        %v4624 = vsel %vm2750, %v4616, %v4566
        %v4625 = vsel %vm2750, %v4617, %v4568
        %v4626 = vsel %vm2750, %v4618, %v4570
        %vm4627 = vcmask 785408
        %v4628 = vsel %vm4627, %v4619, %v4588
        %v4629 = vsel %vm4627, %v4620, %v4590
        %v4630 = vsel %vm4627, %v4621, %v4592
        %v4631 = vsel %vm4627, %v4622, %v4594
        %v4632 = vsel %vm4627, %v4623, %v4596
        %v4633 = vsel %vm4627, %v4624, %v4598
        %v4634 = vsel %vm4627, %v4625, %v4600
        %v4635 = vsel %vm4627, %v4626, %v4602
        %v4636 = vpack.c.bf16 %v4629, %v4628
        %v4637 = vpack.c.bf16 %v4631, %v4630
        %v4638 = vpack.c.bf16 %v4633, %v4632
        %v4639 = vpack.c.bf16 %v4635, %v4634
        %v4640 = vld [vmem:[#allocation10] sm:$0xf]
        %v4641 = vld [vmem:[#allocation10 + $0x4] sm:$0xf]
        %v4642 = vld [vmem:[#allocation10 + $0x8] sm:$0xf]
        %v4643 = vld [vmem:[#allocation10 + $0xc] sm:$0xf]
        %v4644 = vld [vmem:[#allocation10 + $0x10] sm:$0xf]
        %v4645 = vld [vmem:[#allocation10 + $0x14] sm:$0xf]
        %v4646 = vld [vmem:[#allocation10 + $0x18] sm:$0xf]
        %v4647 = vld [vmem:[#allocation10 + $0x1c] sm:$0xf]
        %v4648 = vld [vmem:[#allocation10 + $0x20] sm:$0xf]
        %v4649 = vld [vmem:[#allocation10 + $0x24] sm:$0xf]
        %v4650 = vld [vmem:[#allocation10 + $0x28] sm:$0xf]
        %v4651 = vld [vmem:[#allocation10 + $0x2c] sm:$0xf]
        %v4652 = vld [vmem:[#allocation10 + $0x30] sm:$0xf]
        %v4653 = vld [vmem:[#allocation10 + $0x34] sm:$0xf]
        %v4654 = vld [vmem:[#allocation10 + $0x38] sm:$0xf]
        %v4655 = vld [vmem:[#allocation10 + $0x3c] sm:$0xf]
        %v4656 = vld [vmem:[%s5] sm:$0x1]
        %v4658 = vlaneseq
        %v4659 = vshrl.u32 %v4658, 7
        %v4660 = vsub.s32 0, %v4659
        %v4661 = vrot.slane %v4656, %v4660
        %v4679 = vunpack.c.l.b16 %v4640
        %v4680 = vunpack.c.l.b16 %v4641
        %v4681 = vunpack.c.l.b16 %v4642
        %v4682 = vunpack.c.l.b16 %v4643
        %v4683 = vunpack.c.l.b16 %v4644
        %v4684 = vunpack.c.l.b16 %v4645
        %v4685 = vunpack.c.l.b16 %v4646
        %v4686 = vunpack.c.l.b16 %v4647
        %v4687 = vunpack.c.l.b16 %v4648
        %v4688 = vunpack.c.l.b16 %v4649
        %v4689 = vunpack.c.l.b16 %v4650
        %v4690 = vunpack.c.l.b16 %v4651
        %v4691 = vunpack.c.l.b16 %v4652
        %v4692 = vunpack.c.l.b16 %v4653
        %v4693 = vunpack.c.l.b16 %v4654
        %v4694 = vunpack.c.l.b16 %v4655
        %v4695 = vpack.c.b16 %v4680, %v4679
        %v4696 = vpack.c.b16 %v4682, %v4681
        %v4697 = vpack.c.b16 %v4684, %v4683
        %v4698 = vpack.c.b16 %v4686, %v4685
        %v4699 = vpack.c.b16 %v4688, %v4687
        %v4700 = vpack.c.b16 %v4690, %v4689
        %v4701 = vpack.c.b16 %v4692, %v4691
        %v4702 = vpack.c.b16 %v4694, %v4693
        %4711 = vmatprep.subr.bf16.mxu0 0
        %4712 = vmatpush1.bf16.msra.mxu0 %v4695
        %4713 = vmatprep.subr.bf16.mxu0 0
        %4714 = vmatpush1.bf16.msra.mxu0 %v4696
        %4715 = vmatprep.subr.bf16.mxu0 0
        %4716 = vmatpush1.bf16.msra.mxu0 %v4697
        %4717 = vmatprep.subr.bf16.mxu0 0
        %4718 = vmatpush1.bf16.msra.mxu0 %v4698
        %4719 = vmatprep.subr.bf16.mxu0 0
        %4720 = vmatpush1.bf16.msra.mxu0 %v4699
        %4721 = vmatprep.subr.bf16.mxu0 0
        %4722 = vmatpush1.bf16.msra.mxu0 %v4700
        %4723 = vmatprep.subr.bf16.mxu0 0
        %4724 = vmatpush1.bf16.msra.mxu0 %v4701
        %4725 = vmatprep.subr.bf16.mxu0 0
        %4726 = vmatpush1.bf16.msra.mxu0 %v4702
        %4727 = vmatprep.subr.bf16.mxu0 0
        %4728 = vmatpush1.bf16.msra.mxu0 0
        %4729 = vmatprep.subr.bf16.mxu0 0
        %4730 = vmatpush1.bf16.msra.mxu0 0
        %4731 = vmatprep.subr.bf16.mxu0 0
        %4732 = vmatpush1.bf16.msra.mxu0 0
        %4733 = vmatprep.subr.bf16.mxu0 0
        %4734 = vmatpush1.bf16.msra.mxu0 0
        %4735 = vmatprep.subr.bf16.mxu0 0
        %4736 = vmatpush1.bf16.msra.mxu0 0
        %4737 = vmatprep.subr.bf16.mxu0 0
        %4738 = vmatpush1.bf16.msra.mxu0 0
        %4739 = vmatprep.subr.bf16.mxu0 0
        %4740 = vmatpush1.bf16.msra.mxu0 0
        %4741 = vmatprep.subr.bf16.mxu0 0
        %4742 = vmatpush1.bf16.msra.mxu0 0
        %4743 = vmatprep.mubr.bf16.mxu0 0
        %4744 = vmatmul.mubr.bf16.gmra.mrb[0].mxu0 %v4636
        %v4745 = vpop.f32.mrb[0].mxu0
        %v4746 = vadd.f32 %v4661, %v4745
        %v4747 = vpop.f32.mrb[0].mxu0
        %v4748 = vpop.f32.mrb[0].mxu0
        %v4749 = vadd.f32 %v4661, %v4748
        %v4750 = vpop.f32.mrb[0].mxu0
        %4751 = vmatprep.mubr.bf16.mxu0 0
        %4752 = vmatmul.mubr.bf16.gmra.mrb[0].mxu0 %v4637
        %v4753 = vpop.f32.mrb[0].mxu0
        %v4754 = vadd.f32 %v4661, %v4753
        %v4755 = vpop.f32.mrb[0].mxu0
        %v4756 = vpop.f32.mrb[0].mxu0
        %v4757 = vadd.f32 %v4661, %v4756
        %v4758 = vpop.f32.mrb[0].mxu0
        %4759 = vmatprep.mubr.bf16.mxu0 0
        %4760 = vmatmul.mubr.bf16.gmra.mrb[0].mxu0 %v4638
        %v4761 = vpop.f32.mrb[0].mxu0
        %v4762 = vadd.f32 %v4661, %v4761
        %v4763 = vpop.f32.mrb[0].mxu0
        %v4764 = vpop.f32.mrb[0].mxu0
        %v4765 = vadd.f32 %v4661, %v4764
        %v4766 = vpop.f32.mrb[0].mxu0
        %4767 = vmatprep.mubr.bf16.mxu0 0
        %4768 = vmatmul.mubr.bf16.gmra.mrb[0].mxu0 %v4639
        %v4769 = vpop.f32.mrb[0].mxu0
        %v4770 = vadd.f32 %v4661, %v4769
        %v4771 = vpop.f32.mrb[0].mxu0
        %v4772 = vpop.f32.mrb[0].mxu0
        %v4773 = vadd.f32 %v4661, %v4772
        %v4774 = vpop.f32.mrb[0].mxu0
        %4775 = vdwg.mxu0
        %v4776 = vadd.f32 %v4746, %v574
        %v4777 = vadd.f32 %v4749, %v575
        %v4778 = vadd.f32 %v4754, %v576
        %v4779 = vadd.f32 %v4757, %v577
        %v4780 = vadd.f32 %v4762, %v578
        %v4781 = vadd.f32 %v4765, %v579
        %v4782 = vadd.f32 %v4770, %v580
        %v4783 = vadd.f32 %v4773, %v581
        %v4784 = vld [vmem:[%s6] sm:$0x1]
        %v4785 = vld [vmem:[%s7] sm:$0x1]
        %4786 = vadd.xlane.f32.xlu0 %v4776
        %v4787 = vpop.xlane.xlu0 %4786
        %4788 = vadd.xlane.f32.xlu0 %v4777
        %v4789 = vpop.xlane.xlu0 %4788
        %4790 = vadd.xlane.f32.xlu0 %v4778
        %v4791 = vpop.xlane.xlu0 %4790
        %4792 = vadd.xlane.f32.xlu0 %v4779
        %v4793 = vpop.xlane.xlu0 %4792
        %4794 = vadd.xlane.f32.xlu0 %v4780
        %v4795 = vpop.xlane.xlu0 %4794
        %4796 = vadd.xlane.f32.xlu0 %v4781
        %v4797 = vpop.xlane.xlu0 %4796
        %4798 = vadd.xlane.f32.xlu0 %v4782
        %v4799 = vpop.xlane.xlu0 %4798
        %4800 = vadd.xlane.f32.xlu0 %v4783
        %v4801 = vpop.xlane.xlu0 %4800
        %v4802 = vrcp.pop 128.0
        %v4803 = vmul.f32 %v4787, %v4802
        %v4804 = vmul.f32 %v4789, %v4802
        %v4805 = vmul.f32 %v4791, %v4802
        %v4806 = vmul.f32 %v4793, %v4802
        %v4807 = vmul.f32 %v4795, %v4802
        %v4808 = vmul.f32 %v4797, %v4802
        %v4809 = vmul.f32 %v4799, %v4802
        %v4810 = vmul.f32 %v4801, %v4802
        %v4811 = vsub.f32 %v4776, %v4803
        %v4812 = vsub.f32 %v4777, %v4804
        %v4813 = vsub.f32 %v4778, %v4805
        %v4814 = vsub.f32 %v4779, %v4806
        %v4815 = vsub.f32 %v4780, %v4807
        %v4816 = vsub.f32 %v4781, %v4808
        %v4817 = vsub.f32 %v4782, %v4809
        %v4818 = vsub.f32 %v4783, %v4810
        %v4819 = vmul.f32 %v4811, %v4811
        %v4820 = vmul.f32 %v4812, %v4812
        %v4821 = vmul.f32 %v4813, %v4813
        %v4822 = vmul.f32 %v4814, %v4814
        %v4823 = vmul.f32 %v4815, %v4815
        %v4824 = vmul.f32 %v4816, %v4816
        %v4825 = vmul.f32 %v4817, %v4817
        %v4826 = vmul.f32 %v4818, %v4818
        %4827 = vadd.xlane.f32.xlu0 %v4819
        %v4828 = vpop.xlane.xlu0 %4827
        %4829 = vadd.xlane.f32.xlu0 %v4820
        %v4830 = vpop.xlane.xlu0 %4829
        %4831 = vadd.xlane.f32.xlu0 %v4821
        %v4832 = vpop.xlane.xlu0 %4831
        %4833 = vadd.xlane.f32.xlu0 %v4822
        %v4834 = vpop.xlane.xlu0 %4833
        %4835 = vadd.xlane.f32.xlu0 %v4823
        %v4836 = vpop.xlane.xlu0 %4835
        %4837 = vadd.xlane.f32.xlu0 %v4824
        %v4838 = vpop.xlane.xlu0 %4837
        %4839 = vadd.xlane.f32.xlu0 %v4825
        %v4840 = vpop.xlane.xlu0 %4839
        %4841 = vadd.xlane.f32.xlu0 %v4826
        %v4842 = vpop.xlane.xlu0 %4841
        %v4843 = vmul.f32 %v4828, %v4802
        %v4844 = vmul.f32 %v4830, %v4802
        %v4845 = vmul.f32 %v4832, %v4802
        %v4846 = vmul.f32 %v4834, %v4802
        %v4847 = vmul.f32 %v4836, %v4802
        %v4848 = vmul.f32 %v4838, %v4802
        %v4849 = vmul.f32 %v4840, %v4802
        %v4850 = vmul.f32 %v4842, %v4802
        %v4851 = vadd.f32 %v4843, 1e-05
        %v4852 = vadd.f32 %v4844, 1e-05
        %v4853 = vadd.f32 %v4845, 1e-05
        %v4854 = vadd.f32 %v4846, 1e-05
        %v4855 = vadd.f32 %v4847, 1e-05
        %v4856 = vadd.f32 %v4848, 1e-05
        %v4857 = vadd.f32 %v4849, 1e-05
        %v4858 = vadd.f32 %v4850, 1e-05
        %v4859 = vrsqrt.pop %v4851
        %v4860 = vrsqrt.pop %v4852
        %v4861 = vrsqrt.pop %v4853
        %v4862 = vrsqrt.pop %v4854
        %v4863 = vrsqrt.pop %v4855
        %v4864 = vrsqrt.pop %v4856
        %v4865 = vrsqrt.pop %v4857
        %v4866 = vrsqrt.pop %v4858
        %v4867 = vmul.f32 %v4811, %v4859
        %v4868 = vmul.f32 %v4812, %v4860
        %v4869 = vmul.f32 %v4813, %v4861
        %v4870 = vmul.f32 %v4814, %v4862
        %v4871 = vmul.f32 %v4815, %v4863
        %v4872 = vmul.f32 %v4816, %v4864
        %v4873 = vmul.f32 %v4817, %v4865
        %v4874 = vmul.f32 %v4818, %v4866
        %v4876 = vlaneseq
        %v4877 = vshrl.u32 %v4876, 7
        %v4878 = vsub.s32 0, %v4877
        %v4879 = vrot.slane %v4784, %v4878
        %v4881 = vmul.f32 %v4867, %v4879
        %v4882 = vmul.f32 %v4868, %v4879
        %v4883 = vmul.f32 %v4869, %v4879
        %v4884 = vmul.f32 %v4870, %v4879
        %v4885 = vmul.f32 %v4871, %v4879
        %v4886 = vmul.f32 %v4872, %v4879
        %v4887 = vmul.f32 %v4873, %v4879
        %v4888 = vmul.f32 %v4874, %v4879
        %v4890 = vlaneseq
        %v4891 = vshrl.u32 %v4890, 7
        %v4892 = vsub.s32 0, %v4891
        %v4893 = vrot.slane %v4785, %v4892
        %v4895 = vadd.f32 %v4881, %v4893
        %v4896 = vadd.f32 %v4882, %v4893
        %v4897 = vadd.f32 %v4883, %v4893
        %v4898 = vadd.f32 %v4884, %v4893
        %v4899 = vadd.f32 %v4885, %v4893
        %v4900 = vadd.f32 %v4886, %v4893
        %v4901 = vadd.f32 %v4887, %v4893
        %v4902 = vadd.f32 %v4888, %v4893
        %v4903 = vpack.c.bf16 %v4896, %v4895
        %v4904 = vpack.c.bf16 %v4898, %v4897
        %v4905 = vpack.c.bf16 %v4900, %v4899
        %v4906 = vpack.c.bf16 %v4902, %v4901
        %v4907 = vld [vmem:[#allocation11] sm:$0xff]
        %v4908 = vld [vmem:[#allocation11 + $0x8] sm:$0xff]
        %v4909 = vld [vmem:[#allocation11 + $0x10] sm:$0xff]
        %v4910 = vld [vmem:[#allocation11 + $0x18] sm:$0xff]
        %v4911 = vld [vmem:[#allocation11 + $0x20] sm:$0xff]
        %v4912 = vld [vmem:[#allocation11 + $0x28] sm:$0xff]
        %v4913 = vld [vmem:[#allocation11 + $0x30] sm:$0xff]
        %v4914 = vld [vmem:[#allocation11 + $0x38] sm:$0xff]
        %v4915 = vld [vmem:[#allocation11 + $0x40] sm:$0xff]
        %v4916 = vld [vmem:[#allocation11 + $0x48] sm:$0xff]
        %v4917 = vld [vmem:[#allocation11 + $0x50] sm:$0xff]
        %v4918 = vld [vmem:[#allocation11 + $0x58] sm:$0xff]
        %v4919 = vld [vmem:[#allocation11 + $0x60] sm:$0xff]
        %v4920 = vld [vmem:[#allocation11 + $0x68] sm:$0xff]
        %v4921 = vld [vmem:[#allocation11 + $0x70] sm:$0xff]
        %v4922 = vld [vmem:[#allocation11 + $0x78] sm:$0xff]
        %v4923 = vld [vmem:[#allocation11 + $0x80] sm:$0xff]
        %v4924 = vld [vmem:[#allocation11 + $0x88] sm:$0xff]
        %v4925 = vld [vmem:[#allocation11 + $0x90] sm:$0xff]
        %v4926 = vld [vmem:[#allocation11 + $0x98] sm:$0xff]
        %v4927 = vld [vmem:[#allocation11 + $0xa0] sm:$0xff]
        %v4928 = vld [vmem:[#allocation11 + $0xa8] sm:$0xff]
        %v4929 = vld [vmem:[#allocation11 + $0xb0] sm:$0xff]
        %v4930 = vld [vmem:[#allocation11 + $0xb8] sm:$0xff]
        %v4931 = vld [vmem:[#allocation11 + $0xc0] sm:$0xff]
        %v4932 = vld [vmem:[#allocation11 + $0xc8] sm:$0xff]
        %v4933 = vld [vmem:[#allocation11 + $0xd0] sm:$0xff]
        %v4934 = vld [vmem:[#allocation11 + $0xd8] sm:$0xff]
        %v4935 = vld [vmem:[#allocation11 + $0xe0] sm:$0xff]
        %v4936 = vld [vmem:[#allocation11 + $0xe8] sm:$0xff]
        %v4937 = vld [vmem:[#allocation11 + $0xf0] sm:$0xff]
        %v4938 = vld [vmem:[#allocation11 + $0xf8] sm:$0xff]
        %v4939 = vld [vmem:[%s9] sm:$0xf]
        %v4941 = vlaneseq
        %v4942 = vshrl.u32 %v4941, 7
        %v4943 = vsub.s32 0, %v4942
        %v4944 = vrot.slane %v4939, %v4943
        %v4945 = vlaneseq
        %v4946 = vshrl.u32 %v4945, 7
        %v4947 = vsub.s32 1, %v4946
        %v4948 = vrot.slane %v4939, %v4947
        %v4949 = vlaneseq
        %v4950 = vshrl.u32 %v4949, 7
        %v4951 = vsub.s32 2, %v4950
        %v4952 = vrot.slane %v4939, %v4951
        %v4953 = vlaneseq
        %v4954 = vshrl.u32 %v4953, 7
        %v4955 = vsub.s32 3, %v4954
        %v4956 = vrot.slane %v4939, %v4955
        %v4993 = vunpack.c.l.b16 %v4907
        %v4994 = vunpack.c.h.b16 %v4907
        %v4995 = vunpack.c.l.b16 %v4908
        %v4996 = vunpack.c.h.b16 %v4908
        %v4997 = vunpack.c.l.b16 %v4909
        %v4998 = vunpack.c.h.b16 %v4909
        %v4999 = vunpack.c.l.b16 %v4910
        %v5000 = vunpack.c.h.b16 %v4910
        %v5001 = vunpack.c.l.b16 %v4911
        %v5002 = vunpack.c.h.b16 %v4911
        %v5003 = vunpack.c.l.b16 %v4912
        %v5004 = vunpack.c.h.b16 %v4912
        %v5005 = vunpack.c.l.b16 %v4913
        %v5006 = vunpack.c.h.b16 %v4913
        %v5007 = vunpack.c.l.b16 %v4914
        %v5008 = vunpack.c.h.b16 %v4914
        %v5009 = vunpack.c.l.b16 %v4915
        %v5010 = vunpack.c.h.b16 %v4915
        %v5011 = vunpack.c.l.b16 %v4916
        %v5012 = vunpack.c.h.b16 %v4916
        %v5013 = vunpack.c.l.b16 %v4917
        %v5014 = vunpack.c.h.b16 %v4917
        %v5015 = vunpack.c.l.b16 %v4918
        %v5016 = vunpack.c.h.b16 %v4918
        %v5017 = vunpack.c.l.b16 %v4919
        %v5018 = vunpack.c.h.b16 %v4919
        %v5019 = vunpack.c.l.b16 %v4920
        %v5020 = vunpack.c.h.b16 %v4920
        %v5021 = vunpack.c.l.b16 %v4921
        %v5022 = vunpack.c.h.b16 %v4921
        %v5023 = vunpack.c.l.b16 %v4922
        %v5024 = vunpack.c.h.b16 %v4922
        %v5025 = vunpack.c.l.b16 %v4923
        %v5026 = vunpack.c.h.b16 %v4923
        %v5027 = vunpack.c.l.b16 %v4924
        %v5028 = vunpack.c.h.b16 %v4924
        %v5029 = vunpack.c.l.b16 %v4925
        %v5030 = vunpack.c.h.b16 %v4925
        %v5031 = vunpack.c.l.b16 %v4926
        %v5032 = vunpack.c.h.b16 %v4926
        %v5033 = vunpack.c.l.b16 %v4927
        %v5034 = vunpack.c.h.b16 %v4927
        %v5035 = vunpack.c.l.b16 %v4928
        %v5036 = vunpack.c.h.b16 %v4928
        %v5037 = vunpack.c.l.b16 %v4929
        %v5038 = vunpack.c.h.b16 %v4929
        %v5039 = vunpack.c.l.b16 %v4930
        %v5040 = vunpack.c.h.b16 %v4930
        %v5041 = vunpack.c.l.b16 %v4931
        %v5042 = vunpack.c.h.b16 %v4931
        %v5043 = vunpack.c.l.b16 %v4932
        %v5044 = vunpack.c.h.b16 %v4932
        %v5045 = vunpack.c.l.b16 %v4933
        %v5046 = vunpack.c.h.b16 %v4933
        %v5047 = vunpack.c.l.b16 %v4934
        %v5048 = vunpack.c.h.b16 %v4934
        %v5049 = vunpack.c.l.b16 %v4935
        %v5050 = vunpack.c.h.b16 %v4935
        %v5051 = vunpack.c.l.b16 %v4936
        %v5052 = vunpack.c.h.b16 %v4936
        %v5053 = vunpack.c.l.b16 %v4937
        %v5054 = vunpack.c.h.b16 %v4937
        %v5055 = vunpack.c.l.b16 %v4938
        %v5056 = vunpack.c.h.b16 %v4938
        %v5057 = vpack.c.b16 %v4997, %v4993
        %v5058 = vpack.c.b16 %v4998, %v4994
        %v5059 = vpack.c.b16 %v4999, %v4995
        %v5060 = vpack.c.b16 %v5000, %v4996
        %v5061 = vpack.c.b16 %v5005, %v5001
        %v5062 = vpack.c.b16 %v5006, %v5002
        %v5063 = vpack.c.b16 %v5007, %v5003
        %v5064 = vpack.c.b16 %v5008, %v5004
        %v5065 = vpack.c.b16 %v5013, %v5009
        %v5066 = vpack.c.b16 %v5014, %v5010
        %v5067 = vpack.c.b16 %v5015, %v5011
        %v5068 = vpack.c.b16 %v5016, %v5012
        %v5069 = vpack.c.b16 %v5021, %v5017
        %v5070 = vpack.c.b16 %v5022, %v5018
        %v5071 = vpack.c.b16 %v5023, %v5019
        %v5072 = vpack.c.b16 %v5024, %v5020
        %v5073 = vpack.c.b16 %v5029, %v5025
        %v5074 = vpack.c.b16 %v5030, %v5026
        %v5075 = vpack.c.b16 %v5031, %v5027
        %v5076 = vpack.c.b16 %v5032, %v5028
        %v5077 = vpack.c.b16 %v5037, %v5033
        %v5078 = vpack.c.b16 %v5038, %v5034
        %v5079 = vpack.c.b16 %v5039, %v5035
        %v5080 = vpack.c.b16 %v5040, %v5036
        %v5081 = vpack.c.b16 %v5045, %v5041
        %v5082 = vpack.c.b16 %v5046, %v5042
        %v5083 = vpack.c.b16 %v5047, %v5043
        %v5084 = vpack.c.b16 %v5048, %v5044
        %v5085 = vpack.c.b16 %v5053, %v5049
        %v5086 = vpack.c.b16 %v5054, %v5050
        %v5087 = vpack.c.b16 %v5055, %v5051
        %v5088 = vpack.c.b16 %v5056, %v5052
        %5121 = vmatprep.subr.bf16.mxu0 %v5058
        %5122 = vmatpush1.bf16.msra.mxu0 %v5057
        %5123 = vmatprep.subr.bf16.mxu0 %v5062
        %5124 = vmatpush1.bf16.msra.mxu0 %v5061
        %5125 = vmatprep.subr.bf16.mxu0 %v5066
        %5126 = vmatpush1.bf16.msra.mxu0 %v5065
        %5127 = vmatprep.subr.bf16.mxu0 %v5070
        %5128 = vmatpush1.bf16.msra.mxu0 %v5069
        %5129 = vmatprep.subr.bf16.mxu0 %v5074
        %5130 = vmatpush1.bf16.msra.mxu0 %v5073
        %5131 = vmatprep.subr.bf16.mxu0 %v5078
        %5132 = vmatpush1.bf16.msra.mxu0 %v5077
        %5133 = vmatprep.subr.bf16.mxu0 %v5082
        %5134 = vmatpush1.bf16.msra.mxu0 %v5081
        %5135 = vmatprep.subr.bf16.mxu0 %v5086
        %5136 = vmatpush1.bf16.msra.mxu0 %v5085
        %5137 = vmatprep.subr.bf16.mxu0 0
        %5138 = vmatpush1.bf16.msra.mxu0 0
        %5139 = vmatprep.subr.bf16.mxu0 0
        %5140 = vmatpush1.bf16.msra.mxu0 0
        %5141 = vmatprep.subr.bf16.mxu0 0
        %5142 = vmatpush1.bf16.msra.mxu0 0
        %5143 = vmatprep.subr.bf16.mxu0 0
        %5144 = vmatpush1.bf16.msra.mxu0 0
        %5145 = vmatprep.subr.bf16.mxu0 0
        %5146 = vmatpush1.bf16.msra.mxu0 0
        %5147 = vmatprep.subr.bf16.mxu0 0
        %5148 = vmatpush1.bf16.msra.mxu0 0
        %5149 = vmatprep.subr.bf16.mxu0 0
        %5150 = vmatpush1.bf16.msra.mxu0 0
        %5151 = vmatprep.subr.bf16.mxu0 0
        %5152 = vmatpush1.bf16.msra.mxu0 0
        %5153 = vmatprep.mubr.bf16.mxu0 0
        %5154 = vmatmul.mubr.bf16.gmra.mrb[0].mxu0 %v4903
        %v5155 = vpop.f32.mrb[0].mxu0
        %v5156 = vadd.f32 %v4944, %v5155
        %v5157 = vpop.f32.mrb[0].mxu0
        %v5158 = vadd.f32 %v4948, %v5157
        %v5159 = vpop.f32.mrb[0].mxu0
        %v5160 = vadd.f32 %v4944, %v5159
        %v5161 = vpop.f32.mrb[0].mxu0
        %v5162 = vadd.f32 %v4948, %v5161
        %5163 = vmatprep.mubr.bf16.mxu0 0
        %5164 = vmatmul.mubr.bf16.gmra.mrb[0].mxu0 %v4904
        %v5165 = vpop.f32.mrb[0].mxu0
        %v5166 = vadd.f32 %v4944, %v5165
        %v5167 = vpop.f32.mrb[0].mxu0
        %v5168 = vadd.f32 %v4948, %v5167
        %v5169 = vpop.f32.mrb[0].mxu0
        %v5170 = vadd.f32 %v4944, %v5169
        %v5171 = vpop.f32.mrb[0].mxu0
        %v5172 = vadd.f32 %v4948, %v5171
        %5173 = vmatprep.mubr.bf16.mxu0 0
        %5174 = vmatmul.mubr.bf16.gmra.mrb[0].mxu0 %v4905
        %v5175 = vpop.f32.mrb[0].mxu0
        %v5176 = vadd.f32 %v4944, %v5175
        %v5177 = vpop.f32.mrb[0].mxu0
        %v5178 = vadd.f32 %v4948, %v5177
        %v5179 = vpop.f32.mrb[0].mxu0
        %v5180 = vadd.f32 %v4944, %v5179
        %v5181 = vpop.f32.mrb[0].mxu0
        %v5182 = vadd.f32 %v4948, %v5181
        %5183 = vmatprep.mubr.bf16.mxu0 0
        %5184 = vmatmul.mubr.bf16.gmra.mrb[0].mxu0 %v4906
        %v5185 = vpop.f32.mrb[0].mxu0
        %v5186 = vadd.f32 %v4944, %v5185
        %v5187 = vpop.f32.mrb[0].mxu0
        %v5188 = vadd.f32 %v4948, %v5187
        %v5189 = vpop.f32.mrb[0].mxu0
        %v5190 = vadd.f32 %v4944, %v5189
        %v5191 = vpop.f32.mrb[0].mxu0
        %v5192 = vadd.f32 %v4948, %v5191
        %5193 = vdwg.mxu0
        %5194 = vmatprep.subr.bf16.mxu0 %v5060
        %5195 = vmatpush1.bf16.msra.mxu0 %v5059
        %5196 = vmatprep.subr.bf16.mxu0 %v5064
        %5197 = vmatpush1.bf16.msra.mxu0 %v5063
        %5198 = vmatprep.subr.bf16.mxu0 %v5068
        %5199 = vmatpush1.bf16.msra.mxu0 %v5067
        %5200 = vmatprep.subr.bf16.mxu0 %v5072
        %5201 = vmatpush1.bf16.msra.mxu0 %v5071
        %5202 = vmatprep.subr.bf16.mxu0 %v5076
        %5203 = vmatpush1.bf16.msra.mxu0 %v5075
        %5204 = vmatprep.subr.bf16.mxu0 %v5080
        %5205 = vmatpush1.bf16.msra.mxu0 %v5079
        %5206 = vmatprep.subr.bf16.mxu0 %v5084
        %5207 = vmatpush1.bf16.msra.mxu0 %v5083
        %5208 = vmatprep.subr.bf16.mxu0 %v5088
        %5209 = vmatpush1.bf16.msra.mxu0 %v5087
        %5210 = vmatprep.subr.bf16.mxu0 0
        %5211 = vmatpush1.bf16.msra.mxu0 0
        %5212 = vmatprep.subr.bf16.mxu0 0
        %5213 = vmatpush1.bf16.msra.mxu0 0
        %5214 = vmatprep.subr.bf16.mxu0 0
        %5215 = vmatpush1.bf16.msra.mxu0 0
        %5216 = vmatprep.subr.bf16.mxu0 0
        %5217 = vmatpush1.bf16.msra.mxu0 0
        %5218 = vmatprep.subr.bf16.mxu0 0
        %5219 = vmatpush1.bf16.msra.mxu0 0
        %5220 = vmatprep.subr.bf16.mxu0 0
        %5221 = vmatpush1.bf16.msra.mxu0 0
        %5222 = vmatprep.subr.bf16.mxu0 0
        %5223 = vmatpush1.bf16.msra.mxu0 0
        %5224 = vmatprep.subr.bf16.mxu0 0
        %5225 = vmatpush1.bf16.msra.mxu0 0
        %5226 = vmatprep.mubr.bf16.mxu0 0
        %5227 = vmatmul.mubr.bf16.gmra.mrb[0].mxu0 %v4903
        %v5228 = vpop.f32.mrb[0].mxu0
        %v5229 = vadd.f32 %v4952, %v5228
        %v5230 = vpop.f32.mrb[0].mxu0
        %v5231 = vadd.f32 %v4956, %v5230
        %v5232 = vpop.f32.mrb[0].mxu0
        %v5233 = vadd.f32 %v4952, %v5232
        %v5234 = vpop.f32.mrb[0].mxu0
        %v5235 = vadd.f32 %v4956, %v5234
        %5236 = vmatprep.mubr.bf16.mxu0 0
        %5237 = vmatmul.mubr.bf16.gmra.mrb[0].mxu0 %v4904
        %v5238 = vpop.f32.mrb[0].mxu0
        %v5239 = vadd.f32 %v4952, %v5238
        %v5240 = vpop.f32.mrb[0].mxu0
        %v5241 = vadd.f32 %v4956, %v5240
        %v5242 = vpop.f32.mrb[0].mxu0
        %v5243 = vadd.f32 %v4952, %v5242
        %v5244 = vpop.f32.mrb[0].mxu0
        %v5245 = vadd.f32 %v4956, %v5244
        %5246 = vmatprep.mubr.bf16.mxu0 0
        %5247 = vmatmul.mubr.bf16.gmra.mrb[0].mxu0 %v4905
        %v5248 = vpop.f32.mrb[0].mxu0
        %v5249 = vadd.f32 %v4952, %v5248
        %v5250 = vpop.f32.mrb[0].mxu0
        %v5251 = vadd.f32 %v4956, %v5250
        %v5252 = vpop.f32.mrb[0].mxu0
        %v5253 = vadd.f32 %v4952, %v5252
        %v5254 = vpop.f32.mrb[0].mxu0
        %v5255 = vadd.f32 %v4956, %v5254
        %5256 = vmatprep.mubr.bf16.mxu0 0
        %5257 = vmatmul.mubr.bf16.gmra.mrb[0].mxu0 %v4906
        %v5258 = vpop.f32.mrb[0].mxu0
        %v5259 = vadd.f32 %v4952, %v5258
        %v5260 = vpop.f32.mrb[0].mxu0
        %v5261 = vadd.f32 %v4956, %v5260
        %v5262 = vpop.f32.mrb[0].mxu0
        %v5263 = vadd.f32 %v4952, %v5262
        %v5264 = vpop.f32.mrb[0].mxu0
        %v5265 = vadd.f32 %v4956, %v5264
        %5266 = vdwg.mxu0
        %v5267 = vmul.f32 %v5156, 0.5
        %v5268 = vmul.f32 %v5158, 0.5
        %v5269 = vmul.f32 %v5229, 0.5
        %v5270 = vmul.f32 %v5231, 0.5
        %v5271 = vmul.f32 %v5160, 0.5
        %v5272 = vmul.f32 %v5162, 0.5
        %v5273 = vmul.f32 %v5233, 0.5
        %v5274 = vmul.f32 %v5235, 0.5
        %v5275 = vmul.f32 %v5166, 0.5
        %v5276 = vmul.f32 %v5168, 0.5
        %v5277 = vmul.f32 %v5239, 0.5
        %v5278 = vmul.f32 %v5241, 0.5
        %v5279 = vmul.f32 %v5170, 0.5
        %v5280 = vmul.f32 %v5172, 0.5
        %v5281 = vmul.f32 %v5243, 0.5
        %v5282 = vmul.f32 %v5245, 0.5
        %v5283 = vmul.f32 %v5176, 0.5
        %v5284 = vmul.f32 %v5178, 0.5
        %v5285 = vmul.f32 %v5249, 0.5
        %v5286 = vmul.f32 %v5251, 0.5
        %v5287 = vmul.f32 %v5180, 0.5
        %v5288 = vmul.f32 %v5182, 0.5
        %v5289 = vmul.f32 %v5253, 0.5
        %v5290 = vmul.f32 %v5255, 0.5
        %v5291 = vmul.f32 %v5186, 0.5
        %v5292 = vmul.f32 %v5188, 0.5
        %v5293 = vmul.f32 %v5259, 0.5
        %v5294 = vmul.f32 %v5261, 0.5
        %v5295 = vmul.f32 %v5190, 0.5
        %v5296 = vmul.f32 %v5192, 0.5
        %v5297 = vmul.f32 %v5263, 0.5
        %v5298 = vmul.f32 %v5265, 0.5
        %v5299 = vmul.f32 %v5156, 0.70710677
        %v5300 = vmul.f32 %v5158, 0.70710677
        %v5301 = vmul.f32 %v5229, 0.70710677
        %v5302 = vmul.f32 %v5231, 0.70710677
        %v5303 = vmul.f32 %v5160, 0.70710677
        %v5304 = vmul.f32 %v5162, 0.70710677
        %v5305 = vmul.f32 %v5233, 0.70710677
        %v5306 = vmul.f32 %v5235, 0.70710677
        %v5307 = vmul.f32 %v5166, 0.70710677
        %v5308 = vmul.f32 %v5168, 0.70710677
        %v5309 = vmul.f32 %v5239, 0.70710677
        %v5310 = vmul.f32 %v5241, 0.70710677
        %v5311 = vmul.f32 %v5170, 0.70710677
        %v5312 = vmul.f32 %v5172, 0.70710677
        %v5313 = vmul.f32 %v5243, 0.70710677
        %v5314 = vmul.f32 %v5245, 0.70710677
        %v5315 = vmul.f32 %v5176, 0.70710677
        %v5316 = vmul.f32 %v5178, 0.70710677
        %v5317 = vmul.f32 %v5249, 0.70710677
        %v5318 = vmul.f32 %v5251, 0.70710677
        %v5319 = vmul.f32 %v5180, 0.70710677
        %v5320 = vmul.f32 %v5182, 0.70710677
        %v5321 = vmul.f32 %v5253, 0.70710677
        %v5322 = vmul.f32 %v5255, 0.70710677
        %v5323 = vmul.f32 %v5186, 0.70710677
        %v5324 = vmul.f32 %v5188, 0.70710677
        %v5325 = vmul.f32 %v5259, 0.70710677
        %v5326 = vmul.f32 %v5261, 0.70710677
        %v5327 = vmul.f32 %v5190, 0.70710677
        %v5328 = vmul.f32 %v5192, 0.70710677
        %v5329 = vmul.f32 %v5263, 0.70710677
        %v5330 = vmul.f32 %v5265, 0.70710677
        %v5331 = verf.f32.pop %v5299
        %v5332 = verf.f32.pop %v5300
        %v5333 = verf.f32.pop %v5301
        %v5334 = verf.f32.pop %v5302
        %v5335 = verf.f32.pop %v5303
        %v5336 = verf.f32.pop %v5304
        %v5337 = verf.f32.pop %v5305
        %v5338 = verf.f32.pop %v5306
        %v5339 = verf.f32.pop %v5307
        %v5340 = verf.f32.pop %v5308
        %v5341 = verf.f32.pop %v5309
        %v5342 = verf.f32.pop %v5310
        %v5343 = verf.f32.pop %v5311
        %v5344 = verf.f32.pop %v5312
        %v5345 = verf.f32.pop %v5313
        %v5346 = verf.f32.pop %v5314
        %v5347 = verf.f32.pop %v5315
        %v5348 = verf.f32.pop %v5316
        %v5349 = verf.f32.pop %v5317
        %v5350 = verf.f32.pop %v5318
        %v5351 = verf.f32.pop %v5319
        %v5352 = verf.f32.pop %v5320
        %v5353 = verf.f32.pop %v5321
        %v5354 = verf.f32.pop %v5322
        %v5355 = verf.f32.pop %v5323
        %v5356 = verf.f32.pop %v5324
        %v5357 = verf.f32.pop %v5325
        %v5358 = verf.f32.pop %v5326
        %v5359 = verf.f32.pop %v5327
        %v5360 = verf.f32.pop %v5328
        %v5361 = verf.f32.pop %v5329
        %v5362 = verf.f32.pop %v5330
        %v5363 = vadd.f32 %v5331, 1.0
        %v5364 = vadd.f32 %v5332, 1.0
        %v5365 = vadd.f32 %v5333, 1.0
        %v5366 = vadd.f32 %v5334, 1.0
        %v5367 = vadd.f32 %v5335, 1.0
        %v5368 = vadd.f32 %v5336, 1.0
        %v5369 = vadd.f32 %v5337, 1.0
        %v5370 = vadd.f32 %v5338, 1.0
        %v5371 = vadd.f32 %v5339, 1.0
        %v5372 = vadd.f32 %v5340, 1.0
        %v5373 = vadd.f32 %v5341, 1.0
        %v5374 = vadd.f32 %v5342, 1.0
        %v5375 = vadd.f32 %v5343, 1.0
        %v5376 = vadd.f32 %v5344, 1.0
        %v5377 = vadd.f32 %v5345, 1.0
        %v5378 = vadd.f32 %v5346, 1.0
        %v5379 = vadd.f32 %v5347, 1.0
        %v5380 = vadd.f32 %v5348, 1.0
        %v5381 = vadd.f32 %v5349, 1.0
        %v5382 = vadd.f32 %v5350, 1.0
        %v5383 = vadd.f32 %v5351, 1.0
        %v5384 = vadd.f32 %v5352, 1.0
        %v5385 = vadd.f32 %v5353, 1.0
        %v5386 = vadd.f32 %v5354, 1.0
        %v5387 = vadd.f32 %v5355, 1.0
        %v5388 = vadd.f32 %v5356, 1.0
        %v5389 = vadd.f32 %v5357, 1.0
        %v5390 = vadd.f32 %v5358, 1.0
        %v5391 = vadd.f32 %v5359, 1.0
        %v5392 = vadd.f32 %v5360, 1.0
        %v5393 = vadd.f32 %v5361, 1.0
        %v5394 = vadd.f32 %v5362, 1.0
        %v5395 = vmul.f32 %v5267, %v5363
        %v5396 = vmul.f32 %v5268, %v5364
        %v5397 = vmul.f32 %v5269, %v5365
        %v5398 = vmul.f32 %v5270, %v5366
        %v5399 = vmul.f32 %v5271, %v5367
        %v5400 = vmul.f32 %v5272, %v5368
        %v5401 = vmul.f32 %v5273, %v5369
        %v5402 = vmul.f32 %v5274, %v5370
        %v5403 = vmul.f32 %v5275, %v5371
        %v5404 = vmul.f32 %v5276, %v5372
        %v5405 = vmul.f32 %v5277, %v5373
        %v5406 = vmul.f32 %v5278, %v5374
        %v5407 = vmul.f32 %v5279, %v5375
        %v5408 = vmul.f32 %v5280, %v5376
        %v5409 = vmul.f32 %v5281, %v5377
        %v5410 = vmul.f32 %v5282, %v5378
        %v5411 = vmul.f32 %v5283, %v5379
        %v5412 = vmul.f32 %v5284, %v5380
        %v5413 = vmul.f32 %v5285, %v5381
        %v5414 = vmul.f32 %v5286, %v5382
        %v5415 = vmul.f32 %v5287, %v5383
        %v5416 = vmul.f32 %v5288, %v5384
        %v5417 = vmul.f32 %v5289, %v5385
        %v5418 = vmul.f32 %v5290, %v5386
        %v5419 = vmul.f32 %v5291, %v5387
        %v5420 = vmul.f32 %v5292, %v5388
        %v5421 = vmul.f32 %v5293, %v5389
        %v5422 = vmul.f32 %v5294, %v5390
        %v5423 = vmul.f32 %v5295, %v5391
        %v5424 = vmul.f32 %v5296, %v5392
        %v5425 = vmul.f32 %v5297, %v5393
        %v5426 = vmul.f32 %v5298, %v5394
        %v5427 = vpack.c.bf16 %v5399, %v5395
        %v5428 = vpack.c.bf16 %v5400, %v5396
        %v5429 = vpack.c.bf16 %v5401, %v5397
        %v5430 = vpack.c.bf16 %v5402, %v5398
        %v5431 = vpack.c.bf16 %v5407, %v5403
        %v5432 = vpack.c.bf16 %v5408, %v5404
        %v5433 = vpack.c.bf16 %v5409, %v5405
        %v5434 = vpack.c.bf16 %v5410, %v5406
        %v5435 = vpack.c.bf16 %v5415, %v5411
        %v5436 = vpack.c.bf16 %v5416, %v5412
        %v5437 = vpack.c.bf16 %v5417, %v5413
        %v5438 = vpack.c.bf16 %v5418, %v5414
        %v5439 = vpack.c.bf16 %v5423, %v5419
        %v5440 = vpack.c.bf16 %v5424, %v5420
        %v5441 = vpack.c.bf16 %v5425, %v5421
        %v5442 = vpack.c.bf16 %v5426, %v5422
        %v5443 = vld [vmem:[#allocation13] sm:$0xf]
        %v5444 = vld [vmem:[#allocation13 + $0x4] sm:$0xf]
        %v5445 = vld [vmem:[#allocation13 + $0x8] sm:$0xf]
        %v5446 = vld [vmem:[#allocation13 + $0xc] sm:$0xf]
        %v5447 = vld [vmem:[#allocation13 + $0x10] sm:$0xf]
        %v5448 = vld [vmem:[#allocation13 + $0x14] sm:$0xf]
        %v5449 = vld [vmem:[#allocation13 + $0x18] sm:$0xf]
        %v5450 = vld [vmem:[#allocation13 + $0x1c] sm:$0xf]
        %v5451 = vld [vmem:[#allocation13 + $0x20] sm:$0xf]
        %v5452 = vld [vmem:[#allocation13 + $0x24] sm:$0xf]
        %v5453 = vld [vmem:[#allocation13 + $0x28] sm:$0xf]
        %v5454 = vld [vmem:[#allocation13 + $0x2c] sm:$0xf]
        %v5455 = vld [vmem:[#allocation13 + $0x30] sm:$0xf]
        %v5456 = vld [vmem:[#allocation13 + $0x34] sm:$0xf]
        %v5457 = vld [vmem:[#allocation13 + $0x38] sm:$0xf]
        %v5458 = vld [vmem:[#allocation13 + $0x3c] sm:$0xf]
        %v5459 = vld [vmem:[#allocation13 + $0x40] sm:$0xf]
        %v5460 = vld [vmem:[#allocation13 + $0x44] sm:$0xf]
        %v5461 = vld [vmem:[#allocation13 + $0x48] sm:$0xf]
        %v5462 = vld [vmem:[#allocation13 + $0x4c] sm:$0xf]
        %v5463 = vld [vmem:[#allocation13 + $0x50] sm:$0xf]
        %v5464 = vld [vmem:[#allocation13 + $0x54] sm:$0xf]
        %v5465 = vld [vmem:[#allocation13 + $0x58] sm:$0xf]
        %v5466 = vld [vmem:[#allocation13 + $0x5c] sm:$0xf]
        %v5467 = vld [vmem:[#allocation13 + $0x60] sm:$0xf]
        %v5468 = vld [vmem:[#allocation13 + $0x64] sm:$0xf]
        %v5469 = vld [vmem:[#allocation13 + $0x68] sm:$0xf]
        %v5470 = vld [vmem:[#allocation13 + $0x6c] sm:$0xf]
        %v5471 = vld [vmem:[#allocation13 + $0x70] sm:$0xf]
        %v5472 = vld [vmem:[#allocation13 + $0x74] sm:$0xf]
        %v5473 = vld [vmem:[#allocation13 + $0x78] sm:$0xf]
        %v5474 = vld [vmem:[#allocation13 + $0x7c] sm:$0xf]
        %v5475 = vld [vmem:[#allocation13 + $0x80] sm:$0xf]
        %v5476 = vld [vmem:[#allocation13 + $0x84] sm:$0xf]
        %v5477 = vld [vmem:[#allocation13 + $0x88] sm:$0xf]
        %v5478 = vld [vmem:[#allocation13 + $0x8c] sm:$0xf]
        %v5479 = vld [vmem:[#allocation13 + $0x90] sm:$0xf]
        %v5480 = vld [vmem:[#allocation13 + $0x94] sm:$0xf]
        %v5481 = vld [vmem:[#allocation13 + $0x98] sm:$0xf]
        %v5482 = vld [vmem:[#allocation13 + $0x9c] sm:$0xf]
        %v5483 = vld [vmem:[#allocation13 + $0xa0] sm:$0xf]
        %v5484 = vld [vmem:[#allocation13 + $0xa4] sm:$0xf]
        %v5485 = vld [vmem:[#allocation13 + $0xa8] sm:$0xf]
        %v5486 = vld [vmem:[#allocation13 + $0xac] sm:$0xf]
        %v5487 = vld [vmem:[#allocation13 + $0xb0] sm:$0xf]
        %v5488 = vld [vmem:[#allocation13 + $0xb4] sm:$0xf]
        %v5489 = vld [vmem:[#allocation13 + $0xb8] sm:$0xf]
        %v5490 = vld [vmem:[#allocation13 + $0xbc] sm:$0xf]
        %v5491 = vld [vmem:[#allocation13 + $0xc0] sm:$0xf]
        %v5492 = vld [vmem:[#allocation13 + $0xc4] sm:$0xf]
        %v5493 = vld [vmem:[#allocation13 + $0xc8] sm:$0xf]
        %v5494 = vld [vmem:[#allocation13 + $0xcc] sm:$0xf]
        %v5495 = vld [vmem:[#allocation13 + $0xd0] sm:$0xf]
        %v5496 = vld [vmem:[#allocation13 + $0xd4] sm:$0xf]
        %v5497 = vld [vmem:[#allocation13 + $0xd8] sm:$0xf]
        %v5498 = vld [vmem:[#allocation13 + $0xdc] sm:$0xf]
        %v5499 = vld [vmem:[#allocation13 + $0xe0] sm:$0xf]
        %v5500 = vld [vmem:[#allocation13 + $0xe4] sm:$0xf]
        %v5501 = vld [vmem:[#allocation13 + $0xe8] sm:$0xf]
        %v5502 = vld [vmem:[#allocation13 + $0xec] sm:$0xf]
        %v5503 = vld [vmem:[#allocation13 + $0xf0] sm:$0xf]
        %v5504 = vld [vmem:[#allocation13 + $0xf4] sm:$0xf]
        %v5505 = vld [vmem:[#allocation13 + $0xf8] sm:$0xf]
        %v5506 = vld [vmem:[#allocation13 + $0xfc] sm:$0xf]
        %v5507 = vld [vmem:[%s11] sm:$0x1]
        %v5509 = vlaneseq
        %v5510 = vshrl.u32 %v5509, 7
        %v5511 = vsub.s32 0, %v5510
        %v5512 = vrot.slane %v5507, %v5511
        %v5578 = vunpack.c.l.b16 %v5443
        %v5579 = vunpack.c.l.b16 %v5444
        %v5580 = vunpack.c.l.b16 %v5445
        %v5581 = vunpack.c.l.b16 %v5446
        %v5582 = vunpack.c.l.b16 %v5447
        %v5583 = vunpack.c.l.b16 %v5448
        %v5584 = vunpack.c.l.b16 %v5449
        %v5585 = vunpack.c.l.b16 %v5450
        %v5586 = vunpack.c.l.b16 %v5451
        %v5587 = vunpack.c.l.b16 %v5452
        %v5588 = vunpack.c.l.b16 %v5453
        %v5589 = vunpack.c.l.b16 %v5454
        %v5590 = vunpack.c.l.b16 %v5455
        %v5591 = vunpack.c.l.b16 %v5456
        %v5592 = vunpack.c.l.b16 %v5457
        %v5593 = vunpack.c.l.b16 %v5458
        %v5594 = vunpack.c.l.b16 %v5459
        %v5595 = vunpack.c.l.b16 %v5460
        %v5596 = vunpack.c.l.b16 %v5461
        %v5597 = vunpack.c.l.b16 %v5462
        %v5598 = vunpack.c.l.b16 %v5463
        %v5599 = vunpack.c.l.b16 %v5464
        %v5600 = vunpack.c.l.b16 %v5465
        %v5601 = vunpack.c.l.b16 %v5466
        %v5602 = vunpack.c.l.b16 %v5467
        %v5603 = vunpack.c.l.b16 %v5468
        %v5604 = vunpack.c.l.b16 %v5469
        %v5605 = vunpack.c.l.b16 %v5470
        %v5606 = vunpack.c.l.b16 %v5471
        %v5607 = vunpack.c.l.b16 %v5472
        %v5608 = vunpack.c.l.b16 %v5473
        %v5609 = vunpack.c.l.b16 %v5474
        %v5610 = vunpack.c.l.b16 %v5475
        %v5611 = vunpack.c.l.b16 %v5476
        %v5612 = vunpack.c.l.b16 %v5477
        %v5613 = vunpack.c.l.b16 %v5478
        %v5614 = vunpack.c.l.b16 %v5479
        %v5615 = vunpack.c.l.b16 %v5480
        %v5616 = vunpack.c.l.b16 %v5481
        %v5617 = vunpack.c.l.b16 %v5482
        %v5618 = vunpack.c.l.b16 %v5483
        %v5619 = vunpack.c.l.b16 %v5484
        %v5620 = vunpack.c.l.b16 %v5485
        %v5621 = vunpack.c.l.b16 %v5486
        %v5622 = vunpack.c.l.b16 %v5487
        %v5623 = vunpack.c.l.b16 %v5488
        %v5624 = vunpack.c.l.b16 %v5489
        %v5625 = vunpack.c.l.b16 %v5490
        %v5626 = vunpack.c.l.b16 %v5491
        %v5627 = vunpack.c.l.b16 %v5492
        %v5628 = vunpack.c.l.b16 %v5493
        %v5629 = vunpack.c.l.b16 %v5494
        %v5630 = vunpack.c.l.b16 %v5495
        %v5631 = vunpack.c.l.b16 %v5496
        %v5632 = vunpack.c.l.b16 %v5497
        %v5633 = vunpack.c.l.b16 %v5498
        %v5634 = vunpack.c.l.b16 %v5499
        %v5635 = vunpack.c.l.b16 %v5500
        %v5636 = vunpack.c.l.b16 %v5501
        %v5637 = vunpack.c.l.b16 %v5502
        %v5638 = vunpack.c.l.b16 %v5503
        %v5639 = vunpack.c.l.b16 %v5504
        %v5640 = vunpack.c.l.b16 %v5505
        %v5641 = vunpack.c.l.b16 %v5506
        %v5642 = vpack.c.b16 %v5579, %v5578
        %v5643 = vpack.c.b16 %v5581, %v5580
        %v5644 = vpack.c.b16 %v5583, %v5582
        %v5645 = vpack.c.b16 %v5585, %v5584
        %v5646 = vpack.c.b16 %v5587, %v5586
        %v5647 = vpack.c.b16 %v5589, %v5588
        %v5648 = vpack.c.b16 %v5591, %v5590
        %v5649 = vpack.c.b16 %v5593, %v5592
        %v5650 = vpack.c.b16 %v5595, %v5594
        %v5651 = vpack.c.b16 %v5597, %v5596
        %v5652 = vpack.c.b16 %v5599, %v5598
        %v5653 = vpack.c.b16 %v5601, %v5600
        %v5654 = vpack.c.b16 %v5603, %v5602
        %v5655 = vpack.c.b16 %v5605, %v5604
        %v5656 = vpack.c.b16 %v5607, %v5606
        %v5657 = vpack.c.b16 %v5609, %v5608
        %v5658 = vpack.c.b16 %v5611, %v5610
        %v5659 = vpack.c.b16 %v5613, %v5612
        %v5660 = vpack.c.b16 %v5615, %v5614
        %v5661 = vpack.c.b16 %v5617, %v5616
        %v5662 = vpack.c.b16 %v5619, %v5618
        %v5663 = vpack.c.b16 %v5621, %v5620
        %v5664 = vpack.c.b16 %v5623, %v5622
        %v5665 = vpack.c.b16 %v5625, %v5624
        %v5666 = vpack.c.b16 %v5627, %v5626
        %v5667 = vpack.c.b16 %v5629, %v5628
        %v5668 = vpack.c.b16 %v5631, %v5630
        %v5669 = vpack.c.b16 %v5633, %v5632
        %v5670 = vpack.c.b16 %v5635, %v5634
        %v5671 = vpack.c.b16 %v5637, %v5636
        %v5672 = vpack.c.b16 %v5639, %v5638
        %v5673 = vpack.c.b16 %v5641, %v5640
        %5706 = vmatprep.subr.bf16.mxu0 0
        %5707 = vmatpush1.bf16.msra.mxu0 %v5642
        %5708 = vmatprep.subr.bf16.mxu0 0
        %5709 = vmatpush1.bf16.msra.mxu0 %v5643
        %5710 = vmatprep.subr.bf16.mxu0 0
        %5711 = vmatpush1.bf16.msra.mxu0 %v5644
        %5712 = vmatprep.subr.bf16.mxu0 0
        %5713 = vmatpush1.bf16.msra.mxu0 %v5645
        %5714 = vmatprep.subr.bf16.mxu0 0
        %5715 = vmatpush1.bf16.msra.mxu0 %v5646
        %5716 = vmatprep.subr.bf16.mxu0 0
        %5717 = vmatpush1.bf16.msra.mxu0 %v5647
        %5718 = vmatprep.subr.bf16.mxu0 0
        %5719 = vmatpush1.bf16.msra.mxu0 %v5648
        %5720 = vmatprep.subr.bf16.mxu0 0
        %5721 = vmatpush1.bf16.msra.mxu0 %v5649
        %5722 = vmatprep.subr.bf16.mxu0 0
        %5723 = vmatpush1.bf16.msra.mxu0 %v5650
        %5724 = vmatprep.subr.bf16.mxu0 0
        %5725 = vmatpush1.bf16.msra.mxu0 %v5651
        %5726 = vmatprep.subr.bf16.mxu0 0
        %5727 = vmatpush1.bf16.msra.mxu0 %v5652
        %5728 = vmatprep.subr.bf16.mxu0 0
        %5729 = vmatpush1.bf16.msra.mxu0 %v5653
        %5730 = vmatprep.subr.bf16.mxu0 0
        %5731 = vmatpush1.bf16.msra.mxu0 %v5654
        %5732 = vmatprep.subr.bf16.mxu0 0
        %5733 = vmatpush1.bf16.msra.mxu0 %v5655
        %5734 = vmatprep.subr.bf16.mxu0 0
        %5735 = vmatpush1.bf16.msra.mxu0 %v5656
        %5736 = vmatprep.subr.bf16.mxu0 0
        %5737 = vmatpush1.bf16.msra.mxu0 %v5657
        %5738 = vmatprep.mubr.bf16.mxu0 %v5428
        %5739 = vmatmul.mubr.bf16.gmra.mrb[0].mxu0 %v5427
        %v5740 = vpop.f32.mrb[0].mxu0
        %v5741 = vadd.f32 %v5512, %v5740
        %v5742 = vpop.f32.mrb[0].mxu0
        %v5743 = vpop.f32.mrb[0].mxu0
        %v5744 = vadd.f32 %v5512, %v5743
        %v5745 = vpop.f32.mrb[0].mxu0
        %5746 = vmatprep.mubr.bf16.mxu0 %v5432
        %5747 = vmatmul.mubr.bf16.gmra.mrb[0].mxu0 %v5431
        %v5748 = vpop.f32.mrb[0].mxu0
        %v5749 = vadd.f32 %v5512, %v5748
        %v5750 = vpop.f32.mrb[0].mxu0
        %v5751 = vpop.f32.mrb[0].mxu0
        %v5752 = vadd.f32 %v5512, %v5751
        %v5753 = vpop.f32.mrb[0].mxu0
        %5754 = vmatprep.mubr.bf16.mxu0 %v5436
        %5755 = vmatmul.mubr.bf16.gmra.mrb[0].mxu0 %v5435
        %v5756 = vpop.f32.mrb[0].mxu0
        %v5757 = vadd.f32 %v5512, %v5756
        %v5758 = vpop.f32.mrb[0].mxu0
        %v5759 = vpop.f32.mrb[0].mxu0
        %v5760 = vadd.f32 %v5512, %v5759
        %v5761 = vpop.f32.mrb[0].mxu0
        %5762 = vmatprep.mubr.bf16.mxu0 %v5440
        %5763 = vmatmul.mubr.bf16.gmra.mrb[0].mxu0 %v5439
        %v5764 = vpop.f32.mrb[0].mxu0
        %v5765 = vadd.f32 %v5512, %v5764
        %v5766 = vpop.f32.mrb[0].mxu0
        %v5767 = vpop.f32.mrb[0].mxu0
        %v5768 = vadd.f32 %v5512, %v5767
        %v5769 = vpop.f32.mrb[0].mxu0
        %5770 = vdwg.mxu0
        %5771 = vmatprep.subr.bf16.mxu0 0
        %5772 = vmatpush1.bf16.msra.mxu0 %v5658
        %5773 = vmatprep.subr.bf16.mxu0 0
        %5774 = vmatpush1.bf16.msra.mxu0 %v5659
        %5775 = vmatprep.subr.bf16.mxu0 0
        %5776 = vmatpush1.bf16.msra.mxu0 %v5660
        %5777 = vmatprep.subr.bf16.mxu0 0
        %5778 = vmatpush1.bf16.msra.mxu0 %v5661
        %5779 = vmatprep.subr.bf16.mxu0 0
        %5780 = vmatpush1.bf16.msra.mxu0 %v5662
        %5781 = vmatprep.subr.bf16.mxu0 0
        %5782 = vmatpush1.bf16.msra.mxu0 %v5663
        %5783 = vmatprep.subr.bf16.mxu0 0
        %5784 = vmatpush1.bf16.msra.mxu0 %v5664
        %5785 = vmatprep.subr.bf16.mxu0 0
        %5786 = vmatpush1.bf16.msra.mxu0 %v5665
        %5787 = vmatprep.subr.bf16.mxu0 0
        %5788 = vmatpush1.bf16.msra.mxu0 %v5666
        %5789 = vmatprep.subr.bf16.mxu0 0
        %5790 = vmatpush1.bf16.msra.mxu0 %v5667
        %5791 = vmatprep.subr.bf16.mxu0 0
        %5792 = vmatpush1.bf16.msra.mxu0 %v5668
        %5793 = vmatprep.subr.bf16.mxu0 0
        %5794 = vmatpush1.bf16.msra.mxu0 %v5669
        %5795 = vmatprep.subr.bf16.mxu0 0
        %5796 = vmatpush1.bf16.msra.mxu0 %v5670
        %5797 = vmatprep.subr.bf16.mxu0 0
        %5798 = vmatpush1.bf16.msra.mxu0 %v5671
        %5799 = vmatprep.subr.bf16.mxu0 0
        %5800 = vmatpush1.bf16.msra.mxu0 %v5672
        %5801 = vmatprep.subr.bf16.mxu0 0
        %5802 = vmatpush1.bf16.msra.mxu0 %v5673
        %5803 = vmatprep.mubr.bf16.mxu0 %v5430
        %5804 = vmatmul.mubr.bf16.gmra.mrb[0].mxu0 %v5429
        %v5805 = vpop.f32.mrb[0].mxu0
        %v5806 = vadd.f32 %v5741, %v5805
        %v5807 = vpop.f32.mrb[0].mxu0
        %v5808 = vpop.f32.mrb[0].mxu0
        %v5809 = vadd.f32 %v5744, %v5808
        %v5810 = vpop.f32.mrb[0].mxu0
        %5811 = vmatprep.mubr.bf16.mxu0 %v5434
        %5812 = vmatmul.mubr.bf16.gmra.mrb[0].mxu0 %v5433
        %v5813 = vpop.f32.mrb[0].mxu0
        %v5814 = vadd.f32 %v5749, %v5813
        %v5815 = vpop.f32.mrb[0].mxu0
        %v5816 = vpop.f32.mrb[0].mxu0
        %v5817 = vadd.f32 %v5752, %v5816
        %v5818 = vpop.f32.mrb[0].mxu0
        %5819 = vmatprep.mubr.bf16.mxu0 %v5438
        %5820 = vmatmul.mubr.bf16.gmra.mrb[0].mxu0 %v5437
        %v5821 = vpop.f32.mrb[0].mxu0
        %v5822 = vadd.f32 %v5757, %v5821
        %v5823 = vpop.f32.mrb[0].mxu0
        %v5824 = vpop.f32.mrb[0].mxu0
        %v5825 = vadd.f32 %v5760, %v5824
        %v5826 = vpop.f32.mrb[0].mxu0
        %5827 = vmatprep.mubr.bf16.mxu0 %v5442
        %5828 = vmatmul.mubr.bf16.gmra.mrb[0].mxu0 %v5441
        %v5829 = vpop.f32.mrb[0].mxu0
        %v5830 = vadd.f32 %v5765, %v5829
        %v5831 = vpop.f32.mrb[0].mxu0
        %v5832 = vpop.f32.mrb[0].mxu0
        %v5833 = vadd.f32 %v5768, %v5832
        %v5834 = vpop.f32.mrb[0].mxu0
        %5835 = vdwg.mxu0
        %v5836 = vadd.f32 %v5806, %v4895
        %v5837 = vadd.f32 %v5809, %v4896
        %v5838 = vadd.f32 %v5814, %v4897
        %v5839 = vadd.f32 %v5817, %v4898
        %v5840 = vadd.f32 %v5822, %v4899
        %v5841 = vadd.f32 %v5825, %v4900
        %v5842 = vadd.f32 %v5830, %v4901
        %v5843 = vadd.f32 %v5833, %v4902
        %v5844 = vld [vmem:[%s12] sm:$0x1]
        %v5845 = vld [vmem:[%s13] sm:$0x1]
        %5846 = vadd.xlane.f32.xlu0 %v5836
        %v5847 = vpop.xlane.xlu0 %5846
        %5848 = vadd.xlane.f32.xlu0 %v5837
        %v5849 = vpop.xlane.xlu0 %5848
        %5850 = vadd.xlane.f32.xlu0 %v5838
        %v5851 = vpop.xlane.xlu0 %5850
        %5852 = vadd.xlane.f32.xlu0 %v5839
        %v5853 = vpop.xlane.xlu0 %5852
        %5854 = vadd.xlane.f32.xlu0 %v5840
        %v5855 = vpop.xlane.xlu0 %5854
        %5856 = vadd.xlane.f32.xlu0 %v5841
        %v5857 = vpop.xlane.xlu0 %5856
        %5858 = vadd.xlane.f32.xlu0 %v5842
        %v5859 = vpop.xlane.xlu0 %5858
        %5860 = vadd.xlane.f32.xlu0 %v5843
        %v5861 = vpop.xlane.xlu0 %5860
        %v5862 = vmul.f32 %v5847, %v4802
        %v5863 = vmul.f32 %v5849, %v4802
        %v5864 = vmul.f32 %v5851, %v4802
        %v5865 = vmul.f32 %v5853, %v4802
        %v5866 = vmul.f32 %v5855, %v4802
        %v5867 = vmul.f32 %v5857, %v4802
        %v5868 = vmul.f32 %v5859, %v4802
        %v5869 = vmul.f32 %v5861, %v4802
        %v5870 = vsub.f32 %v5836, %v5862
        %v5871 = vsub.f32 %v5837, %v5863
        %v5872 = vsub.f32 %v5838, %v5864
        %v5873 = vsub.f32 %v5839, %v5865
        %v5874 = vsub.f32 %v5840, %v5866
        %v5875 = vsub.f32 %v5841, %v5867
        %v5876 = vsub.f32 %v5842, %v5868
        %v5877 = vsub.f32 %v5843, %v5869
        %v5878 = vmul.f32 %v5870, %v5870
        %v5879 = vmul.f32 %v5871, %v5871
        %v5880 = vmul.f32 %v5872, %v5872
        %v5881 = vmul.f32 %v5873, %v5873
        %v5882 = vmul.f32 %v5874, %v5874
        %v5883 = vmul.f32 %v5875, %v5875
        %v5884 = vmul.f32 %v5876, %v5876
        %v5885 = vmul.f32 %v5877, %v5877
        %5886 = vadd.xlane.f32.xlu0 %v5878
        %v5887 = vpop.xlane.xlu0 %5886
        %5888 = vadd.xlane.f32.xlu0 %v5879
        %v5889 = vpop.xlane.xlu0 %5888
        %5890 = vadd.xlane.f32.xlu0 %v5880
        %v5891 = vpop.xlane.xlu0 %5890
        %5892 = vadd.xlane.f32.xlu0 %v5881
        %v5893 = vpop.xlane.xlu0 %5892
        %5894 = vadd.xlane.f32.xlu0 %v5882
        %v5895 = vpop.xlane.xlu0 %5894
        %5896 = vadd.xlane.f32.xlu0 %v5883
        %v5897 = vpop.xlane.xlu0 %5896
        %5898 = vadd.xlane.f32.xlu0 %v5884
        %v5899 = vpop.xlane.xlu0 %5898
        %5900 = vadd.xlane.f32.xlu0 %v5885
        %v5901 = vpop.xlane.xlu0 %5900
        %v5902 = vmul.f32 %v5887, %v4802
        %v5903 = vmul.f32 %v5889, %v4802
        %v5904 = vmul.f32 %v5891, %v4802
        %v5905 = vmul.f32 %v5893, %v4802
        %v5906 = vmul.f32 %v5895, %v4802
        %v5907 = vmul.f32 %v5897, %v4802
        %v5908 = vmul.f32 %v5899, %v4802
        %v5909 = vmul.f32 %v5901, %v4802
        %v5910 = vadd.f32 %v5902, 1e-05
        %v5911 = vadd.f32 %v5903, 1e-05
        %v5912 = vadd.f32 %v5904, 1e-05
        %v5913 = vadd.f32 %v5905, 1e-05
        %v5914 = vadd.f32 %v5906, 1e-05
        %v5915 = vadd.f32 %v5907, 1e-05
        %v5916 = vadd.f32 %v5908, 1e-05
        %v5917 = vadd.f32 %v5909, 1e-05
        %v5918 = vrsqrt.pop %v5910
        %v5919 = vrsqrt.pop %v5911
        %v5920 = vrsqrt.pop %v5912
        %v5921 = vrsqrt.pop %v5913
        %v5922 = vrsqrt.pop %v5914
        %v5923 = vrsqrt.pop %v5915
        %v5924 = vrsqrt.pop %v5916
        %v5925 = vrsqrt.pop %v5917
        %v5926 = vmul.f32 %v5870, %v5918
        %v5927 = vmul.f32 %v5871, %v5919
        %v5928 = vmul.f32 %v5872, %v5920
        %v5929 = vmul.f32 %v5873, %v5921
        %v5930 = vmul.f32 %v5874, %v5922
        %v5931 = vmul.f32 %v5875, %v5923
        %v5932 = vmul.f32 %v5876, %v5924
        %v5933 = vmul.f32 %v5877, %v5925
        %v5935 = vlaneseq
        %v5936 = vshrl.u32 %v5935, 7
        %v5937 = vsub.s32 0, %v5936
        %v5938 = vrot.slane %v5844, %v5937
        %v5940 = vmul.f32 %v5926, %v5938
        %v5941 = vmul.f32 %v5927, %v5938
        %v5942 = vmul.f32 %v5928, %v5938
        %v5943 = vmul.f32 %v5929, %v5938
        %v5944 = vmul.f32 %v5930, %v5938
        %v5945 = vmul.f32 %v5931, %v5938
        %v5946 = vmul.f32 %v5932, %v5938
        %v5947 = vmul.f32 %v5933, %v5938
        %v5949 = vlaneseq
        %v5950 = vshrl.u32 %v5949, 7
        %v5951 = vsub.s32 0, %v5950
        %v5952 = vrot.slane %v5845, %v5951
        %v5954 = vadd.f32 %v5940, %v5952
        %v5955 = vadd.f32 %v5941, %v5952
        %v5956 = vadd.f32 %v5942, %v5952
        %v5957 = vadd.f32 %v5943, %v5952
        %v5958 = vadd.f32 %v5944, %v5952
        %v5959 = vadd.f32 %v5945, %v5952
        %v5960 = vadd.f32 %v5946, %v5952
        %v5961 = vadd.f32 %v5947, %v5952
        %5962 = vst [vmem:[%s572] sm:$0xff] %v5954
        %5963 = vst [vmem:[%s572 + $0x8] sm:$0xff] %v5955
        %5964 = vst [vmem:[%s572 + $0x10] sm:$0xff] %v5956
        %5965 = vst [vmem:[%s572 + $0x18] sm:$0xff] %v5957
        %5966 = vst [vmem:[%s572 + $0x20] sm:$0xff] %v5958
        %5967 = vst [vmem:[%s572 + $0x28] sm:$0xff] %v5959
        %5968 = vst [vmem:[%s572 + $0x30] sm:$0xff] %v5960
        %5969 = vst [vmem:[%s572 + $0x38] sm:$0xff] %v5961
        %s5970 = sand.u32 %s341, 1
        %s5971 = scalar_lea.sflag [#allocation4], %s5970
        %s5972 = sand.u32 %s341, 1
        %s5973 = smul.addr %s5972, 64
        %s5974 = scalar_lea.vmem [#allocation14], %s5973
        // Predicated region
        $region105: #{tpu_custom_call.1} parent=75 // pred_check
          %p5975 = pneg %p351
        $region106: #{tpu_custom_call.1} parent=75 // pred_check_branch
          %5977 = sbr.rel (%p5975) target = $region108
        $region107: #{tpu_custom_call.1} parent=75 // pred_region
          %s5979 = ssub.s32 1024, 1024
          %5980 = vsyncadd %s5971, %s5979
          %s5981 = smul.addr %s34, 8
          %s5982 = smul.addr %s5981, 128
          %s5983 = scalar_lea.hbm %s14, %s5982
          %s5984 = sshll.u32 %s5974, 4
          %s5985 = int_to_ptr.vmem [resolvable:$true] %s5984
          %5990 = dma.vmem_to_hbm [thread:$0]  %s5985, 1024, %s5983, %s5971, 128, 128, 8
        $region108: #{tpu_custom_call.1} parent=75 // pred_fallthru
          _
      $region76: #{tpu_custom_call.1} parent=5 // pred_fallthru
        _
      %p5991 = scmp.le.s32.totalorder 2, %s29
      // Predicated region
      $region109: #{tpu_custom_call.1} parent=5 // pred_check
        %p5992 = pneg %p5991
      $region110: #{tpu_custom_call.1} parent=5 // pred_check_branch
        %5994 = sbr.rel (%p5992) target = $region112
      $region111: #{tpu_custom_call.1} parent=5 // pred_region
        %s5995 = ssub.s32 %s29, 2
        // Predicated region
        $region113: #{tpu_custom_call.1} parent=111 // pred_check
          %p5996 = pneg %p357
        $region114: #{tpu_custom_call.1} parent=111 // pred_check_branch
          %5998 = sbr.rel (%p5996) target = $region116
        $region115: #{tpu_custom_call.1} parent=111 // pred_region
          %s5999 = sand.u32 %s342, 1
          %s6000 = scalar_lea.sflag [#allocation4], %s5999
          %s6001 = sand.u32 %s342, 1
          %s6002 = smul.addr %s6001, 64
          %s6003 = scalar_lea.vmem [#allocation14], %s6002
          %6004 = dma.done %s6000, 1024
        $region116: #{tpu_custom_call.1} parent=111 // pred_fallthru
          _
      $region112: #{tpu_custom_call.1} parent=5 // pred_fallthru
        _
    $region6: #{tpu_custom_call.1} parent=1 // loop_footer
      %s33 = sadd.s32 1, %s29
    $region7: #{tpu_custom_call.1} parent=1 // loop_footer_branch
      %28 = sbr.rel target = $region3
    $region8: #{tpu_custom_call.1} parent=1 // loop_exit
      _
    %6005 = vsyncpa [#allocation3], 1
    %s6006 = scalar_lea.sflag [#allocation3], 1
    %6007 = vsyncpa %s6006, 1
    %6008 = vsyncpa [#allocation6], 1
    %6009 = vsyncpa [#allocation9], 1
    %6010 = vsyncpa [#allocation12], 1
    %6011 = vsyncpa [#allocation4], 1
    %s6012 = scalar_lea.sflag [#allocation4], 1
    %6013 = vsyncpa %s6012, 1

</llo_original>
